<compile_context>
chip_gen: v7x
topology: tpu7x:2x2x1
jax: 0.10.0
libtpu: 0.0.40
codegen_flags: <defaults>
</compile_context>

<pallas_src>
import math
import numpy as np
import jax
import jax.numpy as jnp
from jax import lax
from jax.experimental import pallas as pl
from jax.experimental.pallas import tpu as pltpu


# ---------------------------------------------------------------- kernel helpers
def _erf(x):
    # Abramowitz & Stegun 7.1.26 (max abs err ~1.5e-7): matches exact-erf GELU at f32.
    p = 0.3275911
    a1, a2, a3, a4, a5 = 0.254829592, -0.284496736, 1.421413741, -1.453152027, 1.061405429
    s = jnp.where(x >= 0.0, 1.0, -1.0)
    ax = jnp.abs(x)
    d = 1.0 + p * ax
    t0 = pl.reciprocal(d, approx=True)      # EUP slot (nearly free)
    t = t0 * (2.0 - d * t0)                 # one Newton step -> ~f32 accurate
    poly = ((((a5 * t + a4) * t + a3) * t + a2) * t + a1) * t
    return s * (1.0 - poly * jnp.exp(-ax * ax))


# ---------------------------------------------------------------- Pallas kernel
def block_kernel(x_ref, vecs_ref, pbig_ref, ebk_ref, da_ref, wf_ref, g_ref,
                 w1_ref, b1_ref, w2_ref, o_ref):
    f32 = jnp.float32
    bf16 = jnp.bfloat16
    rows = x_ref.shape[0]                  # Bt * a
    bC = x_ref.shape[1]                    # b * C (tokens-along-b folded into lanes)
    wCp = wf_ref.shape[1] // 2             # lane-padded half-spectrum width

    x = x_ref[...]                         # (rows, bC) f32
    pbig = pbig_ref[...]                   # (2bC, 2bC) bf16 block_diag(P, P)

    g1, be1 = vecs_ref[0:1, :], vecs_ref[1:2, :]
    g2, be2 = vecs_ref[2:3, :], vecs_ref[3:4, :]
    b2 = vecs_ref[4:5, :]

    def layernorm(u, g, be):
        # fused mean / E[x^2] in one full-lane push; elementwise stays f32.
        s = jnp.concatenate([u, u * u], axis=-1).astype(bf16)
        mv = jnp.dot(s, pbig, preferred_element_type=f32)       # [mu | E[u^2]]
        mu = mv[:, :bC]
        var = mv[:, bC:] - mu * mu                               # biased variance
        return (u - mu) * lax.rsqrt(var + 1e-5) * g + be

    xn = layernorm(x, g1, be1)

    # ---- GlobalFilter: rfft2 (ortho) -> complex weight -> irfft2 (ortho) ----
    # Fused rDFT along b: V = [Vr | Vi]  (rows, 2*wCp)
    V = jnp.dot(xn.astype(bf16), ebk_ref[...], preferred_element_type=f32)
    Vb = V.astype(bf16)

    DaR = da_ref[0:rows, :]                # kron(I_Bt, cos): batched DFT along a (bf16)
    DaI = da_ref[rows:2 * rows, :]         # kron(I_Bt, -sin)
    R1 = jnp.dot(DaR, Vb, preferred_element_type=f32)
    R2 = jnp.dot(DaI, Vb, preferred_element_type=f32)
    Zr = R1[:, :wCp] - R2[:, wCp:]
    Zi = R1[:, wCp:] + R2[:, :wCp]

    WR = wf_ref[:, :wCp]                   # complex filter weight (padded, batch-tiled, f32)
    WI = wf_ref[:, wCp:]
    Pc = jnp.concatenate([Zr * WR - Zi * WI,        # Pr
                          Zr * WI + Zi * WR],       # Pi
                         axis=-1).astype(bf16)

    # inverse DFT along a (conj(Da)), fused on [Pr | Pi]:
    S1 = jnp.dot(DaR, Pc, preferred_element_type=f32)
    S2 = jnp.dot(DaI, Pc, preferred_element_type=f32)
    Mr = S1[:, :wCp] + S2[:, wCp:]
    Mi = S1[:, wCp:] - S2[:, :wCp]

    # irfft along b (Hermitian multiplicities + combined ortho scale baked into Gstack):
    Mc = jnp.concatenate([Mr, Mi], axis=-1).astype(bf16)
    y = jnp.dot(Mc, g_ref[...], preferred_element_type=f32)     # (rows, bC)

    yn = layernorm(y, g2, be2)

    # ---- MLP: fc1 (pre-scaled by 1/sqrt(2)) -> u*(1+erf(u)) -> fc2 (pre-scaled) ----
    u1 = jnp.dot(yn.astype(bf16), w1_ref[...], preferred_element_type=f32) + b1_ref[...]
    act = (u1 * (1.0 + _erf(u1))).astype(bf16)   # == sqrt(2) * gelu_exact(fc1(yn))
    mlp = jnp.dot(act, w2_ref[...], preferred_element_type=f32) + b2

    o_ref[...] = x + mlp                   # residual (drop_path / dropout identity at p=0)


# ---------------------------------------------------------------- host-side wrapper
def gfnet_block(x, params, a, b):
    """x: (B, N, C) float32 with N == a*b.  Returns (B, N, C)."""
    B, N, C = x.shape
    assert N == a * b, "token count must equal a*b"
    w = b // 2 + 1
    bC, wC = b * C, w * C
    wCp = ((wC + 127) // 128) * 128                    # lane-pad half-spectrum width

    # ---- batch tiling: Bt images stacked along sublanes, rows = Bt*a (target 128) ----
    Bt = B
    for cand in range(B, 0, -1):
        r = cand * a
        if B % cand == 0 and r <= 128 and (r % 8 == 0 or cand == B):
            Bt = cand
            break
    # keep an even grid of >= 2 steps when possible (v7x has 2 TensorCores).
    if B // Bt < 2 and Bt > 1 and Bt % 2 == 0 and ((Bt // 2) * a) % 8 == 0:
        Bt //= 2
    rows = Bt * a
    grid = (B // Bt,)

    f32n = np.float32
    inv_sqrt2 = 1.0 / math.sqrt(2.0)
    I_b = np.eye(b, dtype=f32n)
    I_C = np.eye(C, dtype=f32n)

    # fused LayerNorm operator: [u | u*u] @ block_diag(P, P) -> [mu | E[u^2]]
    P = np.kron(I_b, np.full((C, C), 1.0 / C, dtype=f32n))
    Pbig = np.zeros((2 * bC, 2 * bC), f32n)
    Pbig[:bC, :bC] = P
    Pbig[bC:, bC:] = P

    # ---- DFT operators (exact rfft2/irfft2 with 'ortho' norm, as matmuls) ----
    n_ = np.arange(b)[:, None]
    l_ = np.arange(w)[None, :]
    th = 2.0 * np.pi * n_ * l_ / b
    EbK = np.zeros((bC, 2 * wCp), f32n)                # fused [Re | Im] forward rDFT along b
    EbK[:, :wC] = np.kron(np.cos(th), I_C)
    EbK[:, wCp:wCp + wC] = np.kron(-np.sin(th), I_C)

    lv = np.arange(w)
    mult = np.where((lv == 0) | ((b % 2 == 0) & (lv == b // 2)), 1.0, 2.0)
    ph = 2.0 * np.pi * lv[:, None] * np.arange(b)[None, :] / b
    scale = 1.0 / (a * b)                              # combined 'ortho' fwd+inv scaling
    Gstack = np.zeros((2 * wCp, bC), f32n)             # fused [Re; -Im] inverse rDFT along b
    Gstack[:wC, :] = np.kron(mult[:, None] * np.cos(ph) * scale, I_C)
    Gstack[wCp:wCp + wC, :] = np.kron(-(mult[:, None] * np.sin(ph) * scale), I_C)

    k_ = np.arange(a)
    ps = 2.0 * np.pi * np.outer(k_, k_) / a
    I_Bt = np.eye(Bt, dtype=f32n)
    Dcat = np.concatenate([np.kron(I_Bt, np.cos(ps)),          # batched forward DFT along a
                           np.kron(I_Bt, -np.sin(ps))], axis=0).astype(f32n)

    # ---- complex filter weight: lane-padded, batch-tiled, packed as [WR | WI] (f32) ----
    cw = np.asarray(params["cw"], dtype=f32n)
    WRp = np.zeros((a, wCp), f32n)
    WIp = np.zeros((a, wCp), f32n)
    WRp[:, :wC] = cw[..., 0].reshape(a, wC)
    WIp[:, :wC] = cw[..., 1].reshape(a, wC)
    Wcat = np.concatenate([np.tile(WRp, (Bt, 1)), np.tile(WIp, (Bt, 1))], axis=1)

    # ---- small per-channel vectors coalesced into one packed operand (f32) ----
    vecs = np.zeros((8, bC), f32n)
    vecs[0] = np.tile(np.asarray(params["g1"]), b)
    vecs[1] = np.tile(np.asarray(params["be1"]), b)
    vecs[2] = np.tile(np.asarray(params["g2"]), b)
    vecs[3] = np.tile(np.asarray(params["be2"]), b)
    vecs[4] = np.tile(np.asarray(params["b2"]), b)

    # ---- MLP weights; GELU's 1/sqrt(2) and 0.5*sqrt(2) scales folded in ----
    W1s = (np.kron(I_b, np.asarray(params["W1"])) * inv_sqrt2).astype(f32n)   # (bC, bH)
    b1s = (np.tile(np.asarray(params["b1"]), b)[None, :] * inv_sqrt2).astype(f32n)
    W2s = (np.kron(I_b, np.asarray(params["W2"])) * inv_sqrt2).astype(f32n)   # (bH, bC)

    bf = jnp.bfloat16
    consts = [
        jnp.asarray(vecs),                 # f32: used on VPU only
        jnp.asarray(Pbig, dtype=bf),       # MXU operands in bf16, f32 accumulation
        jnp.asarray(EbK, dtype=bf),
        jnp.asarray(Dcat, dtype=bf),
        jnp.asarray(Wcat),                 # f32: elementwise complex filter multiply
        jnp.asarray(Gstack, dtype=bf),
        jnp.asarray(W1s, dtype=bf),
        jnp.asarray(b1s),                  # f32: elementwise bias add
        jnp.asarray(W2s, dtype=bf),
    ]

    # (B, N, C) -> (B*a, b*C): row = batch*a + ai, col = n*C + c (contiguous, free reshape).
    x2 = x.reshape(B * a, bC)

    in_specs = [pl.BlockSpec((rows, bC), lambda i: (i, 0))]
    in_specs += [pl.BlockSpec(c.shape, lambda i: (0, 0)) for c in consts]

    out = pl.pallas_call(
        block_kernel,
        out_shape=jax.ShapeDtypeStruct((B * a, bC), jnp.float32),
        grid=grid,
        in_specs=in_specs,
        out_specs=pl.BlockSpec((rows, bC), lambda i: (i, 0)),
        compiler_params=pltpu.CompilerParams(dimension_semantics=("parallel",)),
    )(x2, *consts)

    return out.reshape(B, N, C)


# ---------------------------------------------------------------- reference (pure JAX)
def reference(x, params, a, b):
    def ln(u, g, be):
        mu = u.mean(-1, keepdims=True)
        var = ((u - mu) ** 2).mean(-1, keepdims=True)
        return (u - mu) / jnp.sqrt(var + 1e-5) * g + be

    B, N, C = x.shape
    xn = ln(x, params["g1"], params["be1"])
    xr = xn.reshape(B, a, b, C).astype(jnp.float32)
    F = jnp.fft.rfft2(xr, axes=(1, 2), norm="ortho")
    Wc = params["cw"][..., 0] + 1j * params["cw"][..., 1]
    F = F * Wc
    y = jnp.fft.irfft2(F, s=(a, b), axes=(1, 2), norm="ortho").reshape(B, N, C)
    yn = ln(y, params["g2"], params["be2"])
    h1 = jax.nn.gelu(yn @ params["W1"] + params["b1"], approximate=False)
    return x + (h1 @ params["W2"] + params["b2"])


# ---------------------------------------------------------------- main
if __name__ == "__main__":
    B, a, b, C = 32, 8, 8, 16       # N = 64 tokens, dim = 16, filter h=8, w=b//2+1=5
    N = a * b
    H = int(C * 4.0)                # mlp_ratio = 4.0
    w = b // 2 + 1

    keys = jax.random.split(jax.random.PRNGKey(0), 10)
    x = jax.random.normal(keys[0], (B, N, C), dtype=jnp.float32)
    params = {
        "cw": 0.02 * jax.random.normal(keys[1], (a, w, C, 2), dtype=jnp.float32),
        "g1": 1.0 + 0.1 * jax.random.normal(keys[2], (C,), dtype=jnp.float32),
        "be1": 0.1 * jax.random.normal(keys[3], (C,), dtype=jnp.float32),
        "g2": 1.0 + 0.1 * jax.random.normal(keys[4], (C,), dtype=jnp.float32),
        "be2": 0.1 * jax.random.normal(keys[5], (C,), dtype=jnp.float32),
        "W1": 0.05 * jax.random.normal(keys[6], (C, H), dtype=jnp.float32),
        "b1": 0.02 * jax.random.normal(keys[7], (H,), dtype=jnp.float32),
        "W2": 0.05 * jax.random.normal(keys[8], (H, C), dtype=jnp.float32),
        "b2": 0.02 * jax.random.normal(keys[9], (C,), dtype=jnp.float32),
    }

    out = gfnet_block(x, params, a, b)
    out = jax.block_until_ready(out)

    ref = jax.block_until_ready(reference(x, params, a, b))
    np.testing.assert_allclose(np.asarray(out), np.asarray(ref), rtol=3e-3, atol=3e-3)

    print("KERNEL_OK")
</pallas_src>

<mosaic_0001>
module attributes {stable_mosaic.version = 11 : i64} {
  func.func @block_kernel(%arg0: i32, %arg1: memref<128x128xf32, #tpu.memory_space<vmem>>, %arg2: memref<8x128xf32, #tpu.memory_space<vmem>>, %arg3: memref<256x256xbf16, #tpu.memory_space<vmem>>, %arg4: memref<128x256xbf16, #tpu.memory_space<vmem>>, %arg5: memref<256x128xbf16, #tpu.memory_space<vmem>>, %arg6: memref<128x256xf32, #tpu.memory_space<vmem>>, %arg7: memref<256x128xbf16, #tpu.memory_space<vmem>>, %arg8: memref<128x512xbf16, #tpu.memory_space<vmem>>, %arg9: memref<1x512xf32, #tpu.memory_space<vmem>>, %arg10: memref<512x128xbf16, #tpu.memory_space<vmem>>, %arg11: memref<128x128xf32, #tpu.memory_space<vmem>>) attributes {dimension_semantics = [#tpu.dimension_semantics<parallel>], iteration_bounds = array<i64: 2>, scalar_prefetch = 0 : i64, scratch_operands = 0 : i64, tpu.core_type = #tpu.core_type<tc>, window_params = [{transform_indices = @transform_0, window_bounds = array<i64: 128, 128>}, {pipeline_mode = #tpu.pipeline_mode<synchronous>, transform_indices = @transform_1, window_bounds = array<i64: 8, 128>}, {pipeline_mode = #tpu.pipeline_mode<synchronous>, transform_indices = @transform_2, window_bounds = array<i64: 256, 256>}, {pipeline_mode = #tpu.pipeline_mode<synchronous>, transform_indices = @transform_3, window_bounds = array<i64: 128, 256>}, {pipeline_mode = #tpu.pipeline_mode<synchronous>, transform_indices = @transform_4, window_bounds = array<i64: 256, 128>}, {pipeline_mode = #tpu.pipeline_mode<synchronous>, transform_indices = @transform_5, window_bounds = array<i64: 128, 256>}, {pipeline_mode = #tpu.pipeline_mode<synchronous>, transform_indices = @transform_6, window_bounds = array<i64: 256, 128>}, {pipeline_mode = #tpu.pipeline_mode<synchronous>, transform_indices = @transform_7, window_bounds = array<i64: 128, 512>}, {pipeline_mode = #tpu.pipeline_mode<synchronous>, transform_indices = @transform_8, window_bounds = array<i64: 1, 512>}, {pipeline_mode = #tpu.pipeline_mode<synchronous>, transform_indices = @transform_9, window_bounds = array<i64: 512, 128>}, {transform_indices = @transform_10, window_bounds = array<i64: 128, 128>}]} {
    %c0 = arith.constant 0 : index
    %c0_0 = arith.constant 0 : index
    %0 = vector.load %arg1[%c0, %c0_0] : memref<128x128xf32, #tpu.memory_space<vmem>>, vector<128x128xf32>
    %c0_1 = arith.constant 0 : index
    %c0_2 = arith.constant 0 : index
    %1 = vector.load %arg3[%c0_1, %c0_2] : memref<256x256xbf16, #tpu.memory_space<vmem>>, vector<256x256xbf16>
    %c0_3 = arith.constant 0 : index
    %c0_4 = arith.constant 0 : index
    %2 = vector.load %arg2[%c0_3, %c0_4] : memref<8x128xf32, #tpu.memory_space<vmem>>, vector<1x128xf32>
    %c1 = arith.constant 1 : index
    %c0_5 = arith.constant 0 : index
    %3 = vector.load %arg2[%c1, %c0_5] : memref<8x128xf32, #tpu.memory_space<vmem>>, vector<1x128xf32>
    %c2 = arith.constant 2 : index
    %c0_6 = arith.constant 0 : index
    %4 = vector.load %arg2[%c2, %c0_6] : memref<8x128xf32, #tpu.memory_space<vmem>>, vector<1x128xf32>
    %c3 = arith.constant 3 : index
    %c0_7 = arith.constant 0 : index
    %5 = vector.load %arg2[%c3, %c0_7] : memref<8x128xf32, #tpu.memory_space<vmem>>, vector<1x128xf32>
    %c4 = arith.constant 4 : index
    %c0_8 = arith.constant 0 : index
    %6 = vector.load %arg2[%c4, %c0_8] : memref<8x128xf32, #tpu.memory_space<vmem>>, vector<1x128xf32>
    %7 = arith.mulf %0, %0 : vector<128x128xf32>
    %8 = tpu.concatenate %0, %7 in 1 : vector<128x128xf32>, vector<128x128xf32> -> vector<128x256xf32>
    %9 = arith.truncf %8 : vector<128x256xf32> to vector<128x256xbf16>
    %cst = arith.constant dense<0.000000e+00> : vector<128x256xf32>
    %10 = tpu.matmul %9, %1, %cst {dimension_numbers = #tpu.dot_dimension_numbers<[1], [0], [0], [1], [0, 0, 1, 1], [], []>} : vector<128x256xbf16>, vector<256x256xbf16>, vector<128x256xf32> -> vector<128x256xf32>
    %11 = vector.extract_strided_slice %10 {offsets = [0, 0], sizes = [128, 128], strides = [1, 1]} : vector<128x256xf32> to vector<128x128xf32>
    %12 = vector.extract_strided_slice %10 {offsets = [0, 128], sizes = [128, 128], strides = [1, 1]} : vector<128x256xf32> to vector<128x128xf32>
    %13 = arith.mulf %11, %11 : vector<128x128xf32>
    %14 = arith.subf %12, %13 : vector<128x128xf32>
    %15 = arith.subf %0, %11 : vector<128x128xf32>
    %cst_9 = arith.constant 9.99999974E-6 : f32
    %16 = vector.broadcast %cst_9 : f32 to vector<128x128xf32>
    %17 = arith.addf %14, %16 : vector<128x128xf32>
    %18 = math.rsqrt %17 : vector<128x128xf32>
    %19 = arith.mulf %15, %18 : vector<128x128xf32>
    %20 = vector.broadcast %2 : vector<1x128xf32> to vector<128x128xf32>
    %21 = arith.mulf %19, %20 : vector<128x128xf32>
    %22 = vector.broadcast %3 : vector<1x128xf32> to vector<128x128xf32>
    %23 = arith.addf %21, %22 : vector<128x128xf32>
    %24 = arith.truncf %23 : vector<128x128xf32> to vector<128x128xbf16>
    %c0_10 = arith.constant 0 : index
    %c0_11 = arith.constant 0 : index
    %25 = vector.load %arg4[%c0_10, %c0_11] : memref<128x256xbf16, #tpu.memory_space<vmem>>, vector<128x256xbf16>
    %cst_12 = arith.constant dense<0.000000e+00> : vector<128x256xf32>
    %26 = tpu.matmul %24, %25, %cst_12 {dimension_numbers = #tpu.dot_dimension_numbers<[1], [0], [0], [1], [0, 0, 1, 1], [], []>} : vector<128x128xbf16>, vector<128x256xbf16>, vector<128x256xf32> -> vector<128x256xf32>
    %27 = arith.truncf %26 : vector<128x256xf32> to vector<128x256xbf16>
    %c0_13 = arith.constant 0 : index
    %c0_14 = arith.constant 0 : index
    %28 = vector.load %arg5[%c0_13, %c0_14] : memref<256x128xbf16, #tpu.memory_space<vmem>>, vector<128x128xbf16>
    %c128 = arith.constant 128 : index
    %c0_15 = arith.constant 0 : index
    %29 = vector.load %arg5[%c128, %c0_15] : memref<256x128xbf16, #tpu.memory_space<vmem>>, vector<128x128xbf16>
    %cst_16 = arith.constant dense<0.000000e+00> : vector<128x256xf32>
    %30 = tpu.matmul %28, %27, %cst_16 {dimension_numbers = #tpu.dot_dimension_numbers<[1], [0], [0], [1], [0, 0, 1, 1], [], []>} : vector<128x128xbf16>, vector<128x256xbf16>, vector<128x256xf32> -> vector<128x256xf32>
    %cst_17 = arith.constant dense<0.000000e+00> : vector<128x256xf32>
    %31 = tpu.matmul %29, %27, %cst_17 {dimension_numbers = #tpu.dot_dimension_numbers<[1], [0], [0], [1], [0, 0, 1, 1], [], []>} : vector<128x128xbf16>, vector<128x256xbf16>, vector<128x256xf32> -> vector<128x256xf32>
    %32 = vector.extract_strided_slice %30 {offsets = [0, 0], sizes = [128, 128], strides = [1, 1]} : vector<128x256xf32> to vector<128x128xf32>
    %33 = vector.extract_strided_slice %31 {offsets = [0, 128], sizes = [128, 128], strides = [1, 1]} : vector<128x256xf32> to vector<128x128xf32>
    %34 = arith.subf %32, %33 : vector<128x128xf32>
    %35 = vector.extract_strided_slice %30 {offsets = [0, 128], sizes = [128, 128], strides = [1, 1]} : vector<128x256xf32> to vector<128x128xf32>
    %36 = vector.extract_strided_slice %31 {offsets = [0, 0], sizes = [128, 128], strides = [1, 1]} : vector<128x256xf32> to vector<128x128xf32>
    %37 = arith.addf %35, %36 : vector<128x128xf32>
    %c0_18 = arith.constant 0 : index
    %c0_19 = arith.constant 0 : index
    %38 = vector.load %arg6[%c0_18, %c0_19] : memref<128x256xf32, #tpu.memory_space<vmem>>, vector<128x128xf32>
    %c0_20 = arith.constant 0 : index
    %c128_21 = arith.constant 128 : index
    %39 = vector.load %arg6[%c0_20, %c128_21] : memref<128x256xf32, #tpu.memory_space<vmem>>, vector<128x128xf32>
    %40 = arith.mulf %34, %38 : vector<128x128xf32>
    %41 = arith.mulf %37, %39 : vector<128x128xf32>
    %42 = arith.subf %40, %41 : vector<128x128xf32>
    %43 = arith.mulf %34, %39 : vector<128x128xf32>
    %44 = arith.mulf %37, %38 : vector<128x128xf32>
    %45 = arith.addf %43, %44 : vector<128x128xf32>
    %46 = tpu.concatenate %42, %45 in 1 : vector<128x128xf32>, vector<128x128xf32> -> vector<128x256xf32>
    %47 = arith.truncf %46 : vector<128x256xf32> to vector<128x256xbf16>
    %cst_22 = arith.constant dense<0.000000e+00> : vector<128x256xf32>
    %48 = tpu.matmul %28, %47, %cst_22 {dimension_numbers = #tpu.dot_dimension_numbers<[1], [0], [0], [1], [0, 0, 1, 1], [], []>} : vector<128x128xbf16>, vector<128x256xbf16>, vector<128x256xf32> -> vector<128x256xf32>
    %cst_23 = arith.constant dense<0.000000e+00> : vector<128x256xf32>
    %49 = tpu.matmul %29, %47, %cst_23 {dimension_numbers = #tpu.dot_dimension_numbers<[1], [0], [0], [1], [0, 0, 1, 1], [], []>} : vector<128x128xbf16>, vector<128x256xbf16>, vector<128x256xf32> -> vector<128x256xf32>
    %50 = vector.extract_strided_slice %48 {offsets = [0, 0], sizes = [128, 128], strides = [1, 1]} : vector<128x256xf32> to vector<128x128xf32>
    %51 = vector.extract_strided_slice %49 {offsets = [0, 128], sizes = [128, 128], strides = [1, 1]} : vector<128x256xf32> to vector<128x128xf32>
    %52 = arith.addf %50, %51 : vector<128x128xf32>
    %53 = vector.extract_strided_slice %48 {offsets = [0, 128], sizes = [128, 128], strides = [1, 1]} : vector<128x256xf32> to vector<128x128xf32>
    %54 = vector.extract_strided_slice %49 {offsets = [0, 0], sizes = [128, 128], strides = [1, 1]} : vector<128x256xf32> to vector<128x128xf32>
    %55 = arith.subf %53, %54 : vector<128x128xf32>
    %56 = tpu.concatenate %52, %55 in 1 : vector<128x128xf32>, vector<128x128xf32> -> vector<128x256xf32>
    %57 = arith.truncf %56 : vector<128x256xf32> to vector<128x256xbf16>
    %c0_24 = arith.constant 0 : index
    %c0_25 = arith.constant 0 : index
    %58 = vector.load %arg7[%c0_24, %c0_25] : memref<256x128xbf16, #tpu.memory_space<vmem>>, vector<256x128xbf16>
    %cst_26 = arith.constant dense<0.000000e+00> : vector<128x128xf32>
    %59 = tpu.matmul %57, %58, %cst_26 {dimension_numbers = #tpu.dot_dimension_numbers<[1], [0], [0], [1], [0, 0, 1, 1], [], []>} : vector<128x256xbf16>, vector<256x128xbf16>, vector<128x128xf32> -> vector<128x128xf32>
    %60 = arith.mulf %59, %59 : vector<128x128xf32>
    %61 = tpu.concatenate %59, %60 in 1 : vector<128x128xf32>, vector<128x128xf32> -> vector<128x256xf32>
    %62 = arith.truncf %61 : vector<128x256xf32> to vector<128x256xbf16>
    %cst_27 = arith.constant dense<0.000000e+00> : vector<128x256xf32>
    %63 = tpu.matmul %62, %1, %cst_27 {dimension_numbers = #tpu.dot_dimension_numbers<[1], [0], [0], [1], [0, 0, 1, 1], [], []>} : vector<128x256xbf16>, vector<256x256xbf16>, vector<128x256xf32> -> vector<128x256xf32>
    %64 = vector.extract_strided_slice %63 {offsets = [0, 0], sizes = [128, 128], strides = [1, 1]} : vector<128x256xf32> to vector<128x128xf32>
    %65 = vector.extract_strided_slice %63 {offsets = [0, 128], sizes = [128, 128], strides = [1, 1]} : vector<128x256xf32> to vector<128x128xf32>
    %66 = arith.mulf %64, %64 : vector<128x128xf32>
    %67 = arith.subf %65, %66 : vector<128x128xf32>
    %68 = arith.subf %59, %64 : vector<128x128xf32>
    %cst_28 = arith.constant 9.99999974E-6 : f32
    %69 = vector.broadcast %cst_28 : f32 to vector<128x128xf32>
    %70 = arith.addf %67, %69 : vector<128x128xf32>
    %71 = math.rsqrt %70 : vector<128x128xf32>
    %72 = arith.mulf %68, %71 : vector<128x128xf32>
    %73 = vector.broadcast %4 : vector<1x128xf32> to vector<128x128xf32>
    %74 = arith.mulf %72, %73 : vector<128x128xf32>
    %75 = vector.broadcast %5 : vector<1x128xf32> to vector<128x128xf32>
    %76 = arith.addf %74, %75 : vector<128x128xf32>
    %77 = arith.truncf %76 : vector<128x128xf32> to vector<128x128xbf16>
    %c0_29 = arith.constant 0 : index
    %c0_30 = arith.constant 0 : index
    %78 = vector.load %arg8[%c0_29, %c0_30] : memref<128x512xbf16, #tpu.memory_space<vmem>>, vector<128x512xbf16>
    %cst_31 = arith.constant dense<0.000000e+00> : vector<128x512xf32>
    %79 = tpu.matmul %77, %78, %cst_31 {dimension_numbers = #tpu.dot_dimension_numbers<[1], [0], [0], [1], [0, 0, 1, 1], [], []>} : vector<128x128xbf16>, vector<128x512xbf16>, vector<128x512xf32> -> vector<128x512xf32>
    %c0_32 = arith.constant 0 : index
    %c0_33 = arith.constant 0 : index
    %80 = vector.load %arg9[%c0_32, %c0_33] : memref<1x512xf32, #tpu.memory_space<vmem>>, vector<1x512xf32>
    %81 = vector.broadcast %80 : vector<1x512xf32> to vector<128x512xf32>
    %82 = arith.addf %79, %81 : vector<128x512xf32>
    %cst_34 = arith.constant 0.000000e+00 : f32
    %83 = vector.broadcast %cst_34 : f32 to vector<128x512xf32>
    %84 = arith.cmpf oge, %82, %83 : vector<128x512xf32>
    %cst_35 = arith.constant 1.000000e+00 : f32
    %cst_36 = arith.constant -1.000000e+00 : f32
    %85 = vector.broadcast %cst_35 : f32 to vector<128x512xf32>
    %86 = vector.broadcast %cst_36 : f32 to vector<128x512xf32>
    %87 = arith.select %84, %85, %86 : vector<128x512xi1>, vector<128x512xf32>
    %88 = math.absf %82 : vector<128x512xf32>
    %cst_37 = arith.constant 0.327591091 : f32
    %89 = vector.broadcast %cst_37 : f32 to vector<128x512xf32>
    %90 = arith.mulf %89, %88 : vector<128x512xf32>
    %cst_38 = arith.constant 1.000000e+00 : f32
    %91 = vector.broadcast %cst_38 : f32 to vector<128x512xf32>
    %92 = arith.addf %91, %90 : vector<128x512xf32>
    %93 = tpu.reciprocal %92 {approx = true} : vector<128x512xf32> -> vector<128x512xf32>
    %94 = arith.mulf %92, %93 : vector<128x512xf32>
    %cst_39 = arith.constant 2.000000e+00 : f32
    %95 = vector.broadcast %cst_39 : f32 to vector<128x512xf32>
    %96 = arith.subf %95, %94 : vector<128x512xf32>
    %97 = arith.mulf %93, %96 : vector<128x512xf32>
    %cst_40 = arith.constant 1.06140542 : f32
    %98 = vector.broadcast %cst_40 : f32 to vector<128x512xf32>
    %99 = arith.mulf %98, %97 : vector<128x512xf32>
    %cst_41 = arith.constant -1.45315206 : f32
    %100 = vector.broadcast %cst_41 : f32 to vector<128x512xf32>
    %101 = arith.addf %99, %100 : vector<128x512xf32>
    %102 = arith.mulf %101, %97 : vector<128x512xf32>
    %cst_42 = arith.constant 1.42141378 : f32
    %103 = vector.broadcast %cst_42 : f32 to vector<128x512xf32>
    %104 = arith.addf %102, %103 : vector<128x512xf32>
    %105 = arith.mulf %104, %97 : vector<128x512xf32>
    %cst_43 = arith.constant -0.284496725 : f32
    %106 = vector.broadcast %cst_43 : f32 to vector<128x512xf32>
    %107 = arith.addf %105, %106 : vector<128x512xf32>
    %108 = arith.mulf %107, %97 : vector<128x512xf32>
    %cst_44 = arith.constant 0.254829586 : f32
    %109 = vector.broadcast %cst_44 : f32 to vector<128x512xf32>
    %110 = arith.addf %108, %109 : vector<128x512xf32>
    %111 = arith.mulf %110, %97 : vector<128x512xf32>
    %cst_45 = arith.constant 0.000000e+00 : f32
    %112 = vector.broadcast %cst_45 : f32 to vector<128x512xf32>
    %113 = arith.subf %112, %88 : vector<128x512xf32>
    %114 = arith.mulf %113, %88 : vector<128x512xf32>
    %115 = math.exp %114 : vector<128x512xf32>
    %116 = arith.mulf %111, %115 : vector<128x512xf32>
    %cst_46 = arith.constant 1.000000e+00 : f32
    %117 = vector.broadcast %cst_46 : f32 to vector<128x512xf32>
    %118 = arith.subf %117, %116 : vector<128x512xf32>
    %119 = arith.mulf %87, %118 : vector<128x512xf32>
    %cst_47 = arith.constant 1.000000e+00 : f32
    %120 = vector.broadcast %cst_47 : f32 to vector<128x512xf32>
    %121 = arith.addf %120, %119 : vector<128x512xf32>
    %122 = arith.mulf %82, %121 : vector<128x512xf32>
    %123 = arith.truncf %122 : vector<128x512xf32> to vector<128x512xbf16>
    %c0_48 = arith.constant 0 : index
    %c0_49 = arith.constant 0 : index
    %124 = vector.load %arg10[%c0_48, %c0_49] : memref<512x128xbf16, #tpu.memory_space<vmem>>, vector<512x128xbf16>
    %cst_50 = arith.constant dense<0.000000e+00> : vector<128x128xf32>
    %125 = tpu.matmul %123, %124, %cst_50 {dimension_numbers = #tpu.dot_dimension_numbers<[1], [0], [0], [1], [0, 0, 1, 1], [], []>} : vector<128x512xbf16>, vector<512x128xbf16>, vector<128x128xf32> -> vector<128x128xf32>
    %126 = vector.broadcast %6 : vector<1x128xf32> to vector<128x128xf32>
    %127 = arith.addf %125, %126 : vector<128x128xf32>
    %128 = arith.addf %0, %127 : vector<128x128xf32>
    %c0_51 = arith.constant 0 : index
    %c0_52 = arith.constant 0 : index
    %129 = vector.load %arg11[%c0_51, %c0_52] : memref<128x128xf32, #tpu.memory_space<vmem>>, vector<128x128xf32>
    tpu.vector_store %arg11[%c0_51, %c0_52], %128 {strides = array<i32>} : memref<128x128xf32, #tpu.memory_space<vmem>>, vector<128x128xf32>,
    return
  }
  func.func @transform_0(%arg0: i32) -> (i32, i32) {
    %c0_i32 = arith.constant 0 : i32
    %c0_i32_0 = arith.constant 0 : i32
    return %arg0, %c0_i32 : i32, i32
  }
  func.func @transform_1(%arg0: i32) -> (i32, i32) {
    %c0_i32 = arith.constant 0 : i32
    %c0_i32_0 = arith.constant 0 : i32
    %c0_i32_1 = arith.constant 0 : i32
    return %c0_i32, %c0_i32_0 : i32, i32
  }
  func.func @transform_2(%arg0: i32) -> (i32, i32) {
    %c0_i32 = arith.constant 0 : i32
    %c0_i32_0 = arith.constant 0 : i32
    %c0_i32_1 = arith.constant 0 : i32
    return %c0_i32, %c0_i32_0 : i32, i32
  }
  func.func @transform_3(%arg0: i32) -> (i32, i32) {
    %c0_i32 = arith.constant 0 : i32
    %c0_i32_0 = arith.constant 0 : i32
    %c0_i32_1 = arith.constant 0 : i32
    return %c0_i32, %c0_i32_0 : i32, i32
  }
  func.func @transform_4(%arg0: i32) -> (i32, i32) {
    %c0_i32 = arith.constant 0 : i32
    %c0_i32_0 = arith.constant 0 : i32
    %c0_i32_1 = arith.constant 0 : i32
    return %c0_i32, %c0_i32_0 : i32, i32
  }
  func.func @transform_5(%arg0: i32) -> (i32, i32) {
    %c0_i32 = arith.constant 0 : i32
    %c0_i32_0 = arith.constant 0 : i32
    %c0_i32_1 = arith.constant 0 : i32
    return %c0_i32, %c0_i32_0 : i32, i32
  }
  func.func @transform_6(%arg0: i32) -> (i32, i32) {
    %c0_i32 = arith.constant 0 : i32
    %c0_i32_0 = arith.constant 0 : i32
    %c0_i32_1 = arith.constant 0 : i32
    return %c0_i32, %c0_i32_0 : i32, i32
  }
  func.func @transform_7(%arg0: i32) -> (i32, i32) {
    %c0_i32 = arith.constant 0 : i32
    %c0_i32_0 = arith.constant 0 : i32
    %c0_i32_1 = arith.constant 0 : i32
    return %c0_i32, %c0_i32_0 : i32, i32
  }
  func.func @transform_8(%arg0: i32) -> (i32, i32) {
    %c0_i32 = arith.constant 0 : i32
    %c0_i32_0 = arith.constant 0 : i32
    %c0_i32_1 = arith.constant 0 : i32
    return %c0_i32, %c0_i32_0 : i32, i32
  }
  func.func @transform_9(%arg0: i32) -> (i32, i32) {
    %c0_i32 = arith.constant 0 : i32
    %c0_i32_0 = arith.constant 0 : i32
    %c0_i32_1 = arith.constant 0 : i32
    return %c0_i32, %c0_i32_0 : i32, i32
  }
  func.func @transform_10(%arg0: i32) -> (i32, i32) {
    %c0_i32 = arith.constant 0 : i32
    %c0_i32_0 = arith.constant 0 : i32
    return %arg0, %c0_i32 : i32, i32
  }
}

</mosaic_0001>

<llo_original>
// kernel: tpu_custom_call.1
$region0: #{tpu_custom_call.1}
  #allocation0 [shape = 'u32[]', space=smem, size = 0x4, offset = 0x4, fixed_abs, tag = 'smem constant byte address 0x4 - core index']
  #allocation1 [shape = 'u32[144,128]{1,0:T(1,128)}', space=vmem, size = 0x12000, scoped, tag = 'internal scratch']
  %s0 = inlined_call_operand.hbm [shape: f32[256,128], index: 0, kind: input, shape index: {}]
  %s1 = inlined_call_operand.hbm [shape: f32[8,128], index: 1, kind: input, shape index: {}]
  %s2 = inlined_call_operand.hbm [shape: bf16[256,256], index: 2, kind: input, shape index: {}]
  %s3 = inlined_call_operand.hbm [shape: bf16[128,256], index: 3, kind: input, shape index: {}]
  %s4 = inlined_call_operand.hbm [shape: bf16[256,128], index: 4, kind: input, shape index: {}]
  %s5 = inlined_call_operand.hbm [shape: f32[128,256], index: 5, kind: input, shape index: {}]
  %s6 = inlined_call_operand.hbm [shape: bf16[256,128], index: 6, kind: input, shape index: {}]
  %s7 = inlined_call_operand.hbm [shape: bf16[128,512], index: 7, kind: input, shape index: {}]
  %s8 = inlined_call_operand.vmem [shape: f32[1,512], index: 8, kind: input, shape index: {}]
  %s9 = inlined_call_operand.hbm [shape: bf16[512,128], index: 9, kind: input, shape index: {}]
  %s10 = inlined_call_operand.hbm [shape: f32[256,128], index: 10, kind: output, shape index: {}]
  %s11 = sld [smem:[#allocation0]]
  $region109: #{tpu_custom_call.1} parent=0
    _
  %s13 = ssub.s32 1, %s11
  %s14 = scalar_select 0, %s13, %s11
  $region1: #{tpu_custom_call.1} parent=0
    #allocation2 [shape = 'u8[131072]{0}', space=vmem, size = 0x20000, scoped, tag = 'input window, operand 0']
    #allocation3 [shape = 's32[2]{0}', space=sflag, size = 0x8, scoped, tag = 'scoped memory for tpu_custom_call.1']
    #allocation4 [shape = 's32[2]{0}', space=sflag, size = 0x8, scoped, tag = 'scoped memory for tpu_custom_call.1']
    #allocation5 [shape = 'u8[4096]{0}', space=vmem, size = 0x1000, scoped, tag = 'input window, operand 1, single buffered']
    #allocation6 [shape = 's32[1]{0}', space=sflag, size = 0x4, scoped, tag = 'scoped memory for tpu_custom_call.1']
    #allocation7 [shape = 'u8[131072]{0}', space=vmem, size = 0x20000, scoped, tag = 'input window, operand 2, single buffered']
    #allocation8 [shape = 'u8[65536]{0}', space=vmem, size = 0x10000, scoped, tag = 'input window, operand 3, single buffered']
    #allocation9 [shape = 's32[1]{0}', space=sflag, size = 0x4, scoped, tag = 'scoped memory for tpu_custom_call.1']
    #allocation10 [shape = 'u8[65536]{0}', space=vmem, size = 0x10000, scoped, tag = 'input window, operand 4, single buffered']
    #allocation11 [shape = 'u8[131072]{0}', space=vmem, size = 0x20000, scoped, tag = 'input window, operand 5, single buffered']
    #allocation12 [shape = 's32[1]{0}', space=sflag, size = 0x4, scoped, tag = 'scoped memory for tpu_custom_call.1']
    #allocation13 [shape = 'u8[65536]{0}', space=vmem, size = 0x10000, scoped, tag = 'input window, operand 6, single buffered']
    #allocation14 [shape = 'u8[131072]{0}', space=vmem, size = 0x20000, scoped, tag = 'input window, operand 7, single buffered']
    #allocation15 [shape = 's32[1]{0}', space=sflag, size = 0x4, scoped, tag = 'scoped memory for tpu_custom_call.1']
    #allocation16 [shape = 'u8[131072]{0}', space=vmem, size = 0x20000, scoped, tag = 'input window, operand 9, single buffered']
    #allocation17 [shape = 'u8[131072]{0}', space=vmem, size = 0x20000, scoped, tag = 'output window, operand 0']
    %15 = vsyncpa [#allocation3], 0
    %s16 = scalar_lea.sflag [#allocation3], 1
    %17 = vsyncpa %s16, 0
    %18 = vsyncpa [#allocation6], 0
    %19 = vsyncpa [#allocation9], 0
    %20 = vsyncpa [#allocation12], 0
    %21 = vsyncpa [#allocation15], 0
    %22 = vsyncpa [#allocation4], 0
    %s23 = scalar_lea.sflag [#allocation4], 1
    %24 = vsyncpa %s23, 0
    loop: start=0, step=1, limit=4
    $region2: #{tpu_custom_call.1} parent=1 // loop_pre_header
      _
    $region3: #{tpu_custom_call.1} parent=1 // loop_header
      %s26 = sphi 0, %s30
      %p27 = scmp.ge.s32.totalorder %s26, 4
      %s36 = sphi 0, %s38
      %s39 = sphi 0, %s36
      %s40 = sphi 0, %s39
      %s56 = sphi 0, %s40
      %s60 = sphi 0, %s60
      %s62 = sphi 0, %s60
      %s63 = sphi 0, %s62
      %s77 = sphi 0, %s63
      %s81 = sphi 0, %s81
      %s83 = sphi 0, %s81
      %s84 = sphi 0, %s83
      %s98 = sphi 0, %s84
      %s102 = sphi 0, %s102
      %s104 = sphi 0, %s102
      %s105 = sphi 0, %s104
      %s119 = sphi 0, %s105
      %s123 = sphi 0, %s123
      %s125 = sphi 0, %s123
      %s126 = sphi 0, %s125
      %s140 = sphi 0, %s126
      %s144 = sphi 0, %s144
      %s146 = sphi 0, %s144
      %s147 = sphi 0, %s146
      %s161 = sphi 0, %s147
      %s165 = sphi 0, %s165
      %s167 = sphi 0, %s165
      %s168 = sphi 0, %s167
      %s182 = sphi 0, %s168
      %s186 = sphi 0, %s186
      %s188 = sphi 0, %s186
      %s189 = sphi 0, %s188
      %s203 = sphi 0, %s189
      %s207 = sphi 0, %s207
      %s209 = sphi 0, %s207
      %s210 = sphi 0, %s209
      %s224 = sphi 0, %s210
      %s228 = sphi 0, %s228
      %s230 = sphi 0, %s228
      %s231 = sphi 0, %s230
      %s245 = sphi 0, %s231
      %s251 = sphi 0, %s253
      %s254 = sphi 0, %s251
      %s255 = sphi 0, %s254
      %s271 = sphi 0, %s255
    $region4: #{tpu_custom_call.1} parent=1 // loop_header_branch
      %29 = sbr.rel (%p27) target = $region8
    $region5: #{tpu_custom_call.1} parent=1 // loop_body
      %s31 = ssub.s32 %s26, 1
      %s32 = ssub.s32 %s26, 2
      %s33 = sadd.s32 %s26, 1
      %s34 = ssub.s32 %s26, %s33
      %p35 = scmp.eq.s32.totalorder %s34, 0
      %s37 = sadd.s32 %s36, 1
      %s38 = scalar_select %p35, %s36, %s37
      %p41 = pneg %p35
      %p42 = scmp.eq.s32.totalorder %s26, 1
      %p43 = por %p41, %p42
      %p44 = scmp.ne.s32.totalorder %s36, %s39
      %p45 = scmp.eq.s32.totalorder %s26, 0
      %p46 = por %p44, %p45
      %p47 = scmp.ne.s32.totalorder %s36, %s39
      %p48 = scmp.eq.s32.totalorder %s31, 1
      %p49 = por %p47, %p48
      %p50 = scmp.ne.s32.totalorder %s39, %s40
      %p51 = scmp.eq.s32.totalorder %s31, 0
      %p52 = por %p50, %p51
      %p53 = scmp.ne.s32.totalorder %s39, %s40
      %p54 = scmp.eq.s32.totalorder %s32, 1
      %p55 = por %p53, %p54
      %p57 = scmp.ne.s32.totalorder %s40, %s56
      %p58 = scmp.eq.s32.totalorder %s32, 0
      %p59 = por %p57, %p58
      %s61 = sadd.s32 %s60, 1
      %p64 = scmp.eq.s32.totalorder %s26, 1
      %p65 = scmp.ne.s32.totalorder %s60, %s62
      %p66 = scmp.eq.s32.totalorder %s26, 0
      %p67 = por %p65, %p66
      %p68 = scmp.ne.s32.totalorder %s60, %s62
      %p69 = scmp.eq.s32.totalorder %s31, 1
      %p70 = por %p68, %p69
      %p71 = scmp.ne.s32.totalorder %s62, %s63
      %p72 = scmp.eq.s32.totalorder %s31, 0
      %p73 = por %p71, %p72
      %p74 = scmp.ne.s32.totalorder %s62, %s63
      %p75 = scmp.eq.s32.totalorder %s32, 1
      %p76 = por %p74, %p75
      %p78 = scmp.ne.s32.totalorder %s63, %s77
      %p79 = scmp.eq.s32.totalorder %s32, 0
      %p80 = por %p78, %p79
      %s82 = sadd.s32 %s81, 1
      %p85 = scmp.eq.s32.totalorder %s26, 1
      %p86 = scmp.ne.s32.totalorder %s81, %s83
      %p87 = scmp.eq.s32.totalorder %s26, 0
      %p88 = por %p86, %p87
      %p89 = scmp.ne.s32.totalorder %s81, %s83
      %p90 = scmp.eq.s32.totalorder %s31, 1
      %p91 = por %p89, %p90
      %p92 = scmp.ne.s32.totalorder %s83, %s84
      %p93 = scmp.eq.s32.totalorder %s31, 0
      %p94 = por %p92, %p93
      %p95 = scmp.ne.s32.totalorder %s83, %s84
      %p96 = scmp.eq.s32.totalorder %s32, 1
      %p97 = por %p95, %p96
      %p99 = scmp.ne.s32.totalorder %s84, %s98
      %p100 = scmp.eq.s32.totalorder %s32, 0
      %p101 = por %p99, %p100
      %s103 = sadd.s32 %s102, 1
      %p106 = scmp.eq.s32.totalorder %s26, 1
      %p107 = scmp.ne.s32.totalorder %s102, %s104
      %p108 = scmp.eq.s32.totalorder %s26, 0
      %p109 = por %p107, %p108
      %p110 = scmp.ne.s32.totalorder %s102, %s104
      %p111 = scmp.eq.s32.totalorder %s31, 1
      %p112 = por %p110, %p111
      %p113 = scmp.ne.s32.totalorder %s104, %s105
      %p114 = scmp.eq.s32.totalorder %s31, 0
      %p115 = por %p113, %p114
      %p116 = scmp.ne.s32.totalorder %s104, %s105
      %p117 = scmp.eq.s32.totalorder %s32, 1
      %p118 = por %p116, %p117
      %p120 = scmp.ne.s32.totalorder %s105, %s119
      %p121 = scmp.eq.s32.totalorder %s32, 0
      %p122 = por %p120, %p121
      %s124 = sadd.s32 %s123, 1
      %p127 = scmp.eq.s32.totalorder %s26, 1
      %p128 = scmp.ne.s32.totalorder %s123, %s125
      %p129 = scmp.eq.s32.totalorder %s26, 0
      %p130 = por %p128, %p129
      %p131 = scmp.ne.s32.totalorder %s123, %s125
      %p132 = scmp.eq.s32.totalorder %s31, 1
      %p133 = por %p131, %p132
      %p134 = scmp.ne.s32.totalorder %s125, %s126
      %p135 = scmp.eq.s32.totalorder %s31, 0
      %p136 = por %p134, %p135
      %p137 = scmp.ne.s32.totalorder %s125, %s126
      %p138 = scmp.eq.s32.totalorder %s32, 1
      %p139 = por %p137, %p138
      %p141 = scmp.ne.s32.totalorder %s126, %s140
      %p142 = scmp.eq.s32.totalorder %s32, 0
      %p143 = por %p141, %p142
      %s145 = sadd.s32 %s144, 1
      %p148 = scmp.eq.s32.totalorder %s26, 1
      %p149 = scmp.ne.s32.totalorder %s144, %s146
      %p150 = scmp.eq.s32.totalorder %s26, 0
      %p151 = por %p149, %p150
      %p152 = scmp.ne.s32.totalorder %s144, %s146
      %p153 = scmp.eq.s32.totalorder %s31, 1
      %p154 = por %p152, %p153
      %p155 = scmp.ne.s32.totalorder %s146, %s147
      %p156 = scmp.eq.s32.totalorder %s31, 0
      %p157 = por %p155, %p156
      %p158 = scmp.ne.s32.totalorder %s146, %s147
      %p159 = scmp.eq.s32.totalorder %s32, 1
      %p160 = por %p158, %p159
      %p162 = scmp.ne.s32.totalorder %s147, %s161
      %p163 = scmp.eq.s32.totalorder %s32, 0
      %p164 = por %p162, %p163
      %s166 = sadd.s32 %s165, 1
      %p169 = scmp.eq.s32.totalorder %s26, 1
      %p170 = scmp.ne.s32.totalorder %s165, %s167
      %p171 = scmp.eq.s32.totalorder %s26, 0
      %p172 = por %p170, %p171
      %p173 = scmp.ne.s32.totalorder %s165, %s167
      %p174 = scmp.eq.s32.totalorder %s31, 1
      %p175 = por %p173, %p174
      %p176 = scmp.ne.s32.totalorder %s167, %s168
      %p177 = scmp.eq.s32.totalorder %s31, 0
      %p178 = por %p176, %p177
      %p179 = scmp.ne.s32.totalorder %s167, %s168
      %p180 = scmp.eq.s32.totalorder %s32, 1
      %p181 = por %p179, %p180
      %p183 = scmp.ne.s32.totalorder %s168, %s182
      %p184 = scmp.eq.s32.totalorder %s32, 0
      %p185 = por %p183, %p184
      %s187 = sadd.s32 %s186, 1
      %p190 = scmp.eq.s32.totalorder %s26, 1
      %p191 = scmp.ne.s32.totalorder %s186, %s188
      %p192 = scmp.eq.s32.totalorder %s26, 0
      %p193 = por %p191, %p192
      %p194 = scmp.ne.s32.totalorder %s186, %s188
      %p195 = scmp.eq.s32.totalorder %s31, 1
      %p196 = por %p194, %p195
      %p197 = scmp.ne.s32.totalorder %s188, %s189
      %p198 = scmp.eq.s32.totalorder %s31, 0
      %p199 = por %p197, %p198
      %p200 = scmp.ne.s32.totalorder %s188, %s189
      %p201 = scmp.eq.s32.totalorder %s32, 1
      %p202 = por %p200, %p201
      %p204 = scmp.ne.s32.totalorder %s189, %s203
      %p205 = scmp.eq.s32.totalorder %s32, 0
      %p206 = por %p204, %p205
      %s208 = sadd.s32 %s207, 1
      %p211 = scmp.eq.s32.totalorder %s26, 1
      %p212 = scmp.ne.s32.totalorder %s207, %s209
      %p213 = scmp.eq.s32.totalorder %s26, 0
      %p214 = por %p212, %p213
      %p215 = scmp.ne.s32.totalorder %s207, %s209
      %p216 = scmp.eq.s32.totalorder %s31, 1
      %p217 = por %p215, %p216
      %p218 = scmp.ne.s32.totalorder %s209, %s210
      %p219 = scmp.eq.s32.totalorder %s31, 0
      %p220 = por %p218, %p219
      %p221 = scmp.ne.s32.totalorder %s209, %s210
      %p222 = scmp.eq.s32.totalorder %s32, 1
      %p223 = por %p221, %p222
      %p225 = scmp.ne.s32.totalorder %s210, %s224
      %p226 = scmp.eq.s32.totalorder %s32, 0
      %p227 = por %p225, %p226
      %s229 = sadd.s32 %s228, 1
      %p232 = scmp.eq.s32.totalorder %s26, 1
      %p233 = scmp.ne.s32.totalorder %s228, %s230
      %p234 = scmp.eq.s32.totalorder %s26, 0
      %p235 = por %p233, %p234
      %p236 = scmp.ne.s32.totalorder %s228, %s230
      %p237 = scmp.eq.s32.totalorder %s31, 1
      %p238 = por %p236, %p237
      %p239 = scmp.ne.s32.totalorder %s230, %s231
      %p240 = scmp.eq.s32.totalorder %s31, 0
      %p241 = por %p239, %p240
      %p242 = scmp.ne.s32.totalorder %s230, %s231
      %p243 = scmp.eq.s32.totalorder %s32, 1
      %p244 = por %p242, %p243
      %p246 = scmp.ne.s32.totalorder %s231, %s245
      %p247 = scmp.eq.s32.totalorder %s32, 0
      %p248 = por %p246, %p247
      %s249 = ssub.s32 %s26, %s33
      %p250 = scmp.eq.s32.totalorder %s249, 0
      %s252 = sadd.s32 %s251, 1
      %s253 = scalar_select %p250, %s251, %s252
      %p256 = pneg %p250
      %p257 = scmp.eq.s32.totalorder %s26, 1
      %p258 = por %p256, %p257
      %p259 = scmp.ne.s32.totalorder %s251, %s254
      %p260 = scmp.eq.s32.totalorder %s26, 0
      %p261 = por %p259, %p260
      %p262 = scmp.ne.s32.totalorder %s251, %s254
      %p263 = scmp.eq.s32.totalorder %s31, 1
      %p264 = por %p262, %p263
      %p265 = scmp.ne.s32.totalorder %s254, %s255
      %p266 = scmp.eq.s32.totalorder %s31, 0
      %p267 = por %p265, %p266
      %p268 = scmp.ne.s32.totalorder %s254, %s255
      %p269 = scmp.eq.s32.totalorder %s32, 1
      %p270 = por %p268, %p269
      %p272 = scmp.ne.s32.totalorder %s255, %s271
      %p273 = scmp.eq.s32.totalorder %s32, 0
      %p274 = por %p272, %p273
      %p275 = scmp.le.s32.totalorder 1, %s26
      %p276 = scmp.lt.s32.totalorder %s26, 3
      %p277 = pnand %p275, %p276
      %p278 = pneg %p277
      // Predicated region
      $region9: #{tpu_custom_call.1} parent=5 // pred_check
        _
      $region10: #{tpu_custom_call.1} parent=5 // pred_check_branch
        %280 = sbr.rel (%p277) target = $region12
      $region11: #{tpu_custom_call.1} parent=5 // pred_region
        %s281 = ssub.s32 %s26, 1
        // Predicated region
        $region13: #{tpu_custom_call.1} parent=11 // pred_check
          %p282 = pneg %p73
        $region14: #{tpu_custom_call.1} parent=11 // pred_check_branch
          %284 = sbr.rel (%p282) target = $region16
        $region15: #{tpu_custom_call.1} parent=11 // pred_region
          %s286 = ssub.s32 128, 128
          %287 = vsyncadd [#allocation6], %s286
          %s289 = sshll.u32 [#allocation5], 4
          %s290 = int_to_ptr.vmem [resolvable:$true] %s289
          %292 = dma.hbm_to_vmem [thread:$0]  %s1, 128, %s290, [#allocation6]
        $region16: #{tpu_custom_call.1} parent=11 // pred_fallthru
          _
        // Predicated region
        $region17: #{tpu_custom_call.1} parent=11 // pred_check
          %p293 = pneg %p94
        $region18: #{tpu_custom_call.1} parent=11 // pred_check_branch
          %295 = sbr.rel (%p293) target = $region20
        $region19: #{tpu_custom_call.1} parent=11 // pred_region
          %s297 = ssub.s32 4096, 4096
          %298 = vsyncadd [#allocation6], %s297
          %s299 = sshll.u32 [#allocation7], 4
          %s300 = int_to_ptr.vmem [resolvable:$true] %s299
          %305 = dma.hbm_to_vmem [thread:$0]  %s2, 4096, %s300, [#allocation6], 128, 128, 8
        $region20: #{tpu_custom_call.1} parent=11 // pred_fallthru
          _
        // Predicated region
        $region21: #{tpu_custom_call.1} parent=11 // pred_check
          %p306 = pneg %p115
        $region22: #{tpu_custom_call.1} parent=11 // pred_check_branch
          %308 = sbr.rel (%p306) target = $region24
        $region23: #{tpu_custom_call.1} parent=11 // pred_region
          %s310 = ssub.s32 2048, 2048
          %311 = vsyncadd [#allocation9], %s310
          %s312 = sshll.u32 [#allocation8], 4
          %s313 = int_to_ptr.vmem [resolvable:$true] %s312
          %318 = dma.hbm_to_vmem [thread:$0]  %s3, 2048, %s313, [#allocation9], 128, 128, 8
        $region24: #{tpu_custom_call.1} parent=11 // pred_fallthru
          _
        // Predicated region
        $region25: #{tpu_custom_call.1} parent=11 // pred_check
          %p319 = pneg %p136
        $region26: #{tpu_custom_call.1} parent=11 // pred_check_branch
          %321 = sbr.rel (%p319) target = $region28
        $region27: #{tpu_custom_call.1} parent=11 // pred_region
          %s323 = ssub.s32 2048, 2048
          %324 = vsyncadd [#allocation9], %s323
          %s325 = sshll.u32 [#allocation10], 4
          %s326 = int_to_ptr.vmem [resolvable:$true] %s325
          %331 = dma.hbm_to_vmem [thread:$0]  %s4, 2048, %s326, [#allocation9], 64, 64, 4
        $region28: #{tpu_custom_call.1} parent=11 // pred_fallthru
          _
        // Predicated region
        $region29: #{tpu_custom_call.1} parent=11 // pred_check
          %p332 = pneg %p157
        $region30: #{tpu_custom_call.1} parent=11 // pred_check_branch
          %334 = sbr.rel (%p332) target = $region32
        $region31: #{tpu_custom_call.1} parent=11 // pred_region
          %s336 = ssub.s32 4096, 4096
          %337 = vsyncadd [#allocation12], %s336
          %s338 = sshll.u32 [#allocation11], 4
          %s339 = int_to_ptr.vmem [resolvable:$true] %s338
          %344 = dma.hbm_to_vmem [thread:$0]  %s5, 4096, %s339, [#allocation12], 256, 256, 16
        $region32: #{tpu_custom_call.1} parent=11 // pred_fallthru
          _
        // Predicated region
        $region33: #{tpu_custom_call.1} parent=11 // pred_check
          %p345 = pneg %p178
        $region34: #{tpu_custom_call.1} parent=11 // pred_check_branch
          %347 = sbr.rel (%p345) target = $region36
        $region35: #{tpu_custom_call.1} parent=11 // pred_region
          %s349 = ssub.s32 2048, 2048
          %350 = vsyncadd [#allocation12], %s349
          %s351 = sshll.u32 [#allocation13], 4
          %s352 = int_to_ptr.vmem [resolvable:$true] %s351
          %357 = dma.hbm_to_vmem [thread:$0]  %s6, 2048, %s352, [#allocation12], 64, 64, 4
        $region36: #{tpu_custom_call.1} parent=11 // pred_fallthru
          _
        // Predicated region
        $region37: #{tpu_custom_call.1} parent=11 // pred_check
          %p358 = pneg %p199
        $region38: #{tpu_custom_call.1} parent=11 // pred_check_branch
          %360 = sbr.rel (%p358) target = $region40
        $region39: #{tpu_custom_call.1} parent=11 // pred_region
          %s362 = ssub.s32 4096, 4096
          %363 = vsyncadd [#allocation15], %s362
          %s364 = sshll.u32 [#allocation14], 4
          %s365 = int_to_ptr.vmem [resolvable:$true] %s364
          %370 = dma.hbm_to_vmem [thread:$0]  %s7, 4096, %s365, [#allocation15], 256, 256, 16
        $region40: #{tpu_custom_call.1} parent=11 // pred_fallthru
          _
        // Predicated region
        $region41: #{tpu_custom_call.1} parent=11 // pred_check
          %p371 = pneg %p220
        $region42: #{tpu_custom_call.1} parent=11 // pred_check_branch
          %373 = sbr.rel (%p371) target = $region44
        $region43: #{tpu_custom_call.1} parent=11 // pred_region
          _
        $region44: #{tpu_custom_call.1} parent=11 // pred_fallthru
          _
        // Predicated region
        $region45: #{tpu_custom_call.1} parent=11 // pred_check
          %p374 = pneg %p241
        $region46: #{tpu_custom_call.1} parent=11 // pred_check_branch
          %376 = sbr.rel (%p374) target = $region48
        $region47: #{tpu_custom_call.1} parent=11 // pred_region
          %s378 = ssub.s32 4096, 4096
          %379 = vsyncadd [#allocation15], %s378
          %s380 = sshll.u32 [#allocation16], 4
          %s381 = int_to_ptr.vmem [resolvable:$true] %s380
          %386 = dma.hbm_to_vmem [thread:$0]  %s9, 4096, %s381, [#allocation15], 64, 64, 4
        $region48: #{tpu_custom_call.1} parent=11 // pred_fallthru
          _
      $region12: #{tpu_custom_call.1} parent=5 // pred_fallthru
        _
      %p387 = scmp.lt.s32.totalorder %s26, 2
      // Predicated region
      $region49: #{tpu_custom_call.1} parent=5 // pred_check
        %p388 = pneg %p387
      $region50: #{tpu_custom_call.1} parent=5 // pred_check_branch
        %390 = sbr.rel (%p388) target = $region52
      $region51: #{tpu_custom_call.1} parent=5 // pred_region
        // Predicated region
        $region53: #{tpu_custom_call.1} parent=51 // pred_check
          %p391 = pneg %p46
        $region54: #{tpu_custom_call.1} parent=51 // pred_check_branch
          %393 = sbr.rel (%p391) target = $region56
        $region55: #{tpu_custom_call.1} parent=51 // pred_region
          %s394 = sand.u32 %s36, 1
          %s395 = scalar_lea.sflag [#allocation3], %s394
          %s396 = sand.u32 %s36, 1
          %s397 = smul.addr %s396, 128
          %s398 = scalar_lea.vmem [#allocation2], %s397
          %s399 = smul.u32 16, %s26
          %s401 = ssub.s32 2048, 2048
          %402 = vsyncadd %s395, %s401
          %s403 = smul.addr %s399, 128
          %s404 = scalar_lea.hbm %s0, %s403
          %s405 = sshll.u32 %s398, 4
          %s406 = int_to_ptr.vmem [resolvable:$true] %s405
          %411 = dma.hbm_to_vmem [thread:$0]  %s404, 2048, %s406, %s395, 128, 128, 8
        $region56: #{tpu_custom_call.1} parent=51 // pred_fallthru
          _
      $region52: #{tpu_custom_call.1} parent=5 // pred_fallthru
        _
      %p412 = scmp.le.s32.totalorder 1, %s26
      %p413 = scmp.lt.s32.totalorder %s26, 3
      %p414 = pnand %p412, %p413
      %p415 = pneg %p414
      // Predicated region
      $region57: #{tpu_custom_call.1} parent=5 // pred_check
        _
      $region58: #{tpu_custom_call.1} parent=5 // pred_check_branch
        %417 = sbr.rel (%p414) target = $region60
      $region59: #{tpu_custom_call.1} parent=5 // pred_region
        %s418 = ssub.s32 %s26, 1
        %s419 = sand.u32 %s39, 1
        %s420 = scalar_lea.sflag [#allocation3], %s419
        %s421 = sand.u32 %s39, 1
        %s422 = smul.addr %s421, 128
        %s423 = scalar_lea.vmem [#allocation2], %s422
        // Predicated region
        $region61: #{tpu_custom_call.1} parent=59 // pred_check
          %p424 = pneg %p52
        $region62: #{tpu_custom_call.1} parent=59 // pred_check_branch
          %426 = sbr.rel (%p424) target = $region64
        $region63: #{tpu_custom_call.1} parent=59 // pred_region
          %427 = dma.done %s420, 2048
        $region64: #{tpu_custom_call.1} parent=59 // pred_fallthru
          _
        // Predicated region
        $region65: #{tpu_custom_call.1} parent=59 // pred_check
          %p428 = pneg %p73
        $region66: #{tpu_custom_call.1} parent=59 // pred_check_branch
          %430 = sbr.rel (%p428) target = $region68
        $region67: #{tpu_custom_call.1} parent=59 // pred_region
          %431 = dma.done [#allocation6], 128
        $region68: #{tpu_custom_call.1} parent=59 // pred_fallthru
          _
        // Predicated region
        $region69: #{tpu_custom_call.1} parent=59 // pred_check
          %p432 = pneg %p94
        $region70: #{tpu_custom_call.1} parent=59 // pred_check_branch
          %434 = sbr.rel (%p432) target = $region72
        $region71: #{tpu_custom_call.1} parent=59 // pred_region
          %435 = dma.done [#allocation6], 4096
        $region72: #{tpu_custom_call.1} parent=59 // pred_fallthru
          _
        // Predicated region
        $region73: #{tpu_custom_call.1} parent=59 // pred_check
          %p436 = pneg %p115
        $region74: #{tpu_custom_call.1} parent=59 // pred_check_branch
          %438 = sbr.rel (%p436) target = $region76
        $region75: #{tpu_custom_call.1} parent=59 // pred_region
          %439 = dma.done [#allocation9], 2048
        $region76: #{tpu_custom_call.1} parent=59 // pred_fallthru
          _
        // Predicated region
        $region77: #{tpu_custom_call.1} parent=59 // pred_check
          %p440 = pneg %p136
        $region78: #{tpu_custom_call.1} parent=59 // pred_check_branch
          %442 = sbr.rel (%p440) target = $region80
        $region79: #{tpu_custom_call.1} parent=59 // pred_region
          %443 = dma.done [#allocation9], 2048
        $region80: #{tpu_custom_call.1} parent=59 // pred_fallthru
          _
        // Predicated region
        $region81: #{tpu_custom_call.1} parent=59 // pred_check
          %p444 = pneg %p157
        $region82: #{tpu_custom_call.1} parent=59 // pred_check_branch
          %446 = sbr.rel (%p444) target = $region84
        $region83: #{tpu_custom_call.1} parent=59 // pred_region
          %447 = dma.done [#allocation12], 4096
        $region84: #{tpu_custom_call.1} parent=59 // pred_fallthru
          _
        // Predicated region
        $region85: #{tpu_custom_call.1} parent=59 // pred_check
          %p448 = pneg %p178
        $region86: #{tpu_custom_call.1} parent=59 // pred_check_branch
          %450 = sbr.rel (%p448) target = $region88
        $region87: #{tpu_custom_call.1} parent=59 // pred_region
          %451 = dma.done [#allocation12], 2048
        $region88: #{tpu_custom_call.1} parent=59 // pred_fallthru
          _
        // Predicated region
        $region89: #{tpu_custom_call.1} parent=59 // pred_check
          %p452 = pneg %p199
        $region90: #{tpu_custom_call.1} parent=59 // pred_check_branch
          %454 = sbr.rel (%p452) target = $region92
        $region91: #{tpu_custom_call.1} parent=59 // pred_region
          %455 = dma.done [#allocation15], 4096
        $region92: #{tpu_custom_call.1} parent=59 // pred_fallthru
          _
        // Predicated region
        $region93: #{tpu_custom_call.1} parent=59 // pred_check
          %p456 = pneg %p241
        $region94: #{tpu_custom_call.1} parent=59 // pred_check_branch
          %458 = sbr.rel (%p456) target = $region96
        $region95: #{tpu_custom_call.1} parent=59 // pred_region
          %459 = dma.done [#allocation15], 4096
        $region96: #{tpu_custom_call.1} parent=59 // pred_fallthru
          _
        %s460 = sand.u32 %s39, 1
        %s461 = scalar_lea.sflag [#allocation3], %s460
        %s462 = sand.u32 %s39, 1
        %s463 = smul.addr %s462, 128
        %s464 = scalar_lea.vmem [#allocation2], %s463
        %p465 = pneg %p52
        %p466 = pneg %p49
        %p467 = pneg %p73
        %p468 = pneg %p70
        %p469 = pneg %p94
        %p470 = pneg %p91
        %p471 = pneg %p115
        %p472 = pneg %p112
        %p473 = pneg %p136
        %p474 = pneg %p133
        %p475 = pneg %p157
        %p476 = pneg %p154
        %p477 = pneg %p178
        %p478 = pneg %p175
        %p479 = pneg %p199
        %p480 = pneg %p196
        %p481 = pneg %p220
        %p482 = pneg %p217
        %p483 = pneg %p241
        %p484 = pneg %p238
        %p485 = pneg %p267
        %p486 = pneg %p264
        %s487 = sand.u32 %s254, 1
        %s488 = scalar_lea.sflag [#allocation4], %s487
        %s489 = sand.u32 %s254, 1
        %s490 = smul.addr %s489, 128
        %s491 = scalar_lea.vmem [#allocation17], %s490
        %s492 = smul.u32 16, %s31
        %s493 = smul.u32 16, %s31
        %v495 = vld [vmem:[%s423] sm:$0xff]
        %v496 = vld [vmem:[%s423 + $0x8] sm:$0xff]
        %v497 = vld [vmem:[%s423 + $0x10] sm:$0xff]
        %v498 = vld [vmem:[%s423 + $0x18] sm:$0xff]
        %v499 = vld [vmem:[%s423 + $0x20] sm:$0xff]
        %v500 = vld [vmem:[%s423 + $0x28] sm:$0xff]
        %v501 = vld [vmem:[%s423 + $0x30] sm:$0xff]
        %v502 = vld [vmem:[%s423 + $0x38] sm:$0xff]
        %v503 = vld [vmem:[%s423 + $0x40] sm:$0xff]
        %v504 = vld [vmem:[%s423 + $0x48] sm:$0xff]
        %v505 = vld [vmem:[%s423 + $0x50] sm:$0xff]
        %v506 = vld [vmem:[%s423 + $0x58] sm:$0xff]
        %v507 = vld [vmem:[%s423 + $0x60] sm:$0xff]
        %v508 = vld [vmem:[%s423 + $0x68] sm:$0xff]
        %v509 = vld [vmem:[%s423 + $0x70] sm:$0xff]
        %v510 = vld [vmem:[%s423 + $0x78] sm:$0xff]
        %v511 = vld [vmem:[#allocation7] sm:$0xff]
        %v512 = vld [vmem:[#allocation7 + $0x8] sm:$0xff]
        %v513 = vld [vmem:[#allocation7 + $0x10] sm:$0xff]
        %v514 = vld [vmem:[#allocation7 + $0x18] sm:$0xff]
        %v515 = vld [vmem:[#allocation7 + $0x20] sm:$0xff]
        %v516 = vld [vmem:[#allocation7 + $0x28] sm:$0xff]
        %v517 = vld [vmem:[#allocation7 + $0x30] sm:$0xff]
        %v518 = vld [vmem:[#allocation7 + $0x38] sm:$0xff]
        %v519 = vld [vmem:[#allocation7 + $0x40] sm:$0xff]
        %v520 = vld [vmem:[#allocation7 + $0x48] sm:$0xff]
        %v521 = vld [vmem:[#allocation7 + $0x50] sm:$0xff]
        %v522 = vld [vmem:[#allocation7 + $0x58] sm:$0xff]
        %v523 = vld [vmem:[#allocation7 + $0x60] sm:$0xff]
        %v524 = vld [vmem:[#allocation7 + $0x68] sm:$0xff]
        %v525 = vld [vmem:[#allocation7 + $0x70] sm:$0xff]
        %v526 = vld [vmem:[#allocation7 + $0x78] sm:$0xff]
        %v527 = vld [vmem:[#allocation7 + $0x80] sm:$0xff]
        %v528 = vld [vmem:[#allocation7 + $0x88] sm:$0xff]
        %v529 = vld [vmem:[#allocation7 + $0x90] sm:$0xff]
        %v530 = vld [vmem:[#allocation7 + $0x98] sm:$0xff]
        %v531 = vld [vmem:[#allocation7 + $0xa0] sm:$0xff]
        %v532 = vld [vmem:[#allocation7 + $0xa8] sm:$0xff]
        %v533 = vld [vmem:[#allocation7 + $0xb0] sm:$0xff]
        %v534 = vld [vmem:[#allocation7 + $0xb8] sm:$0xff]
        %v535 = vld [vmem:[#allocation7 + $0xc0] sm:$0xff]
        %v536 = vld [vmem:[#allocation7 + $0xc8] sm:$0xff]
        %v537 = vld [vmem:[#allocation7 + $0xd0] sm:$0xff]
        %v538 = vld [vmem:[#allocation7 + $0xd8] sm:$0xff]
        %v539 = vld [vmem:[#allocation7 + $0xe0] sm:$0xff]
        %v540 = vld [vmem:[#allocation7 + $0xe8] sm:$0xff]
        %v541 = vld [vmem:[#allocation7 + $0xf0] sm:$0xff]
        %v542 = vld [vmem:[#allocation7 + $0xf8] sm:$0xff]
        %v543 = vld [vmem:[#allocation5] sm:$0x1]
        %v544 = vld [vmem:[#allocation5 + $0x1] sm:$0x1]
        %v545 = vld [vmem:[#allocation5 + $0x2] sm:$0x1]
        %v546 = vld [vmem:[#allocation5 + $0x3] sm:$0x1]
        %v547 = vld [vmem:[#allocation5 + $0x4] sm:$0x1]
        %v548 = vmul.f32 %v495, %v495
        %v549 = vmul.f32 %v496, %v496
        %v550 = vmul.f32 %v497, %v497
        %v551 = vmul.f32 %v498, %v498
        %v552 = vmul.f32 %v499, %v499
        %v553 = vmul.f32 %v500, %v500
        %v554 = vmul.f32 %v501, %v501
        %v555 = vmul.f32 %v502, %v502
        %v556 = vmul.f32 %v503, %v503
        %v557 = vmul.f32 %v504, %v504
        %v558 = vmul.f32 %v505, %v505
        %v559 = vmul.f32 %v506, %v506
        %v560 = vmul.f32 %v507, %v507
        %v561 = vmul.f32 %v508, %v508
        %v562 = vmul.f32 %v509, %v509
        %v563 = vmul.f32 %v510, %v510
        %v564 = vpack.c.bf16 %v496, %v495
        %v565 = vpack.c.bf16 %v549, %v548
        %v566 = vpack.c.bf16 %v498, %v497
        %v567 = vpack.c.bf16 %v551, %v550
        %v568 = vpack.c.bf16 %v500, %v499
        %v569 = vpack.c.bf16 %v553, %v552
        %v570 = vpack.c.bf16 %v502, %v501
        %v571 = vpack.c.bf16 %v555, %v554
        %v572 = vpack.c.bf16 %v504, %v503
        %v573 = vpack.c.bf16 %v557, %v556
        %v574 = vpack.c.bf16 %v506, %v505
        %v575 = vpack.c.bf16 %v559, %v558
        %v576 = vpack.c.bf16 %v508, %v507
        %v577 = vpack.c.bf16 %v561, %v560
        %v578 = vpack.c.bf16 %v510, %v509
        %v579 = vpack.c.bf16 %v563, %v562
        %v612 = vunpack.c.l.b16 %v511
        %v613 = vunpack.c.h.b16 %v511
        %v614 = vunpack.c.l.b16 %v512
        %v615 = vunpack.c.h.b16 %v512
        %v616 = vunpack.c.l.b16 %v513
        %v617 = vunpack.c.h.b16 %v513
        %v618 = vunpack.c.l.b16 %v514
        %v619 = vunpack.c.h.b16 %v514
        %v620 = vunpack.c.l.b16 %v515
        %v621 = vunpack.c.h.b16 %v515
        %v622 = vunpack.c.l.b16 %v516
        %v623 = vunpack.c.h.b16 %v516
        %v624 = vunpack.c.l.b16 %v517
        %v625 = vunpack.c.h.b16 %v517
        %v626 = vunpack.c.l.b16 %v518
        %v627 = vunpack.c.h.b16 %v518
        %v628 = vunpack.c.l.b16 %v519
        %v629 = vunpack.c.h.b16 %v519
        %v630 = vunpack.c.l.b16 %v520
        %v631 = vunpack.c.h.b16 %v520
        %v632 = vunpack.c.l.b16 %v521
        %v633 = vunpack.c.h.b16 %v521
        %v634 = vunpack.c.l.b16 %v522
        %v635 = vunpack.c.h.b16 %v522
        %v636 = vunpack.c.l.b16 %v523
        %v637 = vunpack.c.h.b16 %v523
        %v638 = vunpack.c.l.b16 %v524
        %v639 = vunpack.c.h.b16 %v524
        %v640 = vunpack.c.l.b16 %v525
        %v641 = vunpack.c.h.b16 %v525
        %v642 = vunpack.c.l.b16 %v526
        %v643 = vunpack.c.h.b16 %v526
        %v644 = vunpack.c.l.b16 %v527
        %v645 = vunpack.c.h.b16 %v527
        %v646 = vunpack.c.l.b16 %v528
        %v647 = vunpack.c.h.b16 %v528
        %v648 = vunpack.c.l.b16 %v529
        %v649 = vunpack.c.h.b16 %v529
        %v650 = vunpack.c.l.b16 %v530
        %v651 = vunpack.c.h.b16 %v530
        %v652 = vunpack.c.l.b16 %v531
        %v653 = vunpack.c.h.b16 %v531
        %v654 = vunpack.c.l.b16 %v532
        %v655 = vunpack.c.h.b16 %v532
        %v656 = vunpack.c.l.b16 %v533
        %v657 = vunpack.c.h.b16 %v533
        %v658 = vunpack.c.l.b16 %v534
        %v659 = vunpack.c.h.b16 %v534
        %v660 = vunpack.c.l.b16 %v535
        %v661 = vunpack.c.h.b16 %v535
        %v662 = vunpack.c.l.b16 %v536
        %v663 = vunpack.c.h.b16 %v536
        %v664 = vunpack.c.l.b16 %v537
        %v665 = vunpack.c.h.b16 %v537
        %v666 = vunpack.c.l.b16 %v538
        %v667 = vunpack.c.h.b16 %v538
        %v668 = vunpack.c.l.b16 %v539
        %v669 = vunpack.c.h.b16 %v539
        %v670 = vunpack.c.l.b16 %v540
        %v671 = vunpack.c.h.b16 %v540
        %v672 = vunpack.c.l.b16 %v541
        %v673 = vunpack.c.h.b16 %v541
        %v674 = vunpack.c.l.b16 %v542
        %v675 = vunpack.c.h.b16 %v542
        %v676 = vpack.c.b16 %v614, %v612
        %v677 = vpack.c.b16 %v615, %v613
        %v678 = vpack.c.b16 %v618, %v616
        %v679 = vpack.c.b16 %v619, %v617
        %v680 = vpack.c.b16 %v622, %v620
        %v681 = vpack.c.b16 %v623, %v621
        %v682 = vpack.c.b16 %v626, %v624
        %v683 = vpack.c.b16 %v627, %v625
        %v684 = vpack.c.b16 %v630, %v628
        %v685 = vpack.c.b16 %v631, %v629
        %v686 = vpack.c.b16 %v634, %v632
        %v687 = vpack.c.b16 %v635, %v633
        %v688 = vpack.c.b16 %v638, %v636
        %v689 = vpack.c.b16 %v639, %v637
        %v690 = vpack.c.b16 %v642, %v640
        %v691 = vpack.c.b16 %v643, %v641
        %v692 = vpack.c.b16 %v646, %v644
        %v693 = vpack.c.b16 %v647, %v645
        %v694 = vpack.c.b16 %v650, %v648
        %v695 = vpack.c.b16 %v651, %v649
        %v696 = vpack.c.b16 %v654, %v652
        %v697 = vpack.c.b16 %v655, %v653
        %v698 = vpack.c.b16 %v658, %v656
        %v699 = vpack.c.b16 %v659, %v657
        %v700 = vpack.c.b16 %v662, %v660
        %v701 = vpack.c.b16 %v663, %v661
        %v702 = vpack.c.b16 %v666, %v664
        %v703 = vpack.c.b16 %v667, %v665
        %v704 = vpack.c.b16 %v670, %v668
        %v705 = vpack.c.b16 %v671, %v669
        %v706 = vpack.c.b16 %v674, %v672
        %v707 = vpack.c.b16 %v675, %v673
        %740 = vmatprep.subr.bf16.mxu0 %v677
        %741 = vmatpush1.bf16.msra.mxu0 %v676
        %742 = vmatprep.subr.bf16.mxu0 %v679
        %743 = vmatpush1.bf16.msra.mxu0 %v678
        %744 = vmatprep.subr.bf16.mxu0 %v681
        %745 = vmatpush1.bf16.msra.mxu0 %v680
        %746 = vmatprep.subr.bf16.mxu0 %v683
        %747 = vmatpush1.bf16.msra.mxu0 %v682
        %748 = vmatprep.subr.bf16.mxu0 %v685
        %749 = vmatpush1.bf16.msra.mxu0 %v684
        %750 = vmatprep.subr.bf16.mxu0 %v687
        %751 = vmatpush1.bf16.msra.mxu0 %v686
        %752 = vmatprep.subr.bf16.mxu0 %v689
        %753 = vmatpush1.bf16.msra.mxu0 %v688
        %754 = vmatprep.subr.bf16.mxu0 %v691
        %755 = vmatpush1.bf16.msra.mxu0 %v690
        %756 = vmatprep.subr.bf16.mxu0 %v693
        %757 = vmatpush1.bf16.msra.mxu0 %v692
        %758 = vmatprep.subr.bf16.mxu0 %v695
        %759 = vmatpush1.bf16.msra.mxu0 %v694
        %760 = vmatprep.subr.bf16.mxu0 %v697
        %761 = vmatpush1.bf16.msra.mxu0 %v696
        %762 = vmatprep.subr.bf16.mxu0 %v699
        %763 = vmatpush1.bf16.msra.mxu0 %v698
        %764 = vmatprep.subr.bf16.mxu0 %v701
        %765 = vmatpush1.bf16.msra.mxu0 %v700
        %766 = vmatprep.subr.bf16.mxu0 %v703
        %767 = vmatpush1.bf16.msra.mxu0 %v702
        %768 = vmatprep.subr.bf16.mxu0 %v705
        %769 = vmatpush1.bf16.msra.mxu0 %v704
        %770 = vmatprep.subr.bf16.mxu0 %v707
        %771 = vmatpush1.bf16.msra.mxu0 %v706
        %772 = vmatprep.mubr.bf16.mxu0 %v565
        %773 = vmatmul.mubr.bf16.gmra.mrb[0].mxu0 %v564
        %v774 = vpop.f32.mrb[0].mxu0
        %v775 = vadd.f32 0.0, %v774
        %v776 = vpop.f32.mrb[0].mxu0
        %v777 = vadd.f32 0.0, %v776
        %v778 = vpop.f32.mrb[0].mxu0
        %v779 = vadd.f32 0.0, %v778
        %v780 = vpop.f32.mrb[0].mxu0
        %v781 = vadd.f32 0.0, %v780
        %782 = vmatprep.mubr.bf16.mxu0 %v567
        %783 = vmatmul.mubr.bf16.gmra.mrb[0].mxu0 %v566
        %v784 = vpop.f32.mrb[0].mxu0
        %v785 = vadd.f32 0.0, %v784
        %v786 = vpop.f32.mrb[0].mxu0
        %v787 = vadd.f32 0.0, %v786
        %v788 = vpop.f32.mrb[0].mxu0
        %v789 = vadd.f32 0.0, %v788
        %v790 = vpop.f32.mrb[0].mxu0
        %v791 = vadd.f32 0.0, %v790
        %792 = vmatprep.mubr.bf16.mxu0 %v569
        %793 = vmatmul.mubr.bf16.gmra.mrb[0].mxu0 %v568
        %v794 = vpop.f32.mrb[0].mxu0
        %v795 = vadd.f32 0.0, %v794
        %v796 = vpop.f32.mrb[0].mxu0
        %v797 = vadd.f32 0.0, %v796
        %v798 = vpop.f32.mrb[0].mxu0
        %v799 = vadd.f32 0.0, %v798
        %v800 = vpop.f32.mrb[0].mxu0
        %v801 = vadd.f32 0.0, %v800
        %802 = vmatprep.mubr.bf16.mxu0 %v571
        %803 = vmatmul.mubr.bf16.gmra.mrb[0].mxu0 %v570
        %v804 = vpop.f32.mrb[0].mxu0
        %v805 = vadd.f32 0.0, %v804
        %v806 = vpop.f32.mrb[0].mxu0
        %v807 = vadd.f32 0.0, %v806
        %v808 = vpop.f32.mrb[0].mxu0
        %v809 = vadd.f32 0.0, %v808
        %v810 = vpop.f32.mrb[0].mxu0
        %v811 = vadd.f32 0.0, %v810
        %812 = vmatprep.mubr.bf16.mxu0 %v573
        %813 = vmatmul.mubr.bf16.gmra.mrb[0].mxu0 %v572
        %v814 = vpop.f32.mrb[0].mxu0
        %v815 = vadd.f32 0.0, %v814
        %v816 = vpop.f32.mrb[0].mxu0
        %v817 = vadd.f32 0.0, %v816
        %v818 = vpop.f32.mrb[0].mxu0
        %v819 = vadd.f32 0.0, %v818
        %v820 = vpop.f32.mrb[0].mxu0
        %v821 = vadd.f32 0.0, %v820
        %822 = vmatprep.mubr.bf16.mxu0 %v575
        %823 = vmatmul.mubr.bf16.gmra.mrb[0].mxu0 %v574
        %v824 = vpop.f32.mrb[0].mxu0
        %v825 = vadd.f32 0.0, %v824
        %v826 = vpop.f32.mrb[0].mxu0
        %v827 = vadd.f32 0.0, %v826
        %v828 = vpop.f32.mrb[0].mxu0
        %v829 = vadd.f32 0.0, %v828
        %v830 = vpop.f32.mrb[0].mxu0
        %v831 = vadd.f32 0.0, %v830
        %832 = vmatprep.mubr.bf16.mxu0 %v577
        %833 = vmatmul.mubr.bf16.gmra.mrb[0].mxu0 %v576
        %v834 = vpop.f32.mrb[0].mxu0
        %v835 = vadd.f32 0.0, %v834
        %v836 = vpop.f32.mrb[0].mxu0
        %v837 = vadd.f32 0.0, %v836
        %v838 = vpop.f32.mrb[0].mxu0
        %v839 = vadd.f32 0.0, %v838
        %v840 = vpop.f32.mrb[0].mxu0
        %v841 = vadd.f32 0.0, %v840
        %842 = vmatprep.mubr.bf16.mxu0 %v579
        %843 = vmatmul.mubr.bf16.gmra.mrb[0].mxu0 %v578
        %v844 = vpop.f32.mrb[0].mxu0
        %v845 = vadd.f32 0.0, %v844
        %v846 = vpop.f32.mrb[0].mxu0
        %v847 = vadd.f32 0.0, %v846
        %v848 = vpop.f32.mrb[0].mxu0
        %v849 = vadd.f32 0.0, %v848
        %v850 = vpop.f32.mrb[0].mxu0
        %v851 = vadd.f32 0.0, %v850
        %852 = vdwg.mxu0
        %v853 = vmul.f32 %v775, %v775
        %v854 = vmul.f32 %v779, %v779
        %v855 = vmul.f32 %v785, %v785
        %v856 = vmul.f32 %v789, %v789
        %v857 = vmul.f32 %v795, %v795
        %v858 = vmul.f32 %v799, %v799
        %v859 = vmul.f32 %v805, %v805
        %v860 = vmul.f32 %v809, %v809
        %v861 = vmul.f32 %v815, %v815
        %v862 = vmul.f32 %v819, %v819
        %v863 = vmul.f32 %v825, %v825
        %v864 = vmul.f32 %v829, %v829
        %v865 = vmul.f32 %v835, %v835
        %v866 = vmul.f32 %v839, %v839
        %v867 = vmul.f32 %v845, %v845
        %v868 = vmul.f32 %v849, %v849
        %v869 = vsub.f32 %v777, %v853
        %v870 = vsub.f32 %v781, %v854
        %v871 = vsub.f32 %v787, %v855
        %v872 = vsub.f32 %v791, %v856
        %v873 = vsub.f32 %v797, %v857
        %v874 = vsub.f32 %v801, %v858
        %v875 = vsub.f32 %v807, %v859
        %v876 = vsub.f32 %v811, %v860
        %v877 = vsub.f32 %v817, %v861
        %v878 = vsub.f32 %v821, %v862
        %v879 = vsub.f32 %v827, %v863
        %v880 = vsub.f32 %v831, %v864
        %v881 = vsub.f32 %v837, %v865
        %v882 = vsub.f32 %v841, %v866
        %v883 = vsub.f32 %v847, %v867
        %v884 = vsub.f32 %v851, %v868
        %v885 = vsub.f32 %v495, %v775
        %v886 = vsub.f32 %v496, %v779
        %v887 = vsub.f32 %v497, %v785
        %v888 = vsub.f32 %v498, %v789
        %v889 = vsub.f32 %v499, %v795
        %v890 = vsub.f32 %v500, %v799
        %v891 = vsub.f32 %v501, %v805
        %v892 = vsub.f32 %v502, %v809
        %v893 = vsub.f32 %v503, %v815
        %v894 = vsub.f32 %v504, %v819
        %v895 = vsub.f32 %v505, %v825
        %v896 = vsub.f32 %v506, %v829
        %v897 = vsub.f32 %v507, %v835
        %v898 = vsub.f32 %v508, %v839
        %v899 = vsub.f32 %v509, %v845
        %v900 = vsub.f32 %v510, %v849
        %v901 = vadd.f32 %v869, 1e-05
        %v902 = vadd.f32 %v870, 1e-05
        %v903 = vadd.f32 %v871, 1e-05
        %v904 = vadd.f32 %v872, 1e-05
        %v905 = vadd.f32 %v873, 1e-05
        %v906 = vadd.f32 %v874, 1e-05
        %v907 = vadd.f32 %v875, 1e-05
        %v908 = vadd.f32 %v876, 1e-05
        %v909 = vadd.f32 %v877, 1e-05
        %v910 = vadd.f32 %v878, 1e-05
        %v911 = vadd.f32 %v879, 1e-05
        %v912 = vadd.f32 %v880, 1e-05
        %v913 = vadd.f32 %v881, 1e-05
        %v914 = vadd.f32 %v882, 1e-05
        %v915 = vadd.f32 %v883, 1e-05
        %v916 = vadd.f32 %v884, 1e-05
        %v917 = vrsqrt.pop %v901
        %v918 = vrsqrt.pop %v902
        %v919 = vrsqrt.pop %v903
        %v920 = vrsqrt.pop %v904
        %v921 = vrsqrt.pop %v905
        %v922 = vrsqrt.pop %v906
        %v923 = vrsqrt.pop %v907
        %v924 = vrsqrt.pop %v908
        %v925 = vrsqrt.pop %v909
        %v926 = vrsqrt.pop %v910
        %v927 = vrsqrt.pop %v911
        %v928 = vrsqrt.pop %v912
        %v929 = vrsqrt.pop %v913
        %v930 = vrsqrt.pop %v914
        %v931 = vrsqrt.pop %v915
        %v932 = vrsqrt.pop %v916
        %v933 = vmul.f32 %v885, %v917
        %v934 = vmul.f32 %v886, %v918
        %v935 = vmul.f32 %v887, %v919
        %v936 = vmul.f32 %v888, %v920
        %v937 = vmul.f32 %v889, %v921
        %v938 = vmul.f32 %v890, %v922
        %v939 = vmul.f32 %v891, %v923
        %v940 = vmul.f32 %v892, %v924
        %v941 = vmul.f32 %v893, %v925
        %v942 = vmul.f32 %v894, %v926
        %v943 = vmul.f32 %v895, %v927
        %v944 = vmul.f32 %v896, %v928
        %v945 = vmul.f32 %v897, %v929
        %v946 = vmul.f32 %v898, %v930
        %v947 = vmul.f32 %v899, %v931
        %v948 = vmul.f32 %v900, %v932
        %v949 = vlaneseq
        %v950 = vshrl.u32 %v949, 7
        %v951 = vsub.s32 0, %v950
        %v952 = vrot.slane %v543, %v951
        %v953 = vmul.f32 %v933, %v952
        %v954 = vmul.f32 %v934, %v952
        %v955 = vmul.f32 %v935, %v952
        %v956 = vmul.f32 %v936, %v952
        %v957 = vmul.f32 %v937, %v952
        %v958 = vmul.f32 %v938, %v952
        %v959 = vmul.f32 %v939, %v952
        %v960 = vmul.f32 %v940, %v952
        %v961 = vmul.f32 %v941, %v952
        %v962 = vmul.f32 %v942, %v952
        %v963 = vmul.f32 %v943, %v952
        %v964 = vmul.f32 %v944, %v952
        %v965 = vmul.f32 %v945, %v952
        %v966 = vmul.f32 %v946, %v952
        %v967 = vmul.f32 %v947, %v952
        %v968 = vmul.f32 %v948, %v952
        %v969 = vlaneseq
        %v970 = vshrl.u32 %v969, 7
        %v971 = vsub.s32 0, %v970
        %v972 = vrot.slane %v544, %v971
        %v973 = vadd.f32 %v953, %v972
        %v974 = vadd.f32 %v954, %v972
        %v975 = vadd.f32 %v955, %v972
        %v976 = vadd.f32 %v956, %v972
        %v977 = vadd.f32 %v957, %v972
        %v978 = vadd.f32 %v958, %v972
        %v979 = vadd.f32 %v959, %v972
        %v980 = vadd.f32 %v960, %v972
        %v981 = vadd.f32 %v961, %v972
        %v982 = vadd.f32 %v962, %v972
        %v983 = vadd.f32 %v963, %v972
        %v984 = vadd.f32 %v964, %v972
        %v985 = vadd.f32 %v965, %v972
        %v986 = vadd.f32 %v966, %v972
        %v987 = vadd.f32 %v967, %v972
        %v988 = vadd.f32 %v968, %v972
        %v989 = vpack.c.bf16 %v974, %v973
        %v990 = vpack.c.bf16 %v976, %v975
        %v991 = vpack.c.bf16 %v978, %v977
        %v992 = vpack.c.bf16 %v980, %v979
        %v993 = vpack.c.bf16 %v982, %v981
        %v994 = vpack.c.bf16 %v984, %v983
        %v995 = vpack.c.bf16 %v986, %v985
        %v996 = vpack.c.bf16 %v988, %v987
        %v997 = vld [vmem:[#allocation8] sm:$0xff]
        %v998 = vld [vmem:[#allocation8 + $0x8] sm:$0xff]
        %v999 = vld [vmem:[#allocation8 + $0x10] sm:$0xff]
        %v1000 = vld [vmem:[#allocation8 + $0x18] sm:$0xff]
        %v1001 = vld [vmem:[#allocation8 + $0x20] sm:$0xff]
        %v1002 = vld [vmem:[#allocation8 + $0x28] sm:$0xff]
        %v1003 = vld [vmem:[#allocation8 + $0x30] sm:$0xff]
        %v1004 = vld [vmem:[#allocation8 + $0x38] sm:$0xff]
        %v1005 = vld [vmem:[#allocation8 + $0x40] sm:$0xff]
        %v1006 = vld [vmem:[#allocation8 + $0x48] sm:$0xff]
        %v1007 = vld [vmem:[#allocation8 + $0x50] sm:$0xff]
        %v1008 = vld [vmem:[#allocation8 + $0x58] sm:$0xff]
        %v1009 = vld [vmem:[#allocation8 + $0x60] sm:$0xff]
        %v1010 = vld [vmem:[#allocation8 + $0x68] sm:$0xff]
        %v1011 = vld [vmem:[#allocation8 + $0x70] sm:$0xff]
        %v1012 = vld [vmem:[#allocation8 + $0x78] sm:$0xff]
        %v1029 = vunpack.c.l.b16 %v997
        %v1030 = vunpack.c.h.b16 %v997
        %v1031 = vunpack.c.l.b16 %v998
        %v1032 = vunpack.c.h.b16 %v998
        %v1033 = vunpack.c.l.b16 %v999
        %v1034 = vunpack.c.h.b16 %v999
        %v1035 = vunpack.c.l.b16 %v1000
        %v1036 = vunpack.c.h.b16 %v1000
        %v1037 = vunpack.c.l.b16 %v1001
        %v1038 = vunpack.c.h.b16 %v1001
        %v1039 = vunpack.c.l.b16 %v1002
        %v1040 = vunpack.c.h.b16 %v1002
        %v1041 = vunpack.c.l.b16 %v1003
        %v1042 = vunpack.c.h.b16 %v1003
        %v1043 = vunpack.c.l.b16 %v1004
        %v1044 = vunpack.c.h.b16 %v1004
        %v1045 = vunpack.c.l.b16 %v1005
        %v1046 = vunpack.c.h.b16 %v1005
        %v1047 = vunpack.c.l.b16 %v1006
        %v1048 = vunpack.c.h.b16 %v1006
        %v1049 = vunpack.c.l.b16 %v1007
        %v1050 = vunpack.c.h.b16 %v1007
        %v1051 = vunpack.c.l.b16 %v1008
        %v1052 = vunpack.c.h.b16 %v1008
        %v1053 = vunpack.c.l.b16 %v1009
        %v1054 = vunpack.c.h.b16 %v1009
        %v1055 = vunpack.c.l.b16 %v1010
        %v1056 = vunpack.c.h.b16 %v1010
        %v1057 = vunpack.c.l.b16 %v1011
        %v1058 = vunpack.c.h.b16 %v1011
        %v1059 = vunpack.c.l.b16 %v1012
        %v1060 = vunpack.c.h.b16 %v1012
        %v1061 = vpack.c.b16 %v1031, %v1029
        %v1062 = vpack.c.b16 %v1032, %v1030
        %v1063 = vpack.c.b16 %v1035, %v1033
        %v1064 = vpack.c.b16 %v1036, %v1034
        %v1065 = vpack.c.b16 %v1039, %v1037
        %v1066 = vpack.c.b16 %v1040, %v1038
        %v1067 = vpack.c.b16 %v1043, %v1041
        %v1068 = vpack.c.b16 %v1044, %v1042
        %v1069 = vpack.c.b16 %v1047, %v1045
        %v1070 = vpack.c.b16 %v1048, %v1046
        %v1071 = vpack.c.b16 %v1051, %v1049
        %v1072 = vpack.c.b16 %v1052, %v1050
        %v1073 = vpack.c.b16 %v1055, %v1053
        %v1074 = vpack.c.b16 %v1056, %v1054
        %v1075 = vpack.c.b16 %v1059, %v1057
        %v1076 = vpack.c.b16 %v1060, %v1058
        %1093 = vmatprep.subr.bf16.mxu0 %v1062
        %1094 = vmatpush1.bf16.msra.mxu0 %v1061
        %1095 = vmatprep.subr.bf16.mxu0 %v1064
        %1096 = vmatpush1.bf16.msra.mxu0 %v1063
        %1097 = vmatprep.subr.bf16.mxu0 %v1066
        %1098 = vmatpush1.bf16.msra.mxu0 %v1065
        %1099 = vmatprep.subr.bf16.mxu0 %v1068
        %1100 = vmatpush1.bf16.msra.mxu0 %v1067
        %1101 = vmatprep.subr.bf16.mxu0 %v1070
        %1102 = vmatpush1.bf16.msra.mxu0 %v1069
        %1103 = vmatprep.subr.bf16.mxu0 %v1072
        %1104 = vmatpush1.bf16.msra.mxu0 %v1071
        %1105 = vmatprep.subr.bf16.mxu0 %v1074
        %1106 = vmatpush1.bf16.msra.mxu0 %v1073
        %1107 = vmatprep.subr.bf16.mxu0 %v1076
        %1108 = vmatpush1.bf16.msra.mxu0 %v1075
        %1109 = vmatprep.subr.bf16.mxu0 0
        %1110 = vmatpush1.bf16.msra.mxu0 0
        %1111 = vmatprep.subr.bf16.mxu0 0
        %1112 = vmatpush1.bf16.msra.mxu0 0
        %1113 = vmatprep.subr.bf16.mxu0 0
        %1114 = vmatpush1.bf16.msra.mxu0 0
        %1115 = vmatprep.subr.bf16.mxu0 0
        %1116 = vmatpush1.bf16.msra.mxu0 0
        %1117 = vmatprep.subr.bf16.mxu0 0
        %1118 = vmatpush1.bf16.msra.mxu0 0
        %1119 = vmatprep.subr.bf16.mxu0 0
        %1120 = vmatpush1.bf16.msra.mxu0 0
        %1121 = vmatprep.subr.bf16.mxu0 0
        %1122 = vmatpush1.bf16.msra.mxu0 0
        %1123 = vmatprep.subr.bf16.mxu0 0
        %1124 = vmatpush1.bf16.msra.mxu0 0
        %1125 = vmatprep.mubr.bf16.mxu0 0
        %1126 = vmatmul.mubr.bf16.gmra.mrb[0].mxu0 %v989
        %v1127 = vpop.f32.mrb[0].mxu0
        %v1128 = vadd.f32 0.0, %v1127
        %v1129 = vpop.f32.mrb[0].mxu0
        %v1130 = vadd.f32 0.0, %v1129
        %v1131 = vpop.f32.mrb[0].mxu0
        %v1132 = vadd.f32 0.0, %v1131
        %v1133 = vpop.f32.mrb[0].mxu0
        %v1134 = vadd.f32 0.0, %v1133
        %1135 = vmatprep.mubr.bf16.mxu0 0
        %1136 = vmatmul.mubr.bf16.gmra.mrb[0].mxu0 %v990
        %v1137 = vpop.f32.mrb[0].mxu0
        %v1138 = vadd.f32 0.0, %v1137
        %v1139 = vpop.f32.mrb[0].mxu0
        %v1140 = vadd.f32 0.0, %v1139
        %v1141 = vpop.f32.mrb[0].mxu0
        %v1142 = vadd.f32 0.0, %v1141
        %v1143 = vpop.f32.mrb[0].mxu0
        %v1144 = vadd.f32 0.0, %v1143
        %1145 = vmatprep.mubr.bf16.mxu0 0
        %1146 = vmatmul.mubr.bf16.gmra.mrb[0].mxu0 %v991
        %v1147 = vpop.f32.mrb[0].mxu0
        %v1148 = vadd.f32 0.0, %v1147
        %v1149 = vpop.f32.mrb[0].mxu0
        %v1150 = vadd.f32 0.0, %v1149
        %v1151 = vpop.f32.mrb[0].mxu0
        %v1152 = vadd.f32 0.0, %v1151
        %v1153 = vpop.f32.mrb[0].mxu0
        %v1154 = vadd.f32 0.0, %v1153
        %1155 = vmatprep.mubr.bf16.mxu0 0
        %1156 = vmatmul.mubr.bf16.gmra.mrb[0].mxu0 %v992
        %v1157 = vpop.f32.mrb[0].mxu0
        %v1158 = vadd.f32 0.0, %v1157
        %v1159 = vpop.f32.mrb[0].mxu0
        %v1160 = vadd.f32 0.0, %v1159
        %v1161 = vpop.f32.mrb[0].mxu0
        %v1162 = vadd.f32 0.0, %v1161
        %v1163 = vpop.f32.mrb[0].mxu0
        %v1164 = vadd.f32 0.0, %v1163
        %1165 = vmatprep.mubr.bf16.mxu0 0
        %1166 = vmatmul.mubr.bf16.gmra.mrb[0].mxu0 %v993
        %v1167 = vpop.f32.mrb[0].mxu0
        %v1168 = vadd.f32 0.0, %v1167
        %v1169 = vpop.f32.mrb[0].mxu0
        %v1170 = vadd.f32 0.0, %v1169
        %v1171 = vpop.f32.mrb[0].mxu0
        %v1172 = vadd.f32 0.0, %v1171
        %v1173 = vpop.f32.mrb[0].mxu0
        %v1174 = vadd.f32 0.0, %v1173
        %1175 = vmatprep.mubr.bf16.mxu0 0
        %1176 = vmatmul.mubr.bf16.gmra.mrb[0].mxu0 %v994
        %v1177 = vpop.f32.mrb[0].mxu0
        %v1178 = vadd.f32 0.0, %v1177
        %v1179 = vpop.f32.mrb[0].mxu0
        %v1180 = vadd.f32 0.0, %v1179
        %v1181 = vpop.f32.mrb[0].mxu0
        %v1182 = vadd.f32 0.0, %v1181
        %v1183 = vpop.f32.mrb[0].mxu0
        %v1184 = vadd.f32 0.0, %v1183
        %1185 = vmatprep.mubr.bf16.mxu0 0
        %1186 = vmatmul.mubr.bf16.gmra.mrb[0].mxu0 %v995
        %v1187 = vpop.f32.mrb[0].mxu0
        %v1188 = vadd.f32 0.0, %v1187
        %v1189 = vpop.f32.mrb[0].mxu0
        %v1190 = vadd.f32 0.0, %v1189
        %v1191 = vpop.f32.mrb[0].mxu0
        %v1192 = vadd.f32 0.0, %v1191
        %v1193 = vpop.f32.mrb[0].mxu0
        %v1194 = vadd.f32 0.0, %v1193
        %1195 = vmatprep.mubr.bf16.mxu0 0
        %1196 = vmatmul.mubr.bf16.gmra.mrb[0].mxu0 %v996
        %v1197 = vpop.f32.mrb[0].mxu0
        %v1198 = vadd.f32 0.0, %v1197
        %v1199 = vpop.f32.mrb[0].mxu0
        %v1200 = vadd.f32 0.0, %v1199
        %v1201 = vpop.f32.mrb[0].mxu0
        %v1202 = vadd.f32 0.0, %v1201
        %v1203 = vpop.f32.mrb[0].mxu0
        %v1204 = vadd.f32 0.0, %v1203
        %1205 = vdwg.mxu0
        %v1206 = vpack.c.bf16 %v1132, %v1128
        %v1207 = vpack.c.bf16 %v1134, %v1130
        %v1208 = vpack.c.bf16 %v1142, %v1138
        %v1209 = vpack.c.bf16 %v1144, %v1140
        %v1210 = vpack.c.bf16 %v1152, %v1148
        %v1211 = vpack.c.bf16 %v1154, %v1150
        %v1212 = vpack.c.bf16 %v1162, %v1158
        %v1213 = vpack.c.bf16 %v1164, %v1160
        %v1214 = vpack.c.bf16 %v1172, %v1168
        %v1215 = vpack.c.bf16 %v1174, %v1170
        %v1216 = vpack.c.bf16 %v1182, %v1178
        %v1217 = vpack.c.bf16 %v1184, %v1180
        %v1218 = vpack.c.bf16 %v1192, %v1188
        %v1219 = vpack.c.bf16 %v1194, %v1190
        %v1220 = vpack.c.bf16 %v1202, %v1198
        %v1221 = vpack.c.bf16 %v1204, %v1200
        %v1222 = vld [vmem:[#allocation10] sm:$0xf]
        %v1223 = vld [vmem:[#allocation10 + $0x4] sm:$0xf]
        %v1224 = vld [vmem:[#allocation10 + $0x8] sm:$0xf]
        %v1225 = vld [vmem:[#allocation10 + $0xc] sm:$0xf]
        %v1226 = vld [vmem:[#allocation10 + $0x10] sm:$0xf]
        %v1227 = vld [vmem:[#allocation10 + $0x14] sm:$0xf]
        %v1228 = vld [vmem:[#allocation10 + $0x18] sm:$0xf]
        %v1229 = vld [vmem:[#allocation10 + $0x1c] sm:$0xf]
        %v1230 = vld [vmem:[#allocation10 + $0x20] sm:$0xf]
        %v1231 = vld [vmem:[#allocation10 + $0x24] sm:$0xf]
        %v1232 = vld [vmem:[#allocation10 + $0x28] sm:$0xf]
        %v1233 = vld [vmem:[#allocation10 + $0x2c] sm:$0xf]
        %v1234 = vld [vmem:[#allocation10 + $0x30] sm:$0xf]
        %v1235 = vld [vmem:[#allocation10 + $0x34] sm:$0xf]
        %v1236 = vld [vmem:[#allocation10 + $0x38] sm:$0xf]
        %v1237 = vld [vmem:[#allocation10 + $0x3c] sm:$0xf]
        %v1238 = vld [vmem:[#allocation10 + $0x40] sm:$0xf]
        %v1239 = vld [vmem:[#allocation10 + $0x44] sm:$0xf]
        %v1240 = vld [vmem:[#allocation10 + $0x48] sm:$0xf]
        %v1241 = vld [vmem:[#allocation10 + $0x4c] sm:$0xf]
        %v1242 = vld [vmem:[#allocation10 + $0x50] sm:$0xf]
        %v1243 = vld [vmem:[#allocation10 + $0x54] sm:$0xf]
        %v1244 = vld [vmem:[#allocation10 + $0x58] sm:$0xf]
        %v1245 = vld [vmem:[#allocation10 + $0x5c] sm:$0xf]
        %v1246 = vld [vmem:[#allocation10 + $0x60] sm:$0xf]
        %v1247 = vld [vmem:[#allocation10 + $0x64] sm:$0xf]
        %v1248 = vld [vmem:[#allocation10 + $0x68] sm:$0xf]
        %v1249 = vld [vmem:[#allocation10 + $0x6c] sm:$0xf]
        %v1250 = vld [vmem:[#allocation10 + $0x70] sm:$0xf]
        %v1251 = vld [vmem:[#allocation10 + $0x74] sm:$0xf]
        %v1252 = vld [vmem:[#allocation10 + $0x78] sm:$0xf]
        %v1253 = vld [vmem:[#allocation10 + $0x7c] sm:$0xf]
        %v1270 = vunpack.c.l.b16 %v1222
        %v1271 = vunpack.c.l.b16 %v1223
        %v1272 = vunpack.c.l.b16 %v1224
        %v1273 = vunpack.c.l.b16 %v1225
        %v1274 = vunpack.c.l.b16 %v1226
        %v1275 = vunpack.c.l.b16 %v1227
        %v1276 = vunpack.c.l.b16 %v1228
        %v1277 = vunpack.c.l.b16 %v1229
        %v1278 = vunpack.c.l.b16 %v1230
        %v1279 = vunpack.c.l.b16 %v1231
        %v1280 = vunpack.c.l.b16 %v1232
        %v1281 = vunpack.c.l.b16 %v1233
        %v1282 = vunpack.c.l.b16 %v1234
        %v1283 = vunpack.c.l.b16 %v1235
        %v1284 = vunpack.c.l.b16 %v1236
        %v1285 = vunpack.c.l.b16 %v1237
        %v1286 = vpack.c.b16 %v1271, %v1270
        %v1287 = vpack.c.b16 %v1273, %v1272
        %v1288 = vpack.c.b16 %v1275, %v1274
        %v1289 = vpack.c.b16 %v1277, %v1276
        %v1290 = vpack.c.b16 %v1279, %v1278
        %v1291 = vpack.c.b16 %v1281, %v1280
        %v1292 = vpack.c.b16 %v1283, %v1282
        %v1293 = vpack.c.b16 %v1285, %v1284
        %1302 = vmatprep.subr.bf16.mxu0 %v1207
        %1303 = vmatpush1.bf16.msra.mxu0 %v1206
        %1304 = vmatprep.subr.bf16.mxu0 %v1209
        %1305 = vmatpush1.bf16.msra.mxu0 %v1208
        %1306 = vmatprep.subr.bf16.mxu0 %v1211
        %1307 = vmatpush1.bf16.msra.mxu0 %v1210
        %1308 = vmatprep.subr.bf16.mxu0 %v1213
        %1309 = vmatpush1.bf16.msra.mxu0 %v1212
        %1310 = vmatprep.subr.bf16.mxu0 %v1215
        %1311 = vmatpush1.bf16.msra.mxu0 %v1214
        %1312 = vmatprep.subr.bf16.mxu0 %v1217
        %1313 = vmatpush1.bf16.msra.mxu0 %v1216
        %1314 = vmatprep.subr.bf16.mxu0 %v1219
        %1315 = vmatpush1.bf16.msra.mxu0 %v1218
        %1316 = vmatprep.subr.bf16.mxu0 %v1221
        %1317 = vmatpush1.bf16.msra.mxu0 %v1220
        %1318 = vmatprep.subr.bf16.mxu0 0
        %1319 = vmatpush1.bf16.msra.mxu0 0
        %1320 = vmatprep.subr.bf16.mxu0 0
        %1321 = vmatpush1.bf16.msra.mxu0 0
        %1322 = vmatprep.subr.bf16.mxu0 0
        %1323 = vmatpush1.bf16.msra.mxu0 0
        %1324 = vmatprep.subr.bf16.mxu0 0
        %1325 = vmatpush1.bf16.msra.mxu0 0
        %1326 = vmatprep.subr.bf16.mxu0 0
        %1327 = vmatpush1.bf16.msra.mxu0 0
        %1328 = vmatprep.subr.bf16.mxu0 0
        %1329 = vmatpush1.bf16.msra.mxu0 0
        %1330 = vmatprep.subr.bf16.mxu0 0
        %1331 = vmatpush1.bf16.msra.mxu0 0
        %1332 = vmatprep.subr.bf16.mxu0 0
        %1333 = vmatpush1.bf16.msra.mxu0 0
        %1334 = vmatprep.mubr.bf16.mxu0 0
        %1335 = vmatmul.mubr.bf16.gmra.mrb[0].mxu0 %v1286
        %v1336 = vpop.f32.mrb[0].mxu0
        %v1337 = vadd.f32 0.0, %v1336
        %v1338 = vpop.f32.mrb[0].mxu0
        %v1339 = vadd.f32 0.0, %v1338
        %v1340 = vpop.f32.mrb[0].mxu0
        %v1341 = vadd.f32 0.0, %v1340
        %v1342 = vpop.f32.mrb[0].mxu0
        %v1343 = vadd.f32 0.0, %v1342
        %1344 = vmatprep.mubr.bf16.mxu0 0
        %1345 = vmatmul.mubr.bf16.gmra.mrb[0].mxu0 %v1287
        %v1346 = vpop.f32.mrb[0].mxu0
        %v1347 = vadd.f32 0.0, %v1346
        %v1348 = vpop.f32.mrb[0].mxu0
        %v1349 = vadd.f32 0.0, %v1348
        %v1350 = vpop.f32.mrb[0].mxu0
        %v1351 = vadd.f32 0.0, %v1350
        %v1352 = vpop.f32.mrb[0].mxu0
        %v1353 = vadd.f32 0.0, %v1352
        %1354 = vmatprep.mubr.bf16.mxu0 0
        %1355 = vmatmul.mubr.bf16.gmra.mrb[0].mxu0 %v1288
        %v1356 = vpop.f32.mrb[0].mxu0
        %v1357 = vadd.f32 0.0, %v1356
        %v1358 = vpop.f32.mrb[0].mxu0
        %v1359 = vadd.f32 0.0, %v1358
        %v1360 = vpop.f32.mrb[0].mxu0
        %v1361 = vadd.f32 0.0, %v1360
        %v1362 = vpop.f32.mrb[0].mxu0
        %v1363 = vadd.f32 0.0, %v1362
        %1364 = vmatprep.mubr.bf16.mxu0 0
        %1365 = vmatmul.mubr.bf16.gmra.mrb[0].mxu0 %v1289
        %v1366 = vpop.f32.mrb[0].mxu0
        %v1367 = vadd.f32 0.0, %v1366
        %v1368 = vpop.f32.mrb[0].mxu0
        %v1369 = vadd.f32 0.0, %v1368
        %v1370 = vpop.f32.mrb[0].mxu0
        %v1371 = vadd.f32 0.0, %v1370
        %v1372 = vpop.f32.mrb[0].mxu0
        %v1373 = vadd.f32 0.0, %v1372
        %1374 = vmatprep.mubr.bf16.mxu0 0
        %1375 = vmatmul.mubr.bf16.gmra.mrb[0].mxu0 %v1290
        %v1376 = vpop.f32.mrb[0].mxu0
        %v1377 = vadd.f32 0.0, %v1376
        %v1378 = vpop.f32.mrb[0].mxu0
        %v1379 = vadd.f32 0.0, %v1378
        %v1380 = vpop.f32.mrb[0].mxu0
        %v1381 = vadd.f32 0.0, %v1380
        %v1382 = vpop.f32.mrb[0].mxu0
        %v1383 = vadd.f32 0.0, %v1382
        %1384 = vmatprep.mubr.bf16.mxu0 0
        %1385 = vmatmul.mubr.bf16.gmra.mrb[0].mxu0 %v1291
        %v1386 = vpop.f32.mrb[0].mxu0
        %v1387 = vadd.f32 0.0, %v1386
        %v1388 = vpop.f32.mrb[0].mxu0
        %v1389 = vadd.f32 0.0, %v1388
        %v1390 = vpop.f32.mrb[0].mxu0
        %v1391 = vadd.f32 0.0, %v1390
        %v1392 = vpop.f32.mrb[0].mxu0
        %v1393 = vadd.f32 0.0, %v1392
        %1394 = vmatprep.mubr.bf16.mxu0 0
        %1395 = vmatmul.mubr.bf16.gmra.mrb[0].mxu0 %v1292
        %v1396 = vpop.f32.mrb[0].mxu0
        %v1397 = vadd.f32 0.0, %v1396
        %v1398 = vpop.f32.mrb[0].mxu0
        %v1399 = vadd.f32 0.0, %v1398
        %v1400 = vpop.f32.mrb[0].mxu0
        %v1401 = vadd.f32 0.0, %v1400
        %v1402 = vpop.f32.mrb[0].mxu0
        %v1403 = vadd.f32 0.0, %v1402
        %1404 = vmatprep.mubr.bf16.mxu0 0
        %1405 = vmatmul.mubr.bf16.gmra.mrb[0].mxu0 %v1293
        %v1406 = vpop.f32.mrb[0].mxu0
        %v1407 = vadd.f32 0.0, %v1406
        %v1408 = vpop.f32.mrb[0].mxu0
        %v1409 = vadd.f32 0.0, %v1408
        %v1410 = vpop.f32.mrb[0].mxu0
        %v1411 = vadd.f32 0.0, %v1410
        %v1412 = vpop.f32.mrb[0].mxu0
        %v1413 = vadd.f32 0.0, %v1412
        %1414 = vdwg.mxu0
        %v1431 = vunpack.c.l.b16 %v1238
        %v1432 = vunpack.c.l.b16 %v1239
        %v1433 = vunpack.c.l.b16 %v1240
        %v1434 = vunpack.c.l.b16 %v1241
        %v1435 = vunpack.c.l.b16 %v1242
        %v1436 = vunpack.c.l.b16 %v1243
        %v1437 = vunpack.c.l.b16 %v1244
        %v1438 = vunpack.c.l.b16 %v1245
        %v1439 = vunpack.c.l.b16 %v1246
        %v1440 = vunpack.c.l.b16 %v1247
        %v1441 = vunpack.c.l.b16 %v1248
        %v1442 = vunpack.c.l.b16 %v1249
        %v1443 = vunpack.c.l.b16 %v1250
        %v1444 = vunpack.c.l.b16 %v1251
        %v1445 = vunpack.c.l.b16 %v1252
        %v1446 = vunpack.c.l.b16 %v1253
        %v1447 = vpack.c.b16 %v1432, %v1431
        %v1448 = vpack.c.b16 %v1434, %v1433
        %v1449 = vpack.c.b16 %v1436, %v1435
        %v1450 = vpack.c.b16 %v1438, %v1437
        %v1451 = vpack.c.b16 %v1440, %v1439
        %v1452 = vpack.c.b16 %v1442, %v1441
        %v1453 = vpack.c.b16 %v1444, %v1443
        %v1454 = vpack.c.b16 %v1446, %v1445
        %1463 = vmatprep.subr.bf16.mxu0 %v1207
        %1464 = vmatpush1.bf16.msra.mxu0 %v1206
        %1465 = vmatprep.subr.bf16.mxu0 %v1209
        %1466 = vmatpush1.bf16.msra.mxu0 %v1208
        %1467 = vmatprep.subr.bf16.mxu0 %v1211
        %1468 = vmatpush1.bf16.msra.mxu0 %v1210
        %1469 = vmatprep.subr.bf16.mxu0 %v1213
        %1470 = vmatpush1.bf16.msra.mxu0 %v1212
        %1471 = vmatprep.subr.bf16.mxu0 %v1215
        %1472 = vmatpush1.bf16.msra.mxu0 %v1214
        %1473 = vmatprep.subr.bf16.mxu0 %v1217
        %1474 = vmatpush1.bf16.msra.mxu0 %v1216
        %1475 = vmatprep.subr.bf16.mxu0 %v1219
        %1476 = vmatpush1.bf16.msra.mxu0 %v1218
        %1477 = vmatprep.subr.bf16.mxu0 %v1221
        %1478 = vmatpush1.bf16.msra.mxu0 %v1220
        %1479 = vmatprep.subr.bf16.mxu0 0
        %1480 = vmatpush1.bf16.msra.mxu0 0
        %1481 = vmatprep.subr.bf16.mxu0 0
        %1482 = vmatpush1.bf16.msra.mxu0 0
        %1483 = vmatprep.subr.bf16.mxu0 0
        %1484 = vmatpush1.bf16.msra.mxu0 0
        %1485 = vmatprep.subr.bf16.mxu0 0
        %1486 = vmatpush1.bf16.msra.mxu0 0
        %1487 = vmatprep.subr.bf16.mxu0 0
        %1488 = vmatpush1.bf16.msra.mxu0 0
        %1489 = vmatprep.subr.bf16.mxu0 0
        %1490 = vmatpush1.bf16.msra.mxu0 0
        %1491 = vmatprep.subr.bf16.mxu0 0
        %1492 = vmatpush1.bf16.msra.mxu0 0
        %1493 = vmatprep.subr.bf16.mxu0 0
        %1494 = vmatpush1.bf16.msra.mxu0 0
        %1495 = vmatprep.mubr.bf16.mxu0 0
        %1496 = vmatmul.mubr.bf16.gmra.mrb[0].mxu0 %v1447
        %v1497 = vpop.f32.mrb[0].mxu0
        %v1498 = vadd.f32 0.0, %v1497
        %v1499 = vpop.f32.mrb[0].mxu0
        %v1500 = vadd.f32 0.0, %v1499
        %v1501 = vpop.f32.mrb[0].mxu0
        %v1502 = vadd.f32 0.0, %v1501
        %v1503 = vpop.f32.mrb[0].mxu0
        %v1504 = vadd.f32 0.0, %v1503
        %1505 = vmatprep.mubr.bf16.mxu0 0
        %1506 = vmatmul.mubr.bf16.gmra.mrb[0].mxu0 %v1448
        %v1507 = vpop.f32.mrb[0].mxu0
        %v1508 = vadd.f32 0.0, %v1507
        %v1509 = vpop.f32.mrb[0].mxu0
        %v1510 = vadd.f32 0.0, %v1509
        %v1511 = vpop.f32.mrb[0].mxu0
        %v1512 = vadd.f32 0.0, %v1511
        %v1513 = vpop.f32.mrb[0].mxu0
        %v1514 = vadd.f32 0.0, %v1513
        %1515 = vmatprep.mubr.bf16.mxu0 0
        %1516 = vmatmul.mubr.bf16.gmra.mrb[0].mxu0 %v1449
        %v1517 = vpop.f32.mrb[0].mxu0
        %v1518 = vadd.f32 0.0, %v1517
        %v1519 = vpop.f32.mrb[0].mxu0
        %v1520 = vadd.f32 0.0, %v1519
        %v1521 = vpop.f32.mrb[0].mxu0
        %v1522 = vadd.f32 0.0, %v1521
        %v1523 = vpop.f32.mrb[0].mxu0
        %v1524 = vadd.f32 0.0, %v1523
        %1525 = vmatprep.mubr.bf16.mxu0 0
        %1526 = vmatmul.mubr.bf16.gmra.mrb[0].mxu0 %v1450
        %v1527 = vpop.f32.mrb[0].mxu0
        %v1528 = vadd.f32 0.0, %v1527
        %v1529 = vpop.f32.mrb[0].mxu0
        %v1530 = vadd.f32 0.0, %v1529
        %v1531 = vpop.f32.mrb[0].mxu0
        %v1532 = vadd.f32 0.0, %v1531
        %v1533 = vpop.f32.mrb[0].mxu0
        %v1534 = vadd.f32 0.0, %v1533
        %1535 = vmatprep.mubr.bf16.mxu0 0
        %1536 = vmatmul.mubr.bf16.gmra.mrb[0].mxu0 %v1451
        %v1537 = vpop.f32.mrb[0].mxu0
        %v1538 = vadd.f32 0.0, %v1537
        %v1539 = vpop.f32.mrb[0].mxu0
        %v1540 = vadd.f32 0.0, %v1539
        %v1541 = vpop.f32.mrb[0].mxu0
        %v1542 = vadd.f32 0.0, %v1541
        %v1543 = vpop.f32.mrb[0].mxu0
        %v1544 = vadd.f32 0.0, %v1543
        %1545 = vmatprep.mubr.bf16.mxu0 0
        %1546 = vmatmul.mubr.bf16.gmra.mrb[0].mxu0 %v1452
        %v1547 = vpop.f32.mrb[0].mxu0
        %v1548 = vadd.f32 0.0, %v1547
        %v1549 = vpop.f32.mrb[0].mxu0
        %v1550 = vadd.f32 0.0, %v1549
        %v1551 = vpop.f32.mrb[0].mxu0
        %v1552 = vadd.f32 0.0, %v1551
        %v1553 = vpop.f32.mrb[0].mxu0
        %v1554 = vadd.f32 0.0, %v1553
        %1555 = vmatprep.mubr.bf16.mxu0 0
        %1556 = vmatmul.mubr.bf16.gmra.mrb[0].mxu0 %v1453
        %v1557 = vpop.f32.mrb[0].mxu0
        %v1558 = vadd.f32 0.0, %v1557
        %v1559 = vpop.f32.mrb[0].mxu0
        %v1560 = vadd.f32 0.0, %v1559
        %v1561 = vpop.f32.mrb[0].mxu0
        %v1562 = vadd.f32 0.0, %v1561
        %v1563 = vpop.f32.mrb[0].mxu0
        %v1564 = vadd.f32 0.0, %v1563
        %1565 = vmatprep.mubr.bf16.mxu0 0
        %1566 = vmatmul.mubr.bf16.gmra.mrb[0].mxu0 %v1454
        %v1567 = vpop.f32.mrb[0].mxu0
        %v1568 = vadd.f32 0.0, %v1567
        %v1569 = vpop.f32.mrb[0].mxu0
        %v1570 = vadd.f32 0.0, %v1569
        %v1571 = vpop.f32.mrb[0].mxu0
        %v1572 = vadd.f32 0.0, %v1571
        %v1573 = vpop.f32.mrb[0].mxu0
        %v1574 = vadd.f32 0.0, %v1573
        %1575 = vdwg.mxu0
        %v1576 = vsub.f32 %v1337, %v1500
        %v1577 = vsub.f32 %v1341, %v1504
        %v1578 = vsub.f32 %v1347, %v1510
        %v1579 = vsub.f32 %v1351, %v1514
        %v1580 = vsub.f32 %v1357, %v1520
        %v1581 = vsub.f32 %v1361, %v1524
        %v1582 = vsub.f32 %v1367, %v1530
        %v1583 = vsub.f32 %v1371, %v1534
        %v1584 = vsub.f32 %v1377, %v1540
        %v1585 = vsub.f32 %v1381, %v1544
        %v1586 = vsub.f32 %v1387, %v1550
        %v1587 = vsub.f32 %v1391, %v1554
        %v1588 = vsub.f32 %v1397, %v1560
        %v1589 = vsub.f32 %v1401, %v1564
        %v1590 = vsub.f32 %v1407, %v1570
        %v1591 = vsub.f32 %v1411, %v1574
        %v1592 = vadd.f32 %v1339, %v1498
        %v1593 = vadd.f32 %v1343, %v1502
        %v1594 = vadd.f32 %v1349, %v1508
        %v1595 = vadd.f32 %v1353, %v1512
        %v1596 = vadd.f32 %v1359, %v1518
        %v1597 = vadd.f32 %v1363, %v1522
        %v1598 = vadd.f32 %v1369, %v1528
        %v1599 = vadd.f32 %v1373, %v1532
        %v1600 = vadd.f32 %v1379, %v1538
        %v1601 = vadd.f32 %v1383, %v1542
        %v1602 = vadd.f32 %v1389, %v1548
        %v1603 = vadd.f32 %v1393, %v1552
        %v1604 = vadd.f32 %v1399, %v1558
        %v1605 = vadd.f32 %v1403, %v1562
        %v1606 = vadd.f32 %v1409, %v1568
        %v1607 = vadd.f32 %v1413, %v1572
        %v1608 = vld [vmem:[#allocation11] sm:$0xff]
        %v1609 = vld [vmem:[#allocation11 + $0x10] sm:$0xff]
        %v1610 = vld [vmem:[#allocation11 + $0x20] sm:$0xff]
        %v1611 = vld [vmem:[#allocation11 + $0x30] sm:$0xff]
        %v1612 = vld [vmem:[#allocation11 + $0x40] sm:$0xff]
        %v1613 = vld [vmem:[#allocation11 + $0x50] sm:$0xff]
        %v1614 = vld [vmem:[#allocation11 + $0x60] sm:$0xff]
        %v1615 = vld [vmem:[#allocation11 + $0x70] sm:$0xff]
        %v1616 = vld [vmem:[#allocation11 + $0x80] sm:$0xff]
        %v1617 = vld [vmem:[#allocation11 + $0x90] sm:$0xff]
        %v1618 = vld [vmem:[#allocation11 + $0xa0] sm:$0xff]
        %v1619 = vld [vmem:[#allocation11 + $0xb0] sm:$0xff]
        %v1620 = vld [vmem:[#allocation11 + $0xc0] sm:$0xff]
        %v1621 = vld [vmem:[#allocation11 + $0xd0] sm:$0xff]
        %v1622 = vld [vmem:[#allocation11 + $0xe0] sm:$0xff]
        %v1623 = vld [vmem:[#allocation11 + $0xf0] sm:$0xff]
        %v1624 = vld [vmem:[#allocation11 + $0x8] sm:$0xff]
        %v1625 = vld [vmem:[#allocation11 + $0x18] sm:$0xff]
        %v1626 = vld [vmem:[#allocation11 + $0x28] sm:$0xff]
        %v1627 = vld [vmem:[#allocation11 + $0x38] sm:$0xff]
        %v1628 = vld [vmem:[#allocation11 + $0x48] sm:$0xff]
        %v1629 = vld [vmem:[#allocation11 + $0x58] sm:$0xff]
        %v1630 = vld [vmem:[#allocation11 + $0x68] sm:$0xff]
        %v1631 = vld [vmem:[#allocation11 + $0x78] sm:$0xff]
        %v1632 = vld [vmem:[#allocation11 + $0x88] sm:$0xff]
        %v1633 = vld [vmem:[#allocation11 + $0x98] sm:$0xff]
        %v1634 = vld [vmem:[#allocation11 + $0xa8] sm:$0xff]
        %v1635 = vld [vmem:[#allocation11 + $0xb8] sm:$0xff]
        %v1636 = vld [vmem:[#allocation11 + $0xc8] sm:$0xff]
        %v1637 = vld [vmem:[#allocation11 + $0xd8] sm:$0xff]
        %v1638 = vld [vmem:[#allocation11 + $0xe8] sm:$0xff]
        %v1639 = vld [vmem:[#allocation11 + $0xf8] sm:$0xff]
        %v1640 = vmul.f32 %v1576, %v1608
        %v1641 = vmul.f32 %v1577, %v1609
        %v1642 = vmul.f32 %v1578, %v1610
        %v1643 = vmul.f32 %v1579, %v1611
        %v1644 = vmul.f32 %v1580, %v1612
        %v1645 = vmul.f32 %v1581, %v1613
        %v1646 = vmul.f32 %v1582, %v1614
        %v1647 = vmul.f32 %v1583, %v1615
        %v1648 = vmul.f32 %v1584, %v1616
        %v1649 = vmul.f32 %v1585, %v1617
        %v1650 = vmul.f32 %v1586, %v1618
        %v1651 = vmul.f32 %v1587, %v1619
        %v1652 = vmul.f32 %v1588, %v1620
        %v1653 = vmul.f32 %v1589, %v1621
        %v1654 = vmul.f32 %v1590, %v1622
        %v1655 = vmul.f32 %v1591, %v1623
        %v1656 = vmul.f32 %v1592, %v1624
        %v1657 = vmul.f32 %v1593, %v1625
        %v1658 = vmul.f32 %v1594, %v1626
        %v1659 = vmul.f32 %v1595, %v1627
        %v1660 = vmul.f32 %v1596, %v1628
        %v1661 = vmul.f32 %v1597, %v1629
        %v1662 = vmul.f32 %v1598, %v1630
        %v1663 = vmul.f32 %v1599, %v1631
        %v1664 = vmul.f32 %v1600, %v1632
        %v1665 = vmul.f32 %v1601, %v1633
        %v1666 = vmul.f32 %v1602, %v1634
        %v1667 = vmul.f32 %v1603, %v1635
        %v1668 = vmul.f32 %v1604, %v1636
        %v1669 = vmul.f32 %v1605, %v1637
        %v1670 = vmul.f32 %v1606, %v1638
        %v1671 = vmul.f32 %v1607, %v1639
        %v1672 = vsub.f32 %v1640, %v1656
        %v1673 = vsub.f32 %v1641, %v1657
        %v1674 = vsub.f32 %v1642, %v1658
        %v1675 = vsub.f32 %v1643, %v1659
        %v1676 = vsub.f32 %v1644, %v1660
        %v1677 = vsub.f32 %v1645, %v1661
        %v1678 = vsub.f32 %v1646, %v1662
        %v1679 = vsub.f32 %v1647, %v1663
        %v1680 = vsub.f32 %v1648, %v1664
        %v1681 = vsub.f32 %v1649, %v1665
        %v1682 = vsub.f32 %v1650, %v1666
        %v1683 = vsub.f32 %v1651, %v1667
        %v1684 = vsub.f32 %v1652, %v1668
        %v1685 = vsub.f32 %v1653, %v1669
        %v1686 = vsub.f32 %v1654, %v1670
        %v1687 = vsub.f32 %v1655, %v1671
        %v1688 = vmul.f32 %v1576, %v1624
        %v1689 = vmul.f32 %v1577, %v1625
        %v1690 = vmul.f32 %v1578, %v1626
        %v1691 = vmul.f32 %v1579, %v1627
        %v1692 = vmul.f32 %v1580, %v1628
        %v1693 = vmul.f32 %v1581, %v1629
        %v1694 = vmul.f32 %v1582, %v1630
        %v1695 = vmul.f32 %v1583, %v1631
        %v1696 = vmul.f32 %v1584, %v1632
        %v1697 = vmul.f32 %v1585, %v1633
        %v1698 = vmul.f32 %v1586, %v1634
        %v1699 = vmul.f32 %v1587, %v1635
        %v1700 = vmul.f32 %v1588, %v1636
        %v1701 = vmul.f32 %v1589, %v1637
        %v1702 = vmul.f32 %v1590, %v1638
        %v1703 = vmul.f32 %v1591, %v1639
        %v1704 = vmul.f32 %v1592, %v1608
        %v1705 = vmul.f32 %v1593, %v1609
        %v1706 = vmul.f32 %v1594, %v1610
        %v1707 = vmul.f32 %v1595, %v1611
        %v1708 = vmul.f32 %v1596, %v1612
        %v1709 = vmul.f32 %v1597, %v1613
        %v1710 = vmul.f32 %v1598, %v1614
        %v1711 = vmul.f32 %v1599, %v1615
        %v1712 = vmul.f32 %v1600, %v1616
        %v1713 = vmul.f32 %v1601, %v1617
        %v1714 = vmul.f32 %v1602, %v1618
        %v1715 = vmul.f32 %v1603, %v1619
        %v1716 = vmul.f32 %v1604, %v1620
        %v1717 = vmul.f32 %v1605, %v1621
        %v1718 = vmul.f32 %v1606, %v1622
        %v1719 = vmul.f32 %v1607, %v1623
        %v1720 = vadd.f32 %v1688, %v1704
        %v1721 = vadd.f32 %v1689, %v1705
        %v1722 = vadd.f32 %v1690, %v1706
        %v1723 = vadd.f32 %v1691, %v1707
        %v1724 = vadd.f32 %v1692, %v1708
        %v1725 = vadd.f32 %v1693, %v1709
        %v1726 = vadd.f32 %v1694, %v1710
        %v1727 = vadd.f32 %v1695, %v1711
        %v1728 = vadd.f32 %v1696, %v1712
        %v1729 = vadd.f32 %v1697, %v1713
        %v1730 = vadd.f32 %v1698, %v1714
        %v1731 = vadd.f32 %v1699, %v1715
        %v1732 = vadd.f32 %v1700, %v1716
        %v1733 = vadd.f32 %v1701, %v1717
        %v1734 = vadd.f32 %v1702, %v1718
        %v1735 = vadd.f32 %v1703, %v1719
        %v1736 = vpack.c.bf16 %v1673, %v1672
        %v1737 = vpack.c.bf16 %v1721, %v1720
        %v1738 = vpack.c.bf16 %v1675, %v1674
        %v1739 = vpack.c.bf16 %v1723, %v1722
        %v1740 = vpack.c.bf16 %v1677, %v1676
        %v1741 = vpack.c.bf16 %v1725, %v1724
        %v1742 = vpack.c.bf16 %v1679, %v1678
        %v1743 = vpack.c.bf16 %v1727, %v1726
        %v1744 = vpack.c.bf16 %v1681, %v1680
        %v1745 = vpack.c.bf16 %v1729, %v1728
        %v1746 = vpack.c.bf16 %v1683, %v1682
        %v1747 = vpack.c.bf16 %v1731, %v1730
        %v1748 = vpack.c.bf16 %v1685, %v1684
        %v1749 = vpack.c.bf16 %v1733, %v1732
        %v1750 = vpack.c.bf16 %v1687, %v1686
        %v1751 = vpack.c.bf16 %v1735, %v1734
        %1752 = vmatprep.subr.bf16.mxu0 %v1737
        %1753 = vmatpush1.bf16.msra.mxu0 %v1736
        %1754 = vmatprep.subr.bf16.mxu0 %v1739
        %1755 = vmatpush1.bf16.msra.mxu0 %v1738
        %1756 = vmatprep.subr.bf16.mxu0 %v1741
        %1757 = vmatpush1.bf16.msra.mxu0 %v1740
        %1758 = vmatprep.subr.bf16.mxu0 %v1743
        %1759 = vmatpush1.bf16.msra.mxu0 %v1742
        %1760 = vmatprep.subr.bf16.mxu0 %v1745
        %1761 = vmatpush1.bf16.msra.mxu0 %v1744
        %1762 = vmatprep.subr.bf16.mxu0 %v1747
        %1763 = vmatpush1.bf16.msra.mxu0 %v1746
        %1764 = vmatprep.subr.bf16.mxu0 %v1749
        %1765 = vmatpush1.bf16.msra.mxu0 %v1748
        %1766 = vmatprep.subr.bf16.mxu0 %v1751
        %1767 = vmatpush1.bf16.msra.mxu0 %v1750
        %1768 = vmatprep.subr.bf16.mxu0 0
        %1769 = vmatpush1.bf16.msra.mxu0 0
        %1770 = vmatprep.subr.bf16.mxu0 0
        %1771 = vmatpush1.bf16.msra.mxu0 0
        %1772 = vmatprep.subr.bf16.mxu0 0
        %1773 = vmatpush1.bf16.msra.mxu0 0
        %1774 = vmatprep.subr.bf16.mxu0 0
        %1775 = vmatpush1.bf16.msra.mxu0 0
        %1776 = vmatprep.subr.bf16.mxu0 0
        %1777 = vmatpush1.bf16.msra.mxu0 0
        %1778 = vmatprep.subr.bf16.mxu0 0
        %1779 = vmatpush1.bf16.msra.mxu0 0
        %1780 = vmatprep.subr.bf16.mxu0 0
        %1781 = vmatpush1.bf16.msra.mxu0 0
        %1782 = vmatprep.subr.bf16.mxu0 0
        %1783 = vmatpush1.bf16.msra.mxu0 0
        %1784 = vmatprep.mubr.bf16.mxu0 0
        %1785 = vmatmul.mubr.bf16.gmra.mrb[0].mxu0 %v1286
        %v1786 = vpop.f32.mrb[0].mxu0
        %v1787 = vadd.f32 0.0, %v1786
        %v1788 = vpop.f32.mrb[0].mxu0
        %v1789 = vadd.f32 0.0, %v1788
        %v1790 = vpop.f32.mrb[0].mxu0
        %v1791 = vadd.f32 0.0, %v1790
        %v1792 = vpop.f32.mrb[0].mxu0
        %v1793 = vadd.f32 0.0, %v1792
        %1794 = vmatprep.mubr.bf16.mxu0 0
        %1795 = vmatmul.mubr.bf16.gmra.mrb[0].mxu0 %v1287
        %v1796 = vpop.f32.mrb[0].mxu0
        %v1797 = vadd.f32 0.0, %v1796
        %v1798 = vpop.f32.mrb[0].mxu0
        %v1799 = vadd.f32 0.0, %v1798
        %v1800 = vpop.f32.mrb[0].mxu0
        %v1801 = vadd.f32 0.0, %v1800
        %v1802 = vpop.f32.mrb[0].mxu0
        %v1803 = vadd.f32 0.0, %v1802
        %1804 = vmatprep.mubr.bf16.mxu0 0
        %1805 = vmatmul.mubr.bf16.gmra.mrb[0].mxu0 %v1288
        %v1806 = vpop.f32.mrb[0].mxu0
        %v1807 = vadd.f32 0.0, %v1806
        %v1808 = vpop.f32.mrb[0].mxu0
        %v1809 = vadd.f32 0.0, %v1808
        %v1810 = vpop.f32.mrb[0].mxu0
        %v1811 = vadd.f32 0.0, %v1810
        %v1812 = vpop.f32.mrb[0].mxu0
        %v1813 = vadd.f32 0.0, %v1812
        %1814 = vmatprep.mubr.bf16.mxu0 0
        %1815 = vmatmul.mubr.bf16.gmra.mrb[0].mxu0 %v1289
        %v1816 = vpop.f32.mrb[0].mxu0
        %v1817 = vadd.f32 0.0, %v1816
        %v1818 = vpop.f32.mrb[0].mxu0
        %v1819 = vadd.f32 0.0, %v1818
        %v1820 = vpop.f32.mrb[0].mxu0
        %v1821 = vadd.f32 0.0, %v1820
        %v1822 = vpop.f32.mrb[0].mxu0
        %v1823 = vadd.f32 0.0, %v1822
        %1824 = vmatprep.mubr.bf16.mxu0 0
        %1825 = vmatmul.mubr.bf16.gmra.mrb[0].mxu0 %v1290
        %v1826 = vpop.f32.mrb[0].mxu0
        %v1827 = vadd.f32 0.0, %v1826
        %v1828 = vpop.f32.mrb[0].mxu0
        %v1829 = vadd.f32 0.0, %v1828
        %v1830 = vpop.f32.mrb[0].mxu0
        %v1831 = vadd.f32 0.0, %v1830
        %v1832 = vpop.f32.mrb[0].mxu0
        %v1833 = vadd.f32 0.0, %v1832
        %1834 = vmatprep.mubr.bf16.mxu0 0
        %1835 = vmatmul.mubr.bf16.gmra.mrb[0].mxu0 %v1291
        %v1836 = vpop.f32.mrb[0].mxu0
        %v1837 = vadd.f32 0.0, %v1836
        %v1838 = vpop.f32.mrb[0].mxu0
        %v1839 = vadd.f32 0.0, %v1838
        %v1840 = vpop.f32.mrb[0].mxu0
        %v1841 = vadd.f32 0.0, %v1840
        %v1842 = vpop.f32.mrb[0].mxu0
        %v1843 = vadd.f32 0.0, %v1842
        %1844 = vmatprep.mubr.bf16.mxu0 0
        %1845 = vmatmul.mubr.bf16.gmra.mrb[0].mxu0 %v1292
        %v1846 = vpop.f32.mrb[0].mxu0
        %v1847 = vadd.f32 0.0, %v1846
        %v1848 = vpop.f32.mrb[0].mxu0
        %v1849 = vadd.f32 0.0, %v1848
        %v1850 = vpop.f32.mrb[0].mxu0
        %v1851 = vadd.f32 0.0, %v1850
        %v1852 = vpop.f32.mrb[0].mxu0
        %v1853 = vadd.f32 0.0, %v1852
        %1854 = vmatprep.mubr.bf16.mxu0 0
        %1855 = vmatmul.mubr.bf16.gmra.mrb[0].mxu0 %v1293
        %v1856 = vpop.f32.mrb[0].mxu0
        %v1857 = vadd.f32 0.0, %v1856
        %v1858 = vpop.f32.mrb[0].mxu0
        %v1859 = vadd.f32 0.0, %v1858
        %v1860 = vpop.f32.mrb[0].mxu0
        %v1861 = vadd.f32 0.0, %v1860
        %v1862 = vpop.f32.mrb[0].mxu0
        %v1863 = vadd.f32 0.0, %v1862
        %1864 = vdwg.mxu0
        %1865 = vmatprep.subr.bf16.mxu0 %v1737
        %1866 = vmatpush1.bf16.msra.mxu0 %v1736
        %1867 = vmatprep.subr.bf16.mxu0 %v1739
        %1868 = vmatpush1.bf16.msra.mxu0 %v1738
        %1869 = vmatprep.subr.bf16.mxu0 %v1741
        %1870 = vmatpush1.bf16.msra.mxu0 %v1740
        %1871 = vmatprep.subr.bf16.mxu0 %v1743
        %1872 = vmatpush1.bf16.msra.mxu0 %v1742
        %1873 = vmatprep.subr.bf16.mxu0 %v1745
        %1874 = vmatpush1.bf16.msra.mxu0 %v1744
        %1875 = vmatprep.subr.bf16.mxu0 %v1747
        %1876 = vmatpush1.bf16.msra.mxu0 %v1746
        %1877 = vmatprep.subr.bf16.mxu0 %v1749
        %1878 = vmatpush1.bf16.msra.mxu0 %v1748
        %1879 = vmatprep.subr.bf16.mxu0 %v1751
        %1880 = vmatpush1.bf16.msra.mxu0 %v1750
        %1881 = vmatprep.subr.bf16.mxu0 0
        %1882 = vmatpush1.bf16.msra.mxu0 0
        %1883 = vmatprep.subr.bf16.mxu0 0
        %1884 = vmatpush1.bf16.msra.mxu0 0
        %1885 = vmatprep.subr.bf16.mxu0 0
        %1886 = vmatpush1.bf16.msra.mxu0 0
        %1887 = vmatprep.subr.bf16.mxu0 0
        %1888 = vmatpush1.bf16.msra.mxu0 0
        %1889 = vmatprep.subr.bf16.mxu0 0
        %1890 = vmatpush1.bf16.msra.mxu0 0
        %1891 = vmatprep.subr.bf16.mxu0 0
        %1892 = vmatpush1.bf16.msra.mxu0 0
        %1893 = vmatprep.subr.bf16.mxu0 0
        %1894 = vmatpush1.bf16.msra.mxu0 0
        %1895 = vmatprep.subr.bf16.mxu0 0
        %1896 = vmatpush1.bf16.msra.mxu0 0
        %1897 = vmatprep.mubr.bf16.mxu0 0
        %1898 = vmatmul.mubr.bf16.gmra.mrb[0].mxu0 %v1447
        %v1899 = vpop.f32.mrb[0].mxu0
        %v1900 = vadd.f32 0.0, %v1899
        %v1901 = vpop.f32.mrb[0].mxu0
        %v1902 = vadd.f32 0.0, %v1901
        %v1903 = vpop.f32.mrb[0].mxu0
        %v1904 = vadd.f32 0.0, %v1903
        %v1905 = vpop.f32.mrb[0].mxu0
        %v1906 = vadd.f32 0.0, %v1905
        %1907 = vmatprep.mubr.bf16.mxu0 0
        %1908 = vmatmul.mubr.bf16.gmra.mrb[0].mxu0 %v1448
        %v1909 = vpop.f32.mrb[0].mxu0
        %v1910 = vadd.f32 0.0, %v1909
        %v1911 = vpop.f32.mrb[0].mxu0
        %v1912 = vadd.f32 0.0, %v1911
        %v1913 = vpop.f32.mrb[0].mxu0
        %v1914 = vadd.f32 0.0, %v1913
        %v1915 = vpop.f32.mrb[0].mxu0
        %v1916 = vadd.f32 0.0, %v1915
        %1917 = vmatprep.mubr.bf16.mxu0 0
        %1918 = vmatmul.mubr.bf16.gmra.mrb[0].mxu0 %v1449
        %v1919 = vpop.f32.mrb[0].mxu0
        %v1920 = vadd.f32 0.0, %v1919
        %v1921 = vpop.f32.mrb[0].mxu0
        %v1922 = vadd.f32 0.0, %v1921
        %v1923 = vpop.f32.mrb[0].mxu0
        %v1924 = vadd.f32 0.0, %v1923
        %v1925 = vpop.f32.mrb[0].mxu0
        %v1926 = vadd.f32 0.0, %v1925
        %1927 = vmatprep.mubr.bf16.mxu0 0
        %1928 = vmatmul.mubr.bf16.gmra.mrb[0].mxu0 %v1450
        %v1929 = vpop.f32.mrb[0].mxu0
        %v1930 = vadd.f32 0.0, %v1929
        %v1931 = vpop.f32.mrb[0].mxu0
        %v1932 = vadd.f32 0.0, %v1931
        %v1933 = vpop.f32.mrb[0].mxu0
        %v1934 = vadd.f32 0.0, %v1933
        %v1935 = vpop.f32.mrb[0].mxu0
        %v1936 = vadd.f32 0.0, %v1935
        %1937 = vmatprep.mubr.bf16.mxu0 0
        %1938 = vmatmul.mubr.bf16.gmra.mrb[0].mxu0 %v1451
        %v1939 = vpop.f32.mrb[0].mxu0
        %v1940 = vadd.f32 0.0, %v1939
        %v1941 = vpop.f32.mrb[0].mxu0
        %v1942 = vadd.f32 0.0, %v1941
        %v1943 = vpop.f32.mrb[0].mxu0
        %v1944 = vadd.f32 0.0, %v1943
        %v1945 = vpop.f32.mrb[0].mxu0
        %v1946 = vadd.f32 0.0, %v1945
        %1947 = vmatprep.mubr.bf16.mxu0 0
        %1948 = vmatmul.mubr.bf16.gmra.mrb[0].mxu0 %v1452
        %v1949 = vpop.f32.mrb[0].mxu0
        %v1950 = vadd.f32 0.0, %v1949
        %v1951 = vpop.f32.mrb[0].mxu0
        %v1952 = vadd.f32 0.0, %v1951
        %v1953 = vpop.f32.mrb[0].mxu0
        %v1954 = vadd.f32 0.0, %v1953
        %v1955 = vpop.f32.mrb[0].mxu0
        %v1956 = vadd.f32 0.0, %v1955
        %1957 = vmatprep.mubr.bf16.mxu0 0
        %1958 = vmatmul.mubr.bf16.gmra.mrb[0].mxu0 %v1453
        %v1959 = vpop.f32.mrb[0].mxu0
        %v1960 = vadd.f32 0.0, %v1959
        %v1961 = vpop.f32.mrb[0].mxu0
        %v1962 = vadd.f32 0.0, %v1961
        %v1963 = vpop.f32.mrb[0].mxu0
        %v1964 = vadd.f32 0.0, %v1963
        %v1965 = vpop.f32.mrb[0].mxu0
        %v1966 = vadd.f32 0.0, %v1965
        %1967 = vmatprep.mubr.bf16.mxu0 0
        %1968 = vmatmul.mubr.bf16.gmra.mrb[0].mxu0 %v1454
        %v1969 = vpop.f32.mrb[0].mxu0
        %v1970 = vadd.f32 0.0, %v1969
        %v1971 = vpop.f32.mrb[0].mxu0
        %v1972 = vadd.f32 0.0, %v1971
        %v1973 = vpop.f32.mrb[0].mxu0
        %v1974 = vadd.f32 0.0, %v1973
        %v1975 = vpop.f32.mrb[0].mxu0
        %v1976 = vadd.f32 0.0, %v1975
        %1977 = vdwg.mxu0
        %v1978 = vadd.f32 %v1787, %v1902
        %v1979 = vadd.f32 %v1791, %v1906
        %v1980 = vadd.f32 %v1797, %v1912
        %v1981 = vadd.f32 %v1801, %v1916
        %v1982 = vadd.f32 %v1807, %v1922
        %v1983 = vadd.f32 %v1811, %v1926
        %v1984 = vadd.f32 %v1817, %v1932
        %v1985 = vadd.f32 %v1821, %v1936
        %v1986 = vadd.f32 %v1827, %v1942
        %v1987 = vadd.f32 %v1831, %v1946
        %v1988 = vadd.f32 %v1837, %v1952
        %v1989 = vadd.f32 %v1841, %v1956
        %v1990 = vadd.f32 %v1847, %v1962
        %v1991 = vadd.f32 %v1851, %v1966
        %v1992 = vadd.f32 %v1857, %v1972
        %v1993 = vadd.f32 %v1861, %v1976
        %v1994 = vsub.f32 %v1789, %v1900
        %v1995 = vsub.f32 %v1793, %v1904
        %v1996 = vsub.f32 %v1799, %v1910
        %v1997 = vsub.f32 %v1803, %v1914
        %v1998 = vsub.f32 %v1809, %v1920
        %v1999 = vsub.f32 %v1813, %v1924
        %v2000 = vsub.f32 %v1819, %v1930
        %v2001 = vsub.f32 %v1823, %v1934
        %v2002 = vsub.f32 %v1829, %v1940
        %v2003 = vsub.f32 %v1833, %v1944
        %v2004 = vsub.f32 %v1839, %v1950
        %v2005 = vsub.f32 %v1843, %v1954
        %v2006 = vsub.f32 %v1849, %v1960
        %v2007 = vsub.f32 %v1853, %v1964
        %v2008 = vsub.f32 %v1859, %v1970
        %v2009 = vsub.f32 %v1863, %v1974
        %v2010 = vpack.c.bf16 %v1979, %v1978
        %v2011 = vpack.c.bf16 %v1995, %v1994
        %v2012 = vpack.c.bf16 %v1981, %v1980
        %v2013 = vpack.c.bf16 %v1997, %v1996
        %v2014 = vpack.c.bf16 %v1983, %v1982
        %v2015 = vpack.c.bf16 %v1999, %v1998
        %v2016 = vpack.c.bf16 %v1985, %v1984
        %v2017 = vpack.c.bf16 %v2001, %v2000
        %v2018 = vpack.c.bf16 %v1987, %v1986
        %v2019 = vpack.c.bf16 %v2003, %v2002
        %v2020 = vpack.c.bf16 %v1989, %v1988
        %v2021 = vpack.c.bf16 %v2005, %v2004
        %v2022 = vpack.c.bf16 %v1991, %v1990
        %v2023 = vpack.c.bf16 %v2007, %v2006
        %v2024 = vpack.c.bf16 %v1993, %v1992
        %v2025 = vpack.c.bf16 %v2009, %v2008
        %v2026 = vld [vmem:[#allocation13] sm:$0xf]
        %v2027 = vld [vmem:[#allocation13 + $0x4] sm:$0xf]
        %v2028 = vld [vmem:[#allocation13 + $0x8] sm:$0xf]
        %v2029 = vld [vmem:[#allocation13 + $0xc] sm:$0xf]
        %v2030 = vld [vmem:[#allocation13 + $0x10] sm:$0xf]
        %v2031 = vld [vmem:[#allocation13 + $0x14] sm:$0xf]
        %v2032 = vld [vmem:[#allocation13 + $0x18] sm:$0xf]
        %v2033 = vld [vmem:[#allocation13 + $0x1c] sm:$0xf]
        %v2034 = vld [vmem:[#allocation13 + $0x20] sm:$0xf]
        %v2035 = vld [vmem:[#allocation13 + $0x24] sm:$0xf]
        %v2036 = vld [vmem:[#allocation13 + $0x28] sm:$0xf]
        %v2037 = vld [vmem:[#allocation13 + $0x2c] sm:$0xf]
        %v2038 = vld [vmem:[#allocation13 + $0x30] sm:$0xf]
        %v2039 = vld [vmem:[#allocation13 + $0x34] sm:$0xf]
        %v2040 = vld [vmem:[#allocation13 + $0x38] sm:$0xf]
        %v2041 = vld [vmem:[#allocation13 + $0x3c] sm:$0xf]
        %v2042 = vld [vmem:[#allocation13 + $0x40] sm:$0xf]
        %v2043 = vld [vmem:[#allocation13 + $0x44] sm:$0xf]
        %v2044 = vld [vmem:[#allocation13 + $0x48] sm:$0xf]
        %v2045 = vld [vmem:[#allocation13 + $0x4c] sm:$0xf]
        %v2046 = vld [vmem:[#allocation13 + $0x50] sm:$0xf]
        %v2047 = vld [vmem:[#allocation13 + $0x54] sm:$0xf]
        %v2048 = vld [vmem:[#allocation13 + $0x58] sm:$0xf]
        %v2049 = vld [vmem:[#allocation13 + $0x5c] sm:$0xf]
        %v2050 = vld [vmem:[#allocation13 + $0x60] sm:$0xf]
        %v2051 = vld [vmem:[#allocation13 + $0x64] sm:$0xf]
        %v2052 = vld [vmem:[#allocation13 + $0x68] sm:$0xf]
        %v2053 = vld [vmem:[#allocation13 + $0x6c] sm:$0xf]
        %v2054 = vld [vmem:[#allocation13 + $0x70] sm:$0xf]
        %v2055 = vld [vmem:[#allocation13 + $0x74] sm:$0xf]
        %v2056 = vld [vmem:[#allocation13 + $0x78] sm:$0xf]
        %v2057 = vld [vmem:[#allocation13 + $0x7c] sm:$0xf]
        %v2090 = vunpack.c.l.b16 %v2026
        %v2091 = vunpack.c.l.b16 %v2027
        %v2092 = vunpack.c.l.b16 %v2028
        %v2093 = vunpack.c.l.b16 %v2029
        %v2094 = vunpack.c.l.b16 %v2030
        %v2095 = vunpack.c.l.b16 %v2031
        %v2096 = vunpack.c.l.b16 %v2032
        %v2097 = vunpack.c.l.b16 %v2033
        %v2098 = vunpack.c.l.b16 %v2034
        %v2099 = vunpack.c.l.b16 %v2035
        %v2100 = vunpack.c.l.b16 %v2036
        %v2101 = vunpack.c.l.b16 %v2037
        %v2102 = vunpack.c.l.b16 %v2038
        %v2103 = vunpack.c.l.b16 %v2039
        %v2104 = vunpack.c.l.b16 %v2040
        %v2105 = vunpack.c.l.b16 %v2041
        %v2106 = vunpack.c.l.b16 %v2042
        %v2107 = vunpack.c.l.b16 %v2043
        %v2108 = vunpack.c.l.b16 %v2044
        %v2109 = vunpack.c.l.b16 %v2045
        %v2110 = vunpack.c.l.b16 %v2046
        %v2111 = vunpack.c.l.b16 %v2047
        %v2112 = vunpack.c.l.b16 %v2048
        %v2113 = vunpack.c.l.b16 %v2049
        %v2114 = vunpack.c.l.b16 %v2050
        %v2115 = vunpack.c.l.b16 %v2051
        %v2116 = vunpack.c.l.b16 %v2052
        %v2117 = vunpack.c.l.b16 %v2053
        %v2118 = vunpack.c.l.b16 %v2054
        %v2119 = vunpack.c.l.b16 %v2055
        %v2120 = vunpack.c.l.b16 %v2056
        %v2121 = vunpack.c.l.b16 %v2057
        %v2122 = vpack.c.b16 %v2091, %v2090
        %v2123 = vpack.c.b16 %v2093, %v2092
        %v2124 = vpack.c.b16 %v2095, %v2094
        %v2125 = vpack.c.b16 %v2097, %v2096
        %v2126 = vpack.c.b16 %v2099, %v2098
        %v2127 = vpack.c.b16 %v2101, %v2100
        %v2128 = vpack.c.b16 %v2103, %v2102
        %v2129 = vpack.c.b16 %v2105, %v2104
        %v2130 = vpack.c.b16 %v2107, %v2106
        %v2131 = vpack.c.b16 %v2109, %v2108
        %v2132 = vpack.c.b16 %v2111, %v2110
        %v2133 = vpack.c.b16 %v2113, %v2112
        %v2134 = vpack.c.b16 %v2115, %v2114
        %v2135 = vpack.c.b16 %v2117, %v2116
        %v2136 = vpack.c.b16 %v2119, %v2118
        %v2137 = vpack.c.b16 %v2121, %v2120
        %2154 = vmatprep.subr.bf16.mxu0 0
        %2155 = vmatpush1.bf16.msra.mxu0 %v2122
        %2156 = vmatprep.subr.bf16.mxu0 0
        %2157 = vmatpush1.bf16.msra.mxu0 %v2123
        %2158 = vmatprep.subr.bf16.mxu0 0
        %2159 = vmatpush1.bf16.msra.mxu0 %v2124
        %2160 = vmatprep.subr.bf16.mxu0 0
        %2161 = vmatpush1.bf16.msra.mxu0 %v2125
        %2162 = vmatprep.subr.bf16.mxu0 0
        %2163 = vmatpush1.bf16.msra.mxu0 %v2126
        %2164 = vmatprep.subr.bf16.mxu0 0
        %2165 = vmatpush1.bf16.msra.mxu0 %v2127
        %2166 = vmatprep.subr.bf16.mxu0 0
        %2167 = vmatpush1.bf16.msra.mxu0 %v2128
        %2168 = vmatprep.subr.bf16.mxu0 0
        %2169 = vmatpush1.bf16.msra.mxu0 %v2129
        %2170 = vmatprep.subr.bf16.mxu0 0
        %2171 = vmatpush1.bf16.msra.mxu0 %v2130
        %2172 = vmatprep.subr.bf16.mxu0 0
        %2173 = vmatpush1.bf16.msra.mxu0 %v2131
        %2174 = vmatprep.subr.bf16.mxu0 0
        %2175 = vmatpush1.bf16.msra.mxu0 %v2132
        %2176 = vmatprep.subr.bf16.mxu0 0
        %2177 = vmatpush1.bf16.msra.mxu0 %v2133
        %2178 = vmatprep.subr.bf16.mxu0 0
        %2179 = vmatpush1.bf16.msra.mxu0 %v2134
        %2180 = vmatprep.subr.bf16.mxu0 0
        %2181 = vmatpush1.bf16.msra.mxu0 %v2135
        %2182 = vmatprep.subr.bf16.mxu0 0
        %2183 = vmatpush1.bf16.msra.mxu0 %v2136
        %2184 = vmatprep.subr.bf16.mxu0 0
        %2185 = vmatpush1.bf16.msra.mxu0 %v2137
        %2186 = vmatprep.mubr.bf16.mxu0 %v2011
        %2187 = vmatmul.mubr.bf16.gmra.mrb[0].mxu0 %v2010
        %v2188 = vpop.f32.mrb[0].mxu0
        %v2189 = vadd.f32 0.0, %v2188
        %v2190 = vpop.f32.mrb[0].mxu0
        %v2191 = vpop.f32.mrb[0].mxu0
        %v2192 = vadd.f32 0.0, %v2191
        %v2193 = vpop.f32.mrb[0].mxu0
        %2194 = vmatprep.mubr.bf16.mxu0 %v2013
        %2195 = vmatmul.mubr.bf16.gmra.mrb[0].mxu0 %v2012
        %v2196 = vpop.f32.mrb[0].mxu0
        %v2197 = vadd.f32 0.0, %v2196
        %v2198 = vpop.f32.mrb[0].mxu0
        %v2199 = vpop.f32.mrb[0].mxu0
        %v2200 = vadd.f32 0.0, %v2199
        %v2201 = vpop.f32.mrb[0].mxu0
        %2202 = vmatprep.mubr.bf16.mxu0 %v2015
        %2203 = vmatmul.mubr.bf16.gmra.mrb[0].mxu0 %v2014
        %v2204 = vpop.f32.mrb[0].mxu0
        %v2205 = vadd.f32 0.0, %v2204
        %v2206 = vpop.f32.mrb[0].mxu0
        %v2207 = vpop.f32.mrb[0].mxu0
        %v2208 = vadd.f32 0.0, %v2207
        %v2209 = vpop.f32.mrb[0].mxu0
        %2210 = vmatprep.mubr.bf16.mxu0 %v2017
        %2211 = vmatmul.mubr.bf16.gmra.mrb[0].mxu0 %v2016
        %v2212 = vpop.f32.mrb[0].mxu0
        %v2213 = vadd.f32 0.0, %v2212
        %v2214 = vpop.f32.mrb[0].mxu0
        %v2215 = vpop.f32.mrb[0].mxu0
        %v2216 = vadd.f32 0.0, %v2215
        %v2217 = vpop.f32.mrb[0].mxu0
        %2218 = vmatprep.mubr.bf16.mxu0 %v2019
        %2219 = vmatmul.mubr.bf16.gmra.mrb[0].mxu0 %v2018
        %v2220 = vpop.f32.mrb[0].mxu0
        %v2221 = vadd.f32 0.0, %v2220
        %v2222 = vpop.f32.mrb[0].mxu0
        %v2223 = vpop.f32.mrb[0].mxu0
        %v2224 = vadd.f32 0.0, %v2223
        %v2225 = vpop.f32.mrb[0].mxu0
        %2226 = vmatprep.mubr.bf16.mxu0 %v2021
        %2227 = vmatmul.mubr.bf16.gmra.mrb[0].mxu0 %v2020
        %v2228 = vpop.f32.mrb[0].mxu0
        %v2229 = vadd.f32 0.0, %v2228
        %v2230 = vpop.f32.mrb[0].mxu0
        %v2231 = vpop.f32.mrb[0].mxu0
        %v2232 = vadd.f32 0.0, %v2231
        %v2233 = vpop.f32.mrb[0].mxu0
        %2234 = vmatprep.mubr.bf16.mxu0 %v2023
        %2235 = vmatmul.mubr.bf16.gmra.mrb[0].mxu0 %v2022
        %v2236 = vpop.f32.mrb[0].mxu0
        %v2237 = vadd.f32 0.0, %v2236
        %v2238 = vpop.f32.mrb[0].mxu0
        %v2239 = vpop.f32.mrb[0].mxu0
        %v2240 = vadd.f32 0.0, %v2239
        %v2241 = vpop.f32.mrb[0].mxu0
        %2242 = vmatprep.mubr.bf16.mxu0 %v2025
        %2243 = vmatmul.mubr.bf16.gmra.mrb[0].mxu0 %v2024
        %v2244 = vpop.f32.mrb[0].mxu0
        %v2245 = vadd.f32 0.0, %v2244
        %v2246 = vpop.f32.mrb[0].mxu0
        %v2247 = vpop.f32.mrb[0].mxu0
        %v2248 = vadd.f32 0.0, %v2247
        %v2249 = vpop.f32.mrb[0].mxu0
        %2250 = vdwg.mxu0
        %v2251 = vmul.f32 %v2189, %v2189
        %v2252 = vmul.f32 %v2192, %v2192
        %v2253 = vmul.f32 %v2197, %v2197
        %v2254 = vmul.f32 %v2200, %v2200
        %v2255 = vmul.f32 %v2205, %v2205
        %v2256 = vmul.f32 %v2208, %v2208
        %v2257 = vmul.f32 %v2213, %v2213
        %v2258 = vmul.f32 %v2216, %v2216
        %v2259 = vmul.f32 %v2221, %v2221
        %v2260 = vmul.f32 %v2224, %v2224
        %v2261 = vmul.f32 %v2229, %v2229
        %v2262 = vmul.f32 %v2232, %v2232
        %v2263 = vmul.f32 %v2237, %v2237
        %v2264 = vmul.f32 %v2240, %v2240
        %v2265 = vmul.f32 %v2245, %v2245
        %v2266 = vmul.f32 %v2248, %v2248
        %v2267 = vpack.c.bf16 %v2192, %v2189
        %v2268 = vpack.c.bf16 %v2252, %v2251
        %v2269 = vpack.c.bf16 %v2200, %v2197
        %v2270 = vpack.c.bf16 %v2254, %v2253
        %v2271 = vpack.c.bf16 %v2208, %v2205
        %v2272 = vpack.c.bf16 %v2256, %v2255
        %v2273 = vpack.c.bf16 %v2216, %v2213
        %v2274 = vpack.c.bf16 %v2258, %v2257
        %v2275 = vpack.c.bf16 %v2224, %v2221
        %v2276 = vpack.c.bf16 %v2260, %v2259
        %v2277 = vpack.c.bf16 %v2232, %v2229
        %v2278 = vpack.c.bf16 %v2262, %v2261
        %v2279 = vpack.c.bf16 %v2240, %v2237
        %v2280 = vpack.c.bf16 %v2264, %v2263
        %v2281 = vpack.c.bf16 %v2248, %v2245
        %v2282 = vpack.c.bf16 %v2266, %v2265
        %2283 = vmatprep.subr.bf16.mxu0 %v677
        %2284 = vmatpush1.bf16.msra.mxu0 %v676
        %2285 = vmatprep.subr.bf16.mxu0 %v679
        %2286 = vmatpush1.bf16.msra.mxu0 %v678
        %2287 = vmatprep.subr.bf16.mxu0 %v681
        %2288 = vmatpush1.bf16.msra.mxu0 %v680
        %2289 = vmatprep.subr.bf16.mxu0 %v683
        %2290 = vmatpush1.bf16.msra.mxu0 %v682
        %2291 = vmatprep.subr.bf16.mxu0 %v685
        %2292 = vmatpush1.bf16.msra.mxu0 %v684
        %2293 = vmatprep.subr.bf16.mxu0 %v687
        %2294 = vmatpush1.bf16.msra.mxu0 %v686
        %2295 = vmatprep.subr.bf16.mxu0 %v689
        %2296 = vmatpush1.bf16.msra.mxu0 %v688
        %2297 = vmatprep.subr.bf16.mxu0 %v691
        %2298 = vmatpush1.bf16.msra.mxu0 %v690
        %2299 = vmatprep.subr.bf16.mxu0 %v693
        %2300 = vmatpush1.bf16.msra.mxu0 %v692
        %2301 = vmatprep.subr.bf16.mxu0 %v695
        %2302 = vmatpush1.bf16.msra.mxu0 %v694
        %2303 = vmatprep.subr.bf16.mxu0 %v697
        %2304 = vmatpush1.bf16.msra.mxu0 %v696
        %2305 = vmatprep.subr.bf16.mxu0 %v699
        %2306 = vmatpush1.bf16.msra.mxu0 %v698
        %2307 = vmatprep.subr.bf16.mxu0 %v701
        %2308 = vmatpush1.bf16.msra.mxu0 %v700
        %2309 = vmatprep.subr.bf16.mxu0 %v703
        %2310 = vmatpush1.bf16.msra.mxu0 %v702
        %2311 = vmatprep.subr.bf16.mxu0 %v705
        %2312 = vmatpush1.bf16.msra.mxu0 %v704
        %2313 = vmatprep.subr.bf16.mxu0 %v707
        %2314 = vmatpush1.bf16.msra.mxu0 %v706
        %2315 = vmatprep.mubr.bf16.mxu0 %v2268
        %2316 = vmatmul.mubr.bf16.gmra.mrb[0].mxu0 %v2267
        %v2317 = vpop.f32.mrb[0].mxu0
        %v2318 = vadd.f32 0.0, %v2317
        %v2319 = vpop.f32.mrb[0].mxu0
        %v2320 = vadd.f32 0.0, %v2319
        %v2321 = vpop.f32.mrb[0].mxu0
        %v2322 = vadd.f32 0.0, %v2321
        %v2323 = vpop.f32.mrb[0].mxu0
        %v2324 = vadd.f32 0.0, %v2323
        %2325 = vmatprep.mubr.bf16.mxu0 %v2270
        %2326 = vmatmul.mubr.bf16.gmra.mrb[0].mxu0 %v2269
        %v2327 = vpop.f32.mrb[0].mxu0
        %v2328 = vadd.f32 0.0, %v2327
        %v2329 = vpop.f32.mrb[0].mxu0
        %v2330 = vadd.f32 0.0, %v2329
        %v2331 = vpop.f32.mrb[0].mxu0
        %v2332 = vadd.f32 0.0, %v2331
        %v2333 = vpop.f32.mrb[0].mxu0
        %v2334 = vadd.f32 0.0, %v2333
        %2335 = vmatprep.mubr.bf16.mxu0 %v2272
        %2336 = vmatmul.mubr.bf16.gmra.mrb[0].mxu0 %v2271
        %v2337 = vpop.f32.mrb[0].mxu0
        %v2338 = vadd.f32 0.0, %v2337
        %v2339 = vpop.f32.mrb[0].mxu0
        %v2340 = vadd.f32 0.0, %v2339
        %v2341 = vpop.f32.mrb[0].mxu0
        %v2342 = vadd.f32 0.0, %v2341
        %v2343 = vpop.f32.mrb[0].mxu0
        %v2344 = vadd.f32 0.0, %v2343
        %2345 = vmatprep.mubr.bf16.mxu0 %v2274
        %2346 = vmatmul.mubr.bf16.gmra.mrb[0].mxu0 %v2273
        %v2347 = vpop.f32.mrb[0].mxu0
        %v2348 = vadd.f32 0.0, %v2347
        %v2349 = vpop.f32.mrb[0].mxu0
        %v2350 = vadd.f32 0.0, %v2349
        %v2351 = vpop.f32.mrb[0].mxu0
        %v2352 = vadd.f32 0.0, %v2351
        %v2353 = vpop.f32.mrb[0].mxu0
        %v2354 = vadd.f32 0.0, %v2353
        %2355 = vmatprep.mubr.bf16.mxu0 %v2276
        %2356 = vmatmul.mubr.bf16.gmra.mrb[0].mxu0 %v2275
        %v2357 = vpop.f32.mrb[0].mxu0
        %v2358 = vadd.f32 0.0, %v2357
        %v2359 = vpop.f32.mrb[0].mxu0
        %v2360 = vadd.f32 0.0, %v2359
        %v2361 = vpop.f32.mrb[0].mxu0
        %v2362 = vadd.f32 0.0, %v2361
        %v2363 = vpop.f32.mrb[0].mxu0
        %v2364 = vadd.f32 0.0, %v2363
        %2365 = vmatprep.mubr.bf16.mxu0 %v2278
        %2366 = vmatmul.mubr.bf16.gmra.mrb[0].mxu0 %v2277
        %v2367 = vpop.f32.mrb[0].mxu0
        %v2368 = vadd.f32 0.0, %v2367
        %v2369 = vpop.f32.mrb[0].mxu0
        %v2370 = vadd.f32 0.0, %v2369
        %v2371 = vpop.f32.mrb[0].mxu0
        %v2372 = vadd.f32 0.0, %v2371
        %v2373 = vpop.f32.mrb[0].mxu0
        %v2374 = vadd.f32 0.0, %v2373
        %2375 = vmatprep.mubr.bf16.mxu0 %v2280
        %2376 = vmatmul.mubr.bf16.gmra.mrb[0].mxu0 %v2279
        %v2377 = vpop.f32.mrb[0].mxu0
        %v2378 = vadd.f32 0.0, %v2377
        %v2379 = vpop.f32.mrb[0].mxu0
        %v2380 = vadd.f32 0.0, %v2379
        %v2381 = vpop.f32.mrb[0].mxu0
        %v2382 = vadd.f32 0.0, %v2381
        %v2383 = vpop.f32.mrb[0].mxu0
        %v2384 = vadd.f32 0.0, %v2383
        %2385 = vmatprep.mubr.bf16.mxu0 %v2282
        %2386 = vmatmul.mubr.bf16.gmra.mrb[0].mxu0 %v2281
        %v2387 = vpop.f32.mrb[0].mxu0
        %v2388 = vadd.f32 0.0, %v2387
        %v2389 = vpop.f32.mrb[0].mxu0
        %v2390 = vadd.f32 0.0, %v2389
        %v2391 = vpop.f32.mrb[0].mxu0
        %v2392 = vadd.f32 0.0, %v2391
        %v2393 = vpop.f32.mrb[0].mxu0
        %v2394 = vadd.f32 0.0, %v2393
        %2395 = vdwg.mxu0
        %v2396 = vmul.f32 %v2318, %v2318
        %v2397 = vmul.f32 %v2322, %v2322
        %v2398 = vmul.f32 %v2328, %v2328
        %v2399 = vmul.f32 %v2332, %v2332
        %v2400 = vmul.f32 %v2338, %v2338
        %v2401 = vmul.f32 %v2342, %v2342
        %v2402 = vmul.f32 %v2348, %v2348
        %v2403 = vmul.f32 %v2352, %v2352
        %v2404 = vmul.f32 %v2358, %v2358
        %v2405 = vmul.f32 %v2362, %v2362
        %v2406 = vmul.f32 %v2368, %v2368
        %v2407 = vmul.f32 %v2372, %v2372
        %v2408 = vmul.f32 %v2378, %v2378
        %v2409 = vmul.f32 %v2382, %v2382
        %v2410 = vmul.f32 %v2388, %v2388
        %v2411 = vmul.f32 %v2392, %v2392
        %v2412 = vsub.f32 %v2320, %v2396
        %v2413 = vsub.f32 %v2324, %v2397
        %v2414 = vsub.f32 %v2330, %v2398
        %v2415 = vsub.f32 %v2334, %v2399
        %v2416 = vsub.f32 %v2340, %v2400
        %v2417 = vsub.f32 %v2344, %v2401
        %v2418 = vsub.f32 %v2350, %v2402
        %v2419 = vsub.f32 %v2354, %v2403
        %v2420 = vsub.f32 %v2360, %v2404
        %v2421 = vsub.f32 %v2364, %v2405
        %v2422 = vsub.f32 %v2370, %v2406
        %v2423 = vsub.f32 %v2374, %v2407
        %v2424 = vsub.f32 %v2380, %v2408
        %v2425 = vsub.f32 %v2384, %v2409
        %v2426 = vsub.f32 %v2390, %v2410
        %v2427 = vsub.f32 %v2394, %v2411
        %v2428 = vsub.f32 %v2189, %v2318
        %v2429 = vsub.f32 %v2192, %v2322
        %v2430 = vsub.f32 %v2197, %v2328
        %v2431 = vsub.f32 %v2200, %v2332
        %v2432 = vsub.f32 %v2205, %v2338
        %v2433 = vsub.f32 %v2208, %v2342
        %v2434 = vsub.f32 %v2213, %v2348
        %v2435 = vsub.f32 %v2216, %v2352
        %v2436 = vsub.f32 %v2221, %v2358
        %v2437 = vsub.f32 %v2224, %v2362
        %v2438 = vsub.f32 %v2229, %v2368
        %v2439 = vsub.f32 %v2232, %v2372
        %v2440 = vsub.f32 %v2237, %v2378
        %v2441 = vsub.f32 %v2240, %v2382
        %v2442 = vsub.f32 %v2245, %v2388
        %v2443 = vsub.f32 %v2248, %v2392
        %v2444 = vadd.f32 %v2412, 1e-05
        %v2445 = vadd.f32 %v2413, 1e-05
        %v2446 = vadd.f32 %v2414, 1e-05
        %v2447 = vadd.f32 %v2415, 1e-05
        %v2448 = vadd.f32 %v2416, 1e-05
        %v2449 = vadd.f32 %v2417, 1e-05
        %v2450 = vadd.f32 %v2418, 1e-05
        %v2451 = vadd.f32 %v2419, 1e-05
        %v2452 = vadd.f32 %v2420, 1e-05
        %v2453 = vadd.f32 %v2421, 1e-05
        %v2454 = vadd.f32 %v2422, 1e-05
        %v2455 = vadd.f32 %v2423, 1e-05
        %v2456 = vadd.f32 %v2424, 1e-05
        %v2457 = vadd.f32 %v2425, 1e-05
        %v2458 = vadd.f32 %v2426, 1e-05
        %v2459 = vadd.f32 %v2427, 1e-05
        %v2460 = vrsqrt.pop %v2444
        %v2461 = vrsqrt.pop %v2445
        %v2462 = vrsqrt.pop %v2446
        %v2463 = vrsqrt.pop %v2447
        %v2464 = vrsqrt.pop %v2448
        %v2465 = vrsqrt.pop %v2449
        %v2466 = vrsqrt.pop %v2450
        %v2467 = vrsqrt.pop %v2451
        %v2468 = vrsqrt.pop %v2452
        %v2469 = vrsqrt.pop %v2453
        %v2470 = vrsqrt.pop %v2454
        %v2471 = vrsqrt.pop %v2455
        %v2472 = vrsqrt.pop %v2456
        %v2473 = vrsqrt.pop %v2457
        %v2474 = vrsqrt.pop %v2458
        %v2475 = vrsqrt.pop %v2459
        %v2476 = vmul.f32 %v2428, %v2460
        %v2477 = vmul.f32 %v2429, %v2461
        %v2478 = vmul.f32 %v2430, %v2462
        %v2479 = vmul.f32 %v2431, %v2463
        %v2480 = vmul.f32 %v2432, %v2464
        %v2481 = vmul.f32 %v2433, %v2465
        %v2482 = vmul.f32 %v2434, %v2466
        %v2483 = vmul.f32 %v2435, %v2467
        %v2484 = vmul.f32 %v2436, %v2468
        %v2485 = vmul.f32 %v2437, %v2469
        %v2486 = vmul.f32 %v2438, %v2470
        %v2487 = vmul.f32 %v2439, %v2471
        %v2488 = vmul.f32 %v2440, %v2472
        %v2489 = vmul.f32 %v2441, %v2473
        %v2490 = vmul.f32 %v2442, %v2474
        %v2491 = vmul.f32 %v2443, %v2475
        %v2492 = vlaneseq
        %v2493 = vshrl.u32 %v2492, 7
        %v2494 = vsub.s32 0, %v2493
        %v2495 = vrot.slane %v545, %v2494
        %v2496 = vmul.f32 %v2476, %v2495
        %v2497 = vmul.f32 %v2477, %v2495
        %v2498 = vmul.f32 %v2478, %v2495
        %v2499 = vmul.f32 %v2479, %v2495
        %v2500 = vmul.f32 %v2480, %v2495
        %v2501 = vmul.f32 %v2481, %v2495
        %v2502 = vmul.f32 %v2482, %v2495
        %v2503 = vmul.f32 %v2483, %v2495
        %v2504 = vmul.f32 %v2484, %v2495
        %v2505 = vmul.f32 %v2485, %v2495
        %v2506 = vmul.f32 %v2486, %v2495
        %v2507 = vmul.f32 %v2487, %v2495
        %v2508 = vmul.f32 %v2488, %v2495
        %v2509 = vmul.f32 %v2489, %v2495
        %v2510 = vmul.f32 %v2490, %v2495
        %v2511 = vmul.f32 %v2491, %v2495
        %v2512 = vlaneseq
        %v2513 = vshrl.u32 %v2512, 7
        %v2514 = vsub.s32 0, %v2513
        %v2515 = vrot.slane %v546, %v2514
        %v2516 = vadd.f32 %v2496, %v2515
        %v2517 = vadd.f32 %v2497, %v2515
        %v2518 = vadd.f32 %v2498, %v2515
        %v2519 = vadd.f32 %v2499, %v2515
        %v2520 = vadd.f32 %v2500, %v2515
        %v2521 = vadd.f32 %v2501, %v2515
        %v2522 = vadd.f32 %v2502, %v2515
        %v2523 = vadd.f32 %v2503, %v2515
        %v2524 = vadd.f32 %v2504, %v2515
        %v2525 = vadd.f32 %v2505, %v2515
        %v2526 = vadd.f32 %v2506, %v2515
        %v2527 = vadd.f32 %v2507, %v2515
        %v2528 = vadd.f32 %v2508, %v2515
        %v2529 = vadd.f32 %v2509, %v2515
        %v2530 = vadd.f32 %v2510, %v2515
        %v2531 = vadd.f32 %v2511, %v2515
        %v2532 = vpack.c.bf16 %v2517, %v2516
        %v2533 = vpack.c.bf16 %v2519, %v2518
        %v2534 = vpack.c.bf16 %v2521, %v2520
        %v2535 = vpack.c.bf16 %v2523, %v2522
        %v2536 = vpack.c.bf16 %v2525, %v2524
        %v2537 = vpack.c.bf16 %v2527, %v2526
        %v2538 = vpack.c.bf16 %v2529, %v2528
        %v2539 = vpack.c.bf16 %v2531, %v2530
        %v2540 = vld [vmem:[#allocation14] sm:$0xff]
        %v2541 = vld [vmem:[#allocation14 + $0x8] sm:$0xff]
        %v2542 = vld [vmem:[#allocation14 + $0x10] sm:$0xff]
        %v2543 = vld [vmem:[#allocation14 + $0x18] sm:$0xff]
        %v2544 = vld [vmem:[#allocation14 + $0x20] sm:$0xff]
        %v2545 = vld [vmem:[#allocation14 + $0x28] sm:$0xff]
        %v2546 = vld [vmem:[#allocation14 + $0x30] sm:$0xff]
        %v2547 = vld [vmem:[#allocation14 + $0x38] sm:$0xff]
        %v2548 = vld [vmem:[#allocation14 + $0x40] sm:$0xff]
        %v2549 = vld [vmem:[#allocation14 + $0x48] sm:$0xff]
        %v2550 = vld [vmem:[#allocation14 + $0x50] sm:$0xff]
        %v2551 = vld [vmem:[#allocation14 + $0x58] sm:$0xff]
        %v2552 = vld [vmem:[#allocation14 + $0x60] sm:$0xff]
        %v2553 = vld [vmem:[#allocation14 + $0x68] sm:$0xff]
        %v2554 = vld [vmem:[#allocation14 + $0x70] sm:$0xff]
        %v2555 = vld [vmem:[#allocation14 + $0x78] sm:$0xff]
        %v2556 = vld [vmem:[#allocation14 + $0x80] sm:$0xff]
        %v2557 = vld [vmem:[#allocation14 + $0x88] sm:$0xff]
        %v2558 = vld [vmem:[#allocation14 + $0x90] sm:$0xff]
        %v2559 = vld [vmem:[#allocation14 + $0x98] sm:$0xff]
        %v2560 = vld [vmem:[#allocation14 + $0xa0] sm:$0xff]
        %v2561 = vld [vmem:[#allocation14 + $0xa8] sm:$0xff]
        %v2562 = vld [vmem:[#allocation14 + $0xb0] sm:$0xff]
        %v2563 = vld [vmem:[#allocation14 + $0xb8] sm:$0xff]
        %v2564 = vld [vmem:[#allocation14 + $0xc0] sm:$0xff]
        %v2565 = vld [vmem:[#allocation14 + $0xc8] sm:$0xff]
        %v2566 = vld [vmem:[#allocation14 + $0xd0] sm:$0xff]
        %v2567 = vld [vmem:[#allocation14 + $0xd8] sm:$0xff]
        %v2568 = vld [vmem:[#allocation14 + $0xe0] sm:$0xff]
        %v2569 = vld [vmem:[#allocation14 + $0xe8] sm:$0xff]
        %v2570 = vld [vmem:[#allocation14 + $0xf0] sm:$0xff]
        %v2571 = vld [vmem:[#allocation14 + $0xf8] sm:$0xff]
        %v2572 = vld [vmem:[%s8] sm:$0xf]
        %v2574 = vlaneseq
        %v2575 = vshrl.u32 %v2574, 7
        %v2576 = vsub.s32 0, %v2575
        %v2577 = vrot.slane %v2572, %v2576
        %v2578 = vlaneseq
        %v2579 = vshrl.u32 %v2578, 7
        %v2580 = vsub.s32 1, %v2579
        %v2581 = vrot.slane %v2572, %v2580
        %v2582 = vlaneseq
        %v2583 = vshrl.u32 %v2582, 7
        %v2584 = vsub.s32 2, %v2583
        %v2585 = vrot.slane %v2572, %v2584
        %v2586 = vlaneseq
        %v2587 = vshrl.u32 %v2586, 7
        %v2588 = vsub.s32 3, %v2587
        %v2589 = vrot.slane %v2572, %v2588
        %v2626 = vunpack.c.l.b16 %v2540
        %v2627 = vunpack.c.h.b16 %v2540
        %v2628 = vunpack.c.l.b16 %v2541
        %v2629 = vunpack.c.h.b16 %v2541
        %v2630 = vunpack.c.l.b16 %v2542
        %v2631 = vunpack.c.h.b16 %v2542
        %v2632 = vunpack.c.l.b16 %v2543
        %v2633 = vunpack.c.h.b16 %v2543
        %v2634 = vunpack.c.l.b16 %v2544
        %v2635 = vunpack.c.h.b16 %v2544
        %v2636 = vunpack.c.l.b16 %v2545
        %v2637 = vunpack.c.h.b16 %v2545
        %v2638 = vunpack.c.l.b16 %v2546
        %v2639 = vunpack.c.h.b16 %v2546
        %v2640 = vunpack.c.l.b16 %v2547
        %v2641 = vunpack.c.h.b16 %v2547
        %v2642 = vunpack.c.l.b16 %v2548
        %v2643 = vunpack.c.h.b16 %v2548
        %v2644 = vunpack.c.l.b16 %v2549
        %v2645 = vunpack.c.h.b16 %v2549
        %v2646 = vunpack.c.l.b16 %v2550
        %v2647 = vunpack.c.h.b16 %v2550
        %v2648 = vunpack.c.l.b16 %v2551
        %v2649 = vunpack.c.h.b16 %v2551
        %v2650 = vunpack.c.l.b16 %v2552
        %v2651 = vunpack.c.h.b16 %v2552
        %v2652 = vunpack.c.l.b16 %v2553
        %v2653 = vunpack.c.h.b16 %v2553
        %v2654 = vunpack.c.l.b16 %v2554
        %v2655 = vunpack.c.h.b16 %v2554
        %v2656 = vunpack.c.l.b16 %v2555
        %v2657 = vunpack.c.h.b16 %v2555
        %v2658 = vunpack.c.l.b16 %v2556
        %v2659 = vunpack.c.h.b16 %v2556
        %v2660 = vunpack.c.l.b16 %v2557
        %v2661 = vunpack.c.h.b16 %v2557
        %v2662 = vunpack.c.l.b16 %v2558
        %v2663 = vunpack.c.h.b16 %v2558
        %v2664 = vunpack.c.l.b16 %v2559
        %v2665 = vunpack.c.h.b16 %v2559
        %v2666 = vunpack.c.l.b16 %v2560
        %v2667 = vunpack.c.h.b16 %v2560
        %v2668 = vunpack.c.l.b16 %v2561
        %v2669 = vunpack.c.h.b16 %v2561
        %v2670 = vunpack.c.l.b16 %v2562
        %v2671 = vunpack.c.h.b16 %v2562
        %v2672 = vunpack.c.l.b16 %v2563
        %v2673 = vunpack.c.h.b16 %v2563
        %v2674 = vunpack.c.l.b16 %v2564
        %v2675 = vunpack.c.h.b16 %v2564
        %v2676 = vunpack.c.l.b16 %v2565
        %v2677 = vunpack.c.h.b16 %v2565
        %v2678 = vunpack.c.l.b16 %v2566
        %v2679 = vunpack.c.h.b16 %v2566
        %v2680 = vunpack.c.l.b16 %v2567
        %v2681 = vunpack.c.h.b16 %v2567
        %v2682 = vunpack.c.l.b16 %v2568
        %v2683 = vunpack.c.h.b16 %v2568
        %v2684 = vunpack.c.l.b16 %v2569
        %v2685 = vunpack.c.h.b16 %v2569
        %v2686 = vunpack.c.l.b16 %v2570
        %v2687 = vunpack.c.h.b16 %v2570
        %v2688 = vunpack.c.l.b16 %v2571
        %v2689 = vunpack.c.h.b16 %v2571
        %v2690 = vpack.c.b16 %v2630, %v2626
        %v2691 = vpack.c.b16 %v2631, %v2627
        %v2692 = vpack.c.b16 %v2632, %v2628
        %v2693 = vpack.c.b16 %v2633, %v2629
        %v2694 = vpack.c.b16 %v2638, %v2634
        %v2695 = vpack.c.b16 %v2639, %v2635
        %v2696 = vpack.c.b16 %v2640, %v2636
        %v2697 = vpack.c.b16 %v2641, %v2637
        %v2698 = vpack.c.b16 %v2646, %v2642
        %v2699 = vpack.c.b16 %v2647, %v2643
        %v2700 = vpack.c.b16 %v2648, %v2644
        %v2701 = vpack.c.b16 %v2649, %v2645
        %v2702 = vpack.c.b16 %v2654, %v2650
        %v2703 = vpack.c.b16 %v2655, %v2651
        %v2704 = vpack.c.b16 %v2656, %v2652
        %v2705 = vpack.c.b16 %v2657, %v2653
        %v2706 = vpack.c.b16 %v2662, %v2658
        %v2707 = vpack.c.b16 %v2663, %v2659
        %v2708 = vpack.c.b16 %v2664, %v2660
        %v2709 = vpack.c.b16 %v2665, %v2661
        %v2710 = vpack.c.b16 %v2670, %v2666
        %v2711 = vpack.c.b16 %v2671, %v2667
        %v2712 = vpack.c.b16 %v2672, %v2668
        %v2713 = vpack.c.b16 %v2673, %v2669
        %v2714 = vpack.c.b16 %v2678, %v2674
        %v2715 = vpack.c.b16 %v2679, %v2675
        %v2716 = vpack.c.b16 %v2680, %v2676
        %v2717 = vpack.c.b16 %v2681, %v2677
        %v2718 = vpack.c.b16 %v2686, %v2682
        %v2719 = vpack.c.b16 %v2687, %v2683
        %v2720 = vpack.c.b16 %v2688, %v2684
        %v2721 = vpack.c.b16 %v2689, %v2685
        %2754 = vmatprep.subr.bf16.mxu0 %v2691
        %2755 = vmatpush1.bf16.msra.mxu0 %v2690
        %2756 = vmatprep.subr.bf16.mxu0 %v2695
        %2757 = vmatpush1.bf16.msra.mxu0 %v2694
        %2758 = vmatprep.subr.bf16.mxu0 %v2699
        %2759 = vmatpush1.bf16.msra.mxu0 %v2698
        %2760 = vmatprep.subr.bf16.mxu0 %v2703
        %2761 = vmatpush1.bf16.msra.mxu0 %v2702
        %2762 = vmatprep.subr.bf16.mxu0 %v2707
        %2763 = vmatpush1.bf16.msra.mxu0 %v2706
        %2764 = vmatprep.subr.bf16.mxu0 %v2711
        %2765 = vmatpush1.bf16.msra.mxu0 %v2710
        %2766 = vmatprep.subr.bf16.mxu0 %v2715
        %2767 = vmatpush1.bf16.msra.mxu0 %v2714
        %2768 = vmatprep.subr.bf16.mxu0 %v2719
        %2769 = vmatpush1.bf16.msra.mxu0 %v2718
        %2770 = vmatprep.subr.bf16.mxu0 0
        %2771 = vmatpush1.bf16.msra.mxu0 0
        %2772 = vmatprep.subr.bf16.mxu0 0
        %2773 = vmatpush1.bf16.msra.mxu0 0
        %2774 = vmatprep.subr.bf16.mxu0 0
        %2775 = vmatpush1.bf16.msra.mxu0 0
        %2776 = vmatprep.subr.bf16.mxu0 0
        %2777 = vmatpush1.bf16.msra.mxu0 0
        %2778 = vmatprep.subr.bf16.mxu0 0
        %2779 = vmatpush1.bf16.msra.mxu0 0
        %2780 = vmatprep.subr.bf16.mxu0 0
        %2781 = vmatpush1.bf16.msra.mxu0 0
        %2782 = vmatprep.subr.bf16.mxu0 0
        %2783 = vmatpush1.bf16.msra.mxu0 0
        %2784 = vmatprep.subr.bf16.mxu0 0
        %2785 = vmatpush1.bf16.msra.mxu0 0
        %2786 = vmatprep.mubr.bf16.mxu0 0
        %2787 = vmatmul.mubr.bf16.gmra.mrb[0].mxu0 %v2532
        %v2788 = vpop.f32.mrb[0].mxu0
        %v2789 = vadd.f32 %v2577, %v2788
        %v2790 = vpop.f32.mrb[0].mxu0
        %v2791 = vadd.f32 %v2581, %v2790
        %v2792 = vpop.f32.mrb[0].mxu0
        %v2793 = vadd.f32 %v2577, %v2792
        %v2794 = vpop.f32.mrb[0].mxu0
        %v2795 = vadd.f32 %v2581, %v2794
        %2796 = vmatprep.mubr.bf16.mxu0 0
        %2797 = vmatmul.mubr.bf16.gmra.mrb[0].mxu0 %v2533
        %v2798 = vpop.f32.mrb[0].mxu0
        %v2799 = vadd.f32 %v2577, %v2798
        %v2800 = vpop.f32.mrb[0].mxu0
        %v2801 = vadd.f32 %v2581, %v2800
        %v2802 = vpop.f32.mrb[0].mxu0
        %v2803 = vadd.f32 %v2577, %v2802
        %v2804 = vpop.f32.mrb[0].mxu0
        %v2805 = vadd.f32 %v2581, %v2804
        %2806 = vmatprep.mubr.bf16.mxu0 0
        %2807 = vmatmul.mubr.bf16.gmra.mrb[0].mxu0 %v2534
        %v2808 = vpop.f32.mrb[0].mxu0
        %v2809 = vadd.f32 %v2577, %v2808
        %v2810 = vpop.f32.mrb[0].mxu0
        %v2811 = vadd.f32 %v2581, %v2810
        %v2812 = vpop.f32.mrb[0].mxu0
        %v2813 = vadd.f32 %v2577, %v2812
        %v2814 = vpop.f32.mrb[0].mxu0
        %v2815 = vadd.f32 %v2581, %v2814
        %2816 = vmatprep.mubr.bf16.mxu0 0
        %2817 = vmatmul.mubr.bf16.gmra.mrb[0].mxu0 %v2535
        %v2818 = vpop.f32.mrb[0].mxu0
        %v2819 = vadd.f32 %v2577, %v2818
        %v2820 = vpop.f32.mrb[0].mxu0
        %v2821 = vadd.f32 %v2581, %v2820
        %v2822 = vpop.f32.mrb[0].mxu0
        %v2823 = vadd.f32 %v2577, %v2822
        %v2824 = vpop.f32.mrb[0].mxu0
        %v2825 = vadd.f32 %v2581, %v2824
        %2826 = vmatprep.mubr.bf16.mxu0 0
        %2827 = vmatmul.mubr.bf16.gmra.mrb[0].mxu0 %v2536
        %v2828 = vpop.f32.mrb[0].mxu0
        %v2829 = vadd.f32 %v2577, %v2828
        %v2830 = vpop.f32.mrb[0].mxu0
        %v2831 = vadd.f32 %v2581, %v2830
        %v2832 = vpop.f32.mrb[0].mxu0
        %v2833 = vadd.f32 %v2577, %v2832
        %v2834 = vpop.f32.mrb[0].mxu0
        %v2835 = vadd.f32 %v2581, %v2834
        %2836 = vmatprep.mubr.bf16.mxu0 0
        %2837 = vmatmul.mubr.bf16.gmra.mrb[0].mxu0 %v2537
        %v2838 = vpop.f32.mrb[0].mxu0
        %v2839 = vadd.f32 %v2577, %v2838
        %v2840 = vpop.f32.mrb[0].mxu0
        %v2841 = vadd.f32 %v2581, %v2840
        %v2842 = vpop.f32.mrb[0].mxu0
        %v2843 = vadd.f32 %v2577, %v2842
        %v2844 = vpop.f32.mrb[0].mxu0
        %v2845 = vadd.f32 %v2581, %v2844
        %2846 = vmatprep.mubr.bf16.mxu0 0
        %2847 = vmatmul.mubr.bf16.gmra.mrb[0].mxu0 %v2538
        %v2848 = vpop.f32.mrb[0].mxu0
        %v2849 = vadd.f32 %v2577, %v2848
        %v2850 = vpop.f32.mrb[0].mxu0
        %v2851 = vadd.f32 %v2581, %v2850
        %v2852 = vpop.f32.mrb[0].mxu0
        %v2853 = vadd.f32 %v2577, %v2852
        %v2854 = vpop.f32.mrb[0].mxu0
        %v2855 = vadd.f32 %v2581, %v2854
        %2856 = vmatprep.mubr.bf16.mxu0 0
        %2857 = vmatmul.mubr.bf16.gmra.mrb[0].mxu0 %v2539
        %v2858 = vpop.f32.mrb[0].mxu0
        %v2859 = vadd.f32 %v2577, %v2858
        %v2860 = vpop.f32.mrb[0].mxu0
        %v2861 = vadd.f32 %v2581, %v2860
        %v2862 = vpop.f32.mrb[0].mxu0
        %v2863 = vadd.f32 %v2577, %v2862
        %v2864 = vpop.f32.mrb[0].mxu0
        %v2865 = vadd.f32 %v2581, %v2864
        %2866 = vdwg.mxu0
        %2867 = vmatprep.subr.bf16.mxu0 %v2693
        %2868 = vmatpush1.bf16.msra.mxu0 %v2692
        %2869 = vmatprep.subr.bf16.mxu0 %v2697
        %2870 = vmatpush1.bf16.msra.mxu0 %v2696
        %2871 = vmatprep.subr.bf16.mxu0 %v2701
        %2872 = vmatpush1.bf16.msra.mxu0 %v2700
        %2873 = vmatprep.subr.bf16.mxu0 %v2705
        %2874 = vmatpush1.bf16.msra.mxu0 %v2704
        %2875 = vmatprep.subr.bf16.mxu0 %v2709
        %2876 = vmatpush1.bf16.msra.mxu0 %v2708
        %2877 = vmatprep.subr.bf16.mxu0 %v2713
        %2878 = vmatpush1.bf16.msra.mxu0 %v2712
        %2879 = vmatprep.subr.bf16.mxu0 %v2717
        %2880 = vmatpush1.bf16.msra.mxu0 %v2716
        %2881 = vmatprep.subr.bf16.mxu0 %v2721
        %2882 = vmatpush1.bf16.msra.mxu0 %v2720
        %2883 = vmatprep.subr.bf16.mxu0 0
        %2884 = vmatpush1.bf16.msra.mxu0 0
        %2885 = vmatprep.subr.bf16.mxu0 0
        %2886 = vmatpush1.bf16.msra.mxu0 0
        %2887 = vmatprep.subr.bf16.mxu0 0
        %2888 = vmatpush1.bf16.msra.mxu0 0
        %2889 = vmatprep.subr.bf16.mxu0 0
        %2890 = vmatpush1.bf16.msra.mxu0 0
        %2891 = vmatprep.subr.bf16.mxu0 0
        %2892 = vmatpush1.bf16.msra.mxu0 0
        %2893 = vmatprep.subr.bf16.mxu0 0
        %2894 = vmatpush1.bf16.msra.mxu0 0
        %2895 = vmatprep.subr.bf16.mxu0 0
        %2896 = vmatpush1.bf16.msra.mxu0 0
        %2897 = vmatprep.subr.bf16.mxu0 0
        %2898 = vmatpush1.bf16.msra.mxu0 0
        %2899 = vmatprep.mubr.bf16.mxu0 0
        %2900 = vmatmul.mubr.bf16.gmra.mrb[0].mxu0 %v2532
        %v2901 = vpop.f32.mrb[0].mxu0
        %v2902 = vadd.f32 %v2585, %v2901
        %v2903 = vpop.f32.mrb[0].mxu0
        %v2904 = vadd.f32 %v2589, %v2903
        %v2905 = vpop.f32.mrb[0].mxu0
        %v2906 = vadd.f32 %v2585, %v2905
        %v2907 = vpop.f32.mrb[0].mxu0
        %v2908 = vadd.f32 %v2589, %v2907
        %2909 = vmatprep.mubr.bf16.mxu0 0
        %2910 = vmatmul.mubr.bf16.gmra.mrb[0].mxu0 %v2533
        %v2911 = vpop.f32.mrb[0].mxu0
        %v2912 = vadd.f32 %v2585, %v2911
        %v2913 = vpop.f32.mrb[0].mxu0
        %v2914 = vadd.f32 %v2589, %v2913
        %v2915 = vpop.f32.mrb[0].mxu0
        %v2916 = vadd.f32 %v2585, %v2915
        %v2917 = vpop.f32.mrb[0].mxu0
        %v2918 = vadd.f32 %v2589, %v2917
        %2919 = vmatprep.mubr.bf16.mxu0 0
        %2920 = vmatmul.mubr.bf16.gmra.mrb[0].mxu0 %v2534
        %v2921 = vpop.f32.mrb[0].mxu0
        %v2922 = vadd.f32 %v2585, %v2921
        %v2923 = vpop.f32.mrb[0].mxu0
        %v2924 = vadd.f32 %v2589, %v2923
        %v2925 = vpop.f32.mrb[0].mxu0
        %v2926 = vadd.f32 %v2585, %v2925
        %v2927 = vpop.f32.mrb[0].mxu0
        %v2928 = vadd.f32 %v2589, %v2927
        %2929 = vmatprep.mubr.bf16.mxu0 0
        %2930 = vmatmul.mubr.bf16.gmra.mrb[0].mxu0 %v2535
        %v2931 = vpop.f32.mrb[0].mxu0
        %v2932 = vadd.f32 %v2585, %v2931
        %v2933 = vpop.f32.mrb[0].mxu0
        %v2934 = vadd.f32 %v2589, %v2933
        %v2935 = vpop.f32.mrb[0].mxu0
        %v2936 = vadd.f32 %v2585, %v2935
        %v2937 = vpop.f32.mrb[0].mxu0
        %v2938 = vadd.f32 %v2589, %v2937
        %2939 = vmatprep.mubr.bf16.mxu0 0
        %2940 = vmatmul.mubr.bf16.gmra.mrb[0].mxu0 %v2536
        %v2941 = vpop.f32.mrb[0].mxu0
        %v2942 = vadd.f32 %v2585, %v2941
        %v2943 = vpop.f32.mrb[0].mxu0
        %v2944 = vadd.f32 %v2589, %v2943
        %v2945 = vpop.f32.mrb[0].mxu0
        %v2946 = vadd.f32 %v2585, %v2945
        %v2947 = vpop.f32.mrb[0].mxu0
        %v2948 = vadd.f32 %v2589, %v2947
        %2949 = vmatprep.mubr.bf16.mxu0 0
        %2950 = vmatmul.mubr.bf16.gmra.mrb[0].mxu0 %v2537
        %v2951 = vpop.f32.mrb[0].mxu0
        %v2952 = vadd.f32 %v2585, %v2951
        %v2953 = vpop.f32.mrb[0].mxu0
        %v2954 = vadd.f32 %v2589, %v2953
        %v2955 = vpop.f32.mrb[0].mxu0
        %v2956 = vadd.f32 %v2585, %v2955
        %v2957 = vpop.f32.mrb[0].mxu0
        %v2958 = vadd.f32 %v2589, %v2957
        %2959 = vmatprep.mubr.bf16.mxu0 0
        %2960 = vmatmul.mubr.bf16.gmra.mrb[0].mxu0 %v2538
        %v2961 = vpop.f32.mrb[0].mxu0
        %v2962 = vadd.f32 %v2585, %v2961
        %v2963 = vpop.f32.mrb[0].mxu0
        %v2964 = vadd.f32 %v2589, %v2963
        %v2965 = vpop.f32.mrb[0].mxu0
        %v2966 = vadd.f32 %v2585, %v2965
        %v2967 = vpop.f32.mrb[0].mxu0
        %v2968 = vadd.f32 %v2589, %v2967
        %2969 = vmatprep.mubr.bf16.mxu0 0
        %2970 = vmatmul.mubr.bf16.gmra.mrb[0].mxu0 %v2539
        %v2971 = vpop.f32.mrb[0].mxu0
        %v2972 = vadd.f32 %v2585, %v2971
        %v2973 = vpop.f32.mrb[0].mxu0
        %v2974 = vadd.f32 %v2589, %v2973
        %v2975 = vpop.f32.mrb[0].mxu0
        %v2976 = vadd.f32 %v2585, %v2975
        %v2977 = vpop.f32.mrb[0].mxu0
        %v2978 = vadd.f32 %v2589, %v2977
        %2979 = vdwg.mxu0
        %vm2980 = vcmp.ge.f32.partialorder %v2789, 0.0
        %vm2981 = vcmp.ge.f32.partialorder %v2791, 0.0
        %vm2982 = vcmp.ge.f32.partialorder %v2902, 0.0
        %vm2983 = vcmp.ge.f32.partialorder %v2904, 0.0
        %vm2984 = vcmp.ge.f32.partialorder %v2793, 0.0
        %vm2985 = vcmp.ge.f32.partialorder %v2795, 0.0
        %vm2986 = vcmp.ge.f32.partialorder %v2906, 0.0
        %vm2987 = vcmp.ge.f32.partialorder %v2908, 0.0
        %vm2988 = vcmp.ge.f32.partialorder %v2799, 0.0
        %vm2989 = vcmp.ge.f32.partialorder %v2801, 0.0
        %vm2990 = vcmp.ge.f32.partialorder %v2912, 0.0
        %vm2991 = vcmp.ge.f32.partialorder %v2914, 0.0
        %vm2992 = vcmp.ge.f32.partialorder %v2803, 0.0
        %vm2993 = vcmp.ge.f32.partialorder %v2805, 0.0
        %vm2994 = vcmp.ge.f32.partialorder %v2916, 0.0
        %vm2995 = vcmp.ge.f32.partialorder %v2918, 0.0
        %vm2996 = vcmp.ge.f32.partialorder %v2809, 0.0
        %vm2997 = vcmp.ge.f32.partialorder %v2811, 0.0
        %vm2998 = vcmp.ge.f32.partialorder %v2922, 0.0
        %vm2999 = vcmp.ge.f32.partialorder %v2924, 0.0
        %vm3000 = vcmp.ge.f32.partialorder %v2813, 0.0
        %vm3001 = vcmp.ge.f32.partialorder %v2815, 0.0
        %vm3002 = vcmp.ge.f32.partialorder %v2926, 0.0
        %vm3003 = vcmp.ge.f32.partialorder %v2928, 0.0
        %vm3004 = vcmp.ge.f32.partialorder %v2819, 0.0
        %vm3005 = vcmp.ge.f32.partialorder %v2821, 0.0
        %vm3006 = vcmp.ge.f32.partialorder %v2932, 0.0
        %vm3007 = vcmp.ge.f32.partialorder %v2934, 0.0
        %vm3008 = vcmp.ge.f32.partialorder %v2823, 0.0
        %vm3009 = vcmp.ge.f32.partialorder %v2825, 0.0
        %vm3010 = vcmp.ge.f32.partialorder %v2936, 0.0
        %vm3011 = vcmp.ge.f32.partialorder %v2938, 0.0
        %vm3012 = vcmp.ge.f32.partialorder %v2829, 0.0
        %vm3013 = vcmp.ge.f32.partialorder %v2831, 0.0
        %vm3014 = vcmp.ge.f32.partialorder %v2942, 0.0
        %vm3015 = vcmp.ge.f32.partialorder %v2944, 0.0
        %vm3016 = vcmp.ge.f32.partialorder %v2833, 0.0
        %vm3017 = vcmp.ge.f32.partialorder %v2835, 0.0
        %vm3018 = vcmp.ge.f32.partialorder %v2946, 0.0
        %vm3019 = vcmp.ge.f32.partialorder %v2948, 0.0
        %vm3020 = vcmp.ge.f32.partialorder %v2839, 0.0
        %vm3021 = vcmp.ge.f32.partialorder %v2841, 0.0
        %vm3022 = vcmp.ge.f32.partialorder %v2952, 0.0
        %vm3023 = vcmp.ge.f32.partialorder %v2954, 0.0
        %vm3024 = vcmp.ge.f32.partialorder %v2843, 0.0
        %vm3025 = vcmp.ge.f32.partialorder %v2845, 0.0
        %vm3026 = vcmp.ge.f32.partialorder %v2956, 0.0
        %vm3027 = vcmp.ge.f32.partialorder %v2958, 0.0
        %vm3028 = vcmp.ge.f32.partialorder %v2849, 0.0
        %vm3029 = vcmp.ge.f32.partialorder %v2851, 0.0
        %vm3030 = vcmp.ge.f32.partialorder %v2962, 0.0
        %vm3031 = vcmp.ge.f32.partialorder %v2964, 0.0
        %vm3032 = vcmp.ge.f32.partialorder %v2853, 0.0
        %vm3033 = vcmp.ge.f32.partialorder %v2855, 0.0
        %vm3034 = vcmp.ge.f32.partialorder %v2966, 0.0
        %vm3035 = vcmp.ge.f32.partialorder %v2968, 0.0
        %vm3036 = vcmp.ge.f32.partialorder %v2859, 0.0
        %vm3037 = vcmp.ge.f32.partialorder %v2861, 0.0
        %vm3038 = vcmp.ge.f32.partialorder %v2972, 0.0
        %vm3039 = vcmp.ge.f32.partialorder %v2974, 0.0
        %vm3040 = vcmp.ge.f32.partialorder %v2863, 0.0
        %vm3041 = vcmp.ge.f32.partialorder %v2865, 0.0
        %vm3042 = vcmp.ge.f32.partialorder %v2976, 0.0
        %vm3043 = vcmp.ge.f32.partialorder %v2978, 0.0
        %v3044 = vsel %vm2980, 1.0, -1.0
        %v3045 = vsel %vm2981, 1.0, -1.0
        %v3046 = vsel %vm2982, 1.0, -1.0
        %v3047 = vsel %vm2983, 1.0, -1.0
        %v3048 = vsel %vm2984, 1.0, -1.0
        %v3049 = vsel %vm2985, 1.0, -1.0
        %v3050 = vsel %vm2986, 1.0, -1.0
        %v3051 = vsel %vm2987, 1.0, -1.0
        %v3052 = vsel %vm2988, 1.0, -1.0
        %v3053 = vsel %vm2989, 1.0, -1.0
        %v3054 = vsel %vm2990, 1.0, -1.0
        %v3055 = vsel %vm2991, 1.0, -1.0
        %v3056 = vsel %vm2992, 1.0, -1.0
        %v3057 = vsel %vm2993, 1.0, -1.0
        %v3058 = vsel %vm2994, 1.0, -1.0
        %v3059 = vsel %vm2995, 1.0, -1.0
        %v3060 = vsel %vm2996, 1.0, -1.0
        %v3061 = vsel %vm2997, 1.0, -1.0
        %v3062 = vsel %vm2998, 1.0, -1.0
        %v3063 = vsel %vm2999, 1.0, -1.0
        %v3064 = vsel %vm3000, 1.0, -1.0
        %v3065 = vsel %vm3001, 1.0, -1.0
        %v3066 = vsel %vm3002, 1.0, -1.0
        %v3067 = vsel %vm3003, 1.0, -1.0
        %v3068 = vsel %vm3004, 1.0, -1.0
        %v3069 = vsel %vm3005, 1.0, -1.0
        %v3070 = vsel %vm3006, 1.0, -1.0
        %v3071 = vsel %vm3007, 1.0, -1.0
        %v3072 = vsel %vm3008, 1.0, -1.0
        %v3073 = vsel %vm3009, 1.0, -1.0
        %v3074 = vsel %vm3010, 1.0, -1.0
        %v3075 = vsel %vm3011, 1.0, -1.0
        %v3076 = vsel %vm3012, 1.0, -1.0
        %v3077 = vsel %vm3013, 1.0, -1.0
        %v3078 = vsel %vm3014, 1.0, -1.0
        %v3079 = vsel %vm3015, 1.0, -1.0
        %v3080 = vsel %vm3016, 1.0, -1.0
        %v3081 = vsel %vm3017, 1.0, -1.0
        %v3082 = vsel %vm3018, 1.0, -1.0
        %v3083 = vsel %vm3019, 1.0, -1.0
        %v3084 = vsel %vm3020, 1.0, -1.0
        %v3085 = vsel %vm3021, 1.0, -1.0
        %v3086 = vsel %vm3022, 1.0, -1.0
        %v3087 = vsel %vm3023, 1.0, -1.0
        %v3088 = vsel %vm3024, 1.0, -1.0
        %v3089 = vsel %vm3025, 1.0, -1.0
        %v3090 = vsel %vm3026, 1.0, -1.0
        %v3091 = vsel %vm3027, 1.0, -1.0
        %v3092 = vsel %vm3028, 1.0, -1.0
        %v3093 = vsel %vm3029, 1.0, -1.0
        %v3094 = vsel %vm3030, 1.0, -1.0
        %v3095 = vsel %vm3031, 1.0, -1.0
        %v3096 = vsel %vm3032, 1.0, -1.0
        %v3097 = vsel %vm3033, 1.0, -1.0
        %v3098 = vsel %vm3034, 1.0, -1.0
        %v3099 = vsel %vm3035, 1.0, -1.0
        %v3100 = vsel %vm3036, 1.0, -1.0
        %v3101 = vsel %vm3037, 1.0, -1.0
        %v3102 = vsel %vm3038, 1.0, -1.0
        %v3103 = vsel %vm3039, 1.0, -1.0
        %v3104 = vsel %vm3040, 1.0, -1.0
        %v3105 = vsel %vm3041, 1.0, -1.0
        %v3106 = vsel %vm3042, 1.0, -1.0
        %v3107 = vsel %vm3043, 1.0, -1.0
        %v3108 = vand.u32 2147483647, %v2789
        %v3109 = vand.u32 2147483647, %v2791
        %v3110 = vand.u32 2147483647, %v2902
        %v3111 = vand.u32 2147483647, %v2904
        %v3112 = vand.u32 2147483647, %v2793
        %v3113 = vand.u32 2147483647, %v2795
        %v3114 = vand.u32 2147483647, %v2906
        %v3115 = vand.u32 2147483647, %v2908
        %v3116 = vand.u32 2147483647, %v2799
        %v3117 = vand.u32 2147483647, %v2801
        %v3118 = vand.u32 2147483647, %v2912
        %v3119 = vand.u32 2147483647, %v2914
        %v3120 = vand.u32 2147483647, %v2803
        %v3121 = vand.u32 2147483647, %v2805
        %v3122 = vand.u32 2147483647, %v2916
        %v3123 = vand.u32 2147483647, %v2918
        %v3124 = vand.u32 2147483647, %v2809
        %v3125 = vand.u32 2147483647, %v2811
        %v3126 = vand.u32 2147483647, %v2922
        %v3127 = vand.u32 2147483647, %v2924
        %v3128 = vand.u32 2147483647, %v2813
        %v3129 = vand.u32 2147483647, %v2815
        %v3130 = vand.u32 2147483647, %v2926
        %v3131 = vand.u32 2147483647, %v2928
        %v3132 = vand.u32 2147483647, %v2819
        %v3133 = vand.u32 2147483647, %v2821
        %v3134 = vand.u32 2147483647, %v2932
        %v3135 = vand.u32 2147483647, %v2934
        %v3136 = vand.u32 2147483647, %v2823
        %v3137 = vand.u32 2147483647, %v2825
        %v3138 = vand.u32 2147483647, %v2936
        %v3139 = vand.u32 2147483647, %v2938
        %v3140 = vand.u32 2147483647, %v2829
        %v3141 = vand.u32 2147483647, %v2831
        %v3142 = vand.u32 2147483647, %v2942
        %v3143 = vand.u32 2147483647, %v2944
        %v3144 = vand.u32 2147483647, %v2833
        %v3145 = vand.u32 2147483647, %v2835
        %v3146 = vand.u32 2147483647, %v2946
        %v3147 = vand.u32 2147483647, %v2948
        %v3148 = vand.u32 2147483647, %v2839
        %v3149 = vand.u32 2147483647, %v2841
        %v3150 = vand.u32 2147483647, %v2952
        %v3151 = vand.u32 2147483647, %v2954
        %v3152 = vand.u32 2147483647, %v2843
        %v3153 = vand.u32 2147483647, %v2845
        %v3154 = vand.u32 2147483647, %v2956
        %v3155 = vand.u32 2147483647, %v2958
        %v3156 = vand.u32 2147483647, %v2849
        %v3157 = vand.u32 2147483647, %v2851
        %v3158 = vand.u32 2147483647, %v2962
        %v3159 = vand.u32 2147483647, %v2964
        %v3160 = vand.u32 2147483647, %v2853
        %v3161 = vand.u32 2147483647, %v2855
        %v3162 = vand.u32 2147483647, %v2966
        %v3163 = vand.u32 2147483647, %v2968
        %v3164 = vand.u32 2147483647, %v2859
        %v3165 = vand.u32 2147483647, %v2861
        %v3166 = vand.u32 2147483647, %v2972
        %v3167 = vand.u32 2147483647, %v2974
        %v3168 = vand.u32 2147483647, %v2863
        %v3169 = vand.u32 2147483647, %v2865
        %v3170 = vand.u32 2147483647, %v2976
        %v3171 = vand.u32 2147483647, %v2978
        %v3172 = vmul.f32 %v3108, 0.3275911
        %v3173 = vmul.f32 %v3109, 0.3275911
        %v3174 = vmul.f32 %v3110, 0.3275911
        %v3175 = vmul.f32 %v3111, 0.3275911
        %v3176 = vmul.f32 %v3112, 0.3275911
        %v3177 = vmul.f32 %v3113, 0.3275911
        %v3178 = vmul.f32 %v3114, 0.3275911
        %v3179 = vmul.f32 %v3115, 0.3275911
        %v3180 = vmul.f32 %v3116, 0.3275911
        %v3181 = vmul.f32 %v3117, 0.3275911
        %v3182 = vmul.f32 %v3118, 0.3275911
        %v3183 = vmul.f32 %v3119, 0.3275911
        %v3184 = vmul.f32 %v3120, 0.3275911
        %v3185 = vmul.f32 %v3121, 0.3275911
        %v3186 = vmul.f32 %v3122, 0.3275911
        %v3187 = vmul.f32 %v3123, 0.3275911
        %v3188 = vmul.f32 %v3124, 0.3275911
        %v3189 = vmul.f32 %v3125, 0.3275911
        %v3190 = vmul.f32 %v3126, 0.3275911
        %v3191 = vmul.f32 %v3127, 0.3275911
        %v3192 = vmul.f32 %v3128, 0.3275911
        %v3193 = vmul.f32 %v3129, 0.3275911
        %v3194 = vmul.f32 %v3130, 0.3275911
        %v3195 = vmul.f32 %v3131, 0.3275911
        %v3196 = vmul.f32 %v3132, 0.3275911
        %v3197 = vmul.f32 %v3133, 0.3275911
        %v3198 = vmul.f32 %v3134, 0.3275911
        %v3199 = vmul.f32 %v3135, 0.3275911
        %v3200 = vmul.f32 %v3136, 0.3275911
        %v3201 = vmul.f32 %v3137, 0.3275911
        %v3202 = vmul.f32 %v3138, 0.3275911
        %v3203 = vmul.f32 %v3139, 0.3275911
        %v3204 = vmul.f32 %v3140, 0.3275911
        %v3205 = vmul.f32 %v3141, 0.3275911
        %v3206 = vmul.f32 %v3142, 0.3275911
        %v3207 = vmul.f32 %v3143, 0.3275911
        %v3208 = vmul.f32 %v3144, 0.3275911
        %v3209 = vmul.f32 %v3145, 0.3275911
        %v3210 = vmul.f32 %v3146, 0.3275911
        %v3211 = vmul.f32 %v3147, 0.3275911
        %v3212 = vmul.f32 %v3148, 0.3275911
        %v3213 = vmul.f32 %v3149, 0.3275911
        %v3214 = vmul.f32 %v3150, 0.3275911
        %v3215 = vmul.f32 %v3151, 0.3275911
        %v3216 = vmul.f32 %v3152, 0.3275911
        %v3217 = vmul.f32 %v3153, 0.3275911
        %v3218 = vmul.f32 %v3154, 0.3275911
        %v3219 = vmul.f32 %v3155, 0.3275911
        %v3220 = vmul.f32 %v3156, 0.3275911
        %v3221 = vmul.f32 %v3157, 0.3275911
        %v3222 = vmul.f32 %v3158, 0.3275911
        %v3223 = vmul.f32 %v3159, 0.3275911
        %v3224 = vmul.f32 %v3160, 0.3275911
        %v3225 = vmul.f32 %v3161, 0.3275911
        %v3226 = vmul.f32 %v3162, 0.3275911
        %v3227 = vmul.f32 %v3163, 0.3275911
        %v3228 = vmul.f32 %v3164, 0.3275911
        %v3229 = vmul.f32 %v3165, 0.3275911
        %v3230 = vmul.f32 %v3166, 0.3275911
        %v3231 = vmul.f32 %v3167, 0.3275911
        %v3232 = vmul.f32 %v3168, 0.3275911
        %v3233 = vmul.f32 %v3169, 0.3275911
        %v3234 = vmul.f32 %v3170, 0.3275911
        %v3235 = vmul.f32 %v3171, 0.3275911
        %v3236 = vadd.f32 %v3172, 1.0
        %v3237 = vadd.f32 %v3173, 1.0
        %v3238 = vadd.f32 %v3174, 1.0
        %v3239 = vadd.f32 %v3175, 1.0
        %v3240 = vadd.f32 %v3176, 1.0
        %v3241 = vadd.f32 %v3177, 1.0
        %v3242 = vadd.f32 %v3178, 1.0
        %v3243 = vadd.f32 %v3179, 1.0
        %v3244 = vadd.f32 %v3180, 1.0
        %v3245 = vadd.f32 %v3181, 1.0
        %v3246 = vadd.f32 %v3182, 1.0
        %v3247 = vadd.f32 %v3183, 1.0
        %v3248 = vadd.f32 %v3184, 1.0
        %v3249 = vadd.f32 %v3185, 1.0
        %v3250 = vadd.f32 %v3186, 1.0
        %v3251 = vadd.f32 %v3187, 1.0
        %v3252 = vadd.f32 %v3188, 1.0
        %v3253 = vadd.f32 %v3189, 1.0
        %v3254 = vadd.f32 %v3190, 1.0
        %v3255 = vadd.f32 %v3191, 1.0
        %v3256 = vadd.f32 %v3192, 1.0
        %v3257 = vadd.f32 %v3193, 1.0
        %v3258 = vadd.f32 %v3194, 1.0
        %v3259 = vadd.f32 %v3195, 1.0
        %v3260 = vadd.f32 %v3196, 1.0
        %v3261 = vadd.f32 %v3197, 1.0
        %v3262 = vadd.f32 %v3198, 1.0
        %v3263 = vadd.f32 %v3199, 1.0
        %v3264 = vadd.f32 %v3200, 1.0
        %v3265 = vadd.f32 %v3201, 1.0
        %v3266 = vadd.f32 %v3202, 1.0
        %v3267 = vadd.f32 %v3203, 1.0
        %v3268 = vadd.f32 %v3204, 1.0
        %v3269 = vadd.f32 %v3205, 1.0
        %v3270 = vadd.f32 %v3206, 1.0
        %v3271 = vadd.f32 %v3207, 1.0
        %v3272 = vadd.f32 %v3208, 1.0
        %v3273 = vadd.f32 %v3209, 1.0
        %v3274 = vadd.f32 %v3210, 1.0
        %v3275 = vadd.f32 %v3211, 1.0
        %v3276 = vadd.f32 %v3212, 1.0
        %v3277 = vadd.f32 %v3213, 1.0
        %v3278 = vadd.f32 %v3214, 1.0
        %v3279 = vadd.f32 %v3215, 1.0
        %v3280 = vadd.f32 %v3216, 1.0
        %v3281 = vadd.f32 %v3217, 1.0
        %v3282 = vadd.f32 %v3218, 1.0
        %v3283 = vadd.f32 %v3219, 1.0
        %v3284 = vadd.f32 %v3220, 1.0
        %v3285 = vadd.f32 %v3221, 1.0
        %v3286 = vadd.f32 %v3222, 1.0
        %v3287 = vadd.f32 %v3223, 1.0
        %v3288 = vadd.f32 %v3224, 1.0
        %v3289 = vadd.f32 %v3225, 1.0
        %v3290 = vadd.f32 %v3226, 1.0
        %v3291 = vadd.f32 %v3227, 1.0
        %v3292 = vadd.f32 %v3228, 1.0
        %v3293 = vadd.f32 %v3229, 1.0
        %v3294 = vadd.f32 %v3230, 1.0
        %v3295 = vadd.f32 %v3231, 1.0
        %v3296 = vadd.f32 %v3232, 1.0
        %v3297 = vadd.f32 %v3233, 1.0
        %v3298 = vadd.f32 %v3234, 1.0
        %v3299 = vadd.f32 %v3235, 1.0
        %v3300 = vrcp.pop %v3236
        %v3301 = vrcp.pop %v3237
        %v3302 = vrcp.pop %v3238
        %v3303 = vrcp.pop %v3239
        %v3304 = vrcp.pop %v3240
        %v3305 = vrcp.pop %v3241
        %v3306 = vrcp.pop %v3242
        %v3307 = vrcp.pop %v3243
        %v3308 = vrcp.pop %v3244
        %v3309 = vrcp.pop %v3245
        %v3310 = vrcp.pop %v3246
        %v3311 = vrcp.pop %v3247
        %v3312 = vrcp.pop %v3248
        %v3313 = vrcp.pop %v3249
        %v3314 = vrcp.pop %v3250
        %v3315 = vrcp.pop %v3251
        %v3316 = vrcp.pop %v3252
        %v3317 = vrcp.pop %v3253
        %v3318 = vrcp.pop %v3254
        %v3319 = vrcp.pop %v3255
        %v3320 = vrcp.pop %v3256
        %v3321 = vrcp.pop %v3257
        %v3322 = vrcp.pop %v3258
        %v3323 = vrcp.pop %v3259
        %v3324 = vrcp.pop %v3260
        %v3325 = vrcp.pop %v3261
        %v3326 = vrcp.pop %v3262
        %v3327 = vrcp.pop %v3263
        %v3328 = vrcp.pop %v3264
        %v3329 = vrcp.pop %v3265
        %v3330 = vrcp.pop %v3266
        %v3331 = vrcp.pop %v3267
        %v3332 = vrcp.pop %v3268
        %v3333 = vrcp.pop %v3269
        %v3334 = vrcp.pop %v3270
        %v3335 = vrcp.pop %v3271
        %v3336 = vrcp.pop %v3272
        %v3337 = vrcp.pop %v3273
        %v3338 = vrcp.pop %v3274
        %v3339 = vrcp.pop %v3275
        %v3340 = vrcp.pop %v3276
        %v3341 = vrcp.pop %v3277
        %v3342 = vrcp.pop %v3278
        %v3343 = vrcp.pop %v3279
        %v3344 = vrcp.pop %v3280
        %v3345 = vrcp.pop %v3281
        %v3346 = vrcp.pop %v3282
        %v3347 = vrcp.pop %v3283
        %v3348 = vrcp.pop %v3284
        %v3349 = vrcp.pop %v3285
        %v3350 = vrcp.pop %v3286
        %v3351 = vrcp.pop %v3287
        %v3352 = vrcp.pop %v3288
        %v3353 = vrcp.pop %v3289
        %v3354 = vrcp.pop %v3290
        %v3355 = vrcp.pop %v3291
        %v3356 = vrcp.pop %v3292
        %v3357 = vrcp.pop %v3293
        %v3358 = vrcp.pop %v3294
        %v3359 = vrcp.pop %v3295
        %v3360 = vrcp.pop %v3296
        %v3361 = vrcp.pop %v3297
        %v3362 = vrcp.pop %v3298
        %v3363 = vrcp.pop %v3299
        %v3364 = vmul.f32 %v3236, %v3300
        %v3365 = vmul.f32 %v3237, %v3301
        %v3366 = vmul.f32 %v3238, %v3302
        %v3367 = vmul.f32 %v3239, %v3303
        %v3368 = vmul.f32 %v3240, %v3304
        %v3369 = vmul.f32 %v3241, %v3305
        %v3370 = vmul.f32 %v3242, %v3306
        %v3371 = vmul.f32 %v3243, %v3307
        %v3372 = vmul.f32 %v3244, %v3308
        %v3373 = vmul.f32 %v3245, %v3309
        %v3374 = vmul.f32 %v3246, %v3310
        %v3375 = vmul.f32 %v3247, %v3311
        %v3376 = vmul.f32 %v3248, %v3312
        %v3377 = vmul.f32 %v3249, %v3313
        %v3378 = vmul.f32 %v3250, %v3314
        %v3379 = vmul.f32 %v3251, %v3315
        %v3380 = vmul.f32 %v3252, %v3316
        %v3381 = vmul.f32 %v3253, %v3317
        %v3382 = vmul.f32 %v3254, %v3318
        %v3383 = vmul.f32 %v3255, %v3319
        %v3384 = vmul.f32 %v3256, %v3320
        %v3385 = vmul.f32 %v3257, %v3321
        %v3386 = vmul.f32 %v3258, %v3322
        %v3387 = vmul.f32 %v3259, %v3323
        %v3388 = vmul.f32 %v3260, %v3324
        %v3389 = vmul.f32 %v3261, %v3325
        %v3390 = vmul.f32 %v3262, %v3326
        %v3391 = vmul.f32 %v3263, %v3327
        %v3392 = vmul.f32 %v3264, %v3328
        %v3393 = vmul.f32 %v3265, %v3329
        %v3394 = vmul.f32 %v3266, %v3330
        %v3395 = vmul.f32 %v3267, %v3331
        %v3396 = vmul.f32 %v3268, %v3332
        %v3397 = vmul.f32 %v3269, %v3333
        %v3398 = vmul.f32 %v3270, %v3334
        %v3399 = vmul.f32 %v3271, %v3335
        %v3400 = vmul.f32 %v3272, %v3336
        %v3401 = vmul.f32 %v3273, %v3337
        %v3402 = vmul.f32 %v3274, %v3338
        %v3403 = vmul.f32 %v3275, %v3339
        %v3404 = vmul.f32 %v3276, %v3340
        %v3405 = vmul.f32 %v3277, %v3341
        %v3406 = vmul.f32 %v3278, %v3342
        %v3407 = vmul.f32 %v3279, %v3343
        %v3408 = vmul.f32 %v3280, %v3344
        %v3409 = vmul.f32 %v3281, %v3345
        %v3410 = vmul.f32 %v3282, %v3346
        %v3411 = vmul.f32 %v3283, %v3347
        %v3412 = vmul.f32 %v3284, %v3348
        %v3413 = vmul.f32 %v3285, %v3349
        %v3414 = vmul.f32 %v3286, %v3350
        %v3415 = vmul.f32 %v3287, %v3351
        %v3416 = vmul.f32 %v3288, %v3352
        %v3417 = vmul.f32 %v3289, %v3353
        %v3418 = vmul.f32 %v3290, %v3354
        %v3419 = vmul.f32 %v3291, %v3355
        %v3420 = vmul.f32 %v3292, %v3356
        %v3421 = vmul.f32 %v3293, %v3357
        %v3422 = vmul.f32 %v3294, %v3358
        %v3423 = vmul.f32 %v3295, %v3359
        %v3424 = vmul.f32 %v3296, %v3360
        %v3425 = vmul.f32 %v3297, %v3361
        %v3426 = vmul.f32 %v3298, %v3362
        %v3427 = vmul.f32 %v3299, %v3363
        %v3428 = vsub.f32 2.0, %v3364
        %v3429 = vsub.f32 2.0, %v3365
        %v3430 = vsub.f32 2.0, %v3366
        %v3431 = vsub.f32 2.0, %v3367
        %v3432 = vsub.f32 2.0, %v3368
        %v3433 = vsub.f32 2.0, %v3369
        %v3434 = vsub.f32 2.0, %v3370
        %v3435 = vsub.f32 2.0, %v3371
        %v3436 = vsub.f32 2.0, %v3372
        %v3437 = vsub.f32 2.0, %v3373
        %v3438 = vsub.f32 2.0, %v3374
        %v3439 = vsub.f32 2.0, %v3375
        %v3440 = vsub.f32 2.0, %v3376
        %v3441 = vsub.f32 2.0, %v3377
        %v3442 = vsub.f32 2.0, %v3378
        %v3443 = vsub.f32 2.0, %v3379
        %v3444 = vsub.f32 2.0, %v3380
        %v3445 = vsub.f32 2.0, %v3381
        %v3446 = vsub.f32 2.0, %v3382
        %v3447 = vsub.f32 2.0, %v3383
        %v3448 = vsub.f32 2.0, %v3384
        %v3449 = vsub.f32 2.0, %v3385
        %v3450 = vsub.f32 2.0, %v3386
        %v3451 = vsub.f32 2.0, %v3387
        %v3452 = vsub.f32 2.0, %v3388
        %v3453 = vsub.f32 2.0, %v3389
        %v3454 = vsub.f32 2.0, %v3390
        %v3455 = vsub.f32 2.0, %v3391
        %v3456 = vsub.f32 2.0, %v3392
        %v3457 = vsub.f32 2.0, %v3393
        %v3458 = vsub.f32 2.0, %v3394
        %v3459 = vsub.f32 2.0, %v3395
        %v3460 = vsub.f32 2.0, %v3396
        %v3461 = vsub.f32 2.0, %v3397
        %v3462 = vsub.f32 2.0, %v3398
        %v3463 = vsub.f32 2.0, %v3399
        %v3464 = vsub.f32 2.0, %v3400
        %v3465 = vsub.f32 2.0, %v3401
        %v3466 = vsub.f32 2.0, %v3402
        %v3467 = vsub.f32 2.0, %v3403
        %v3468 = vsub.f32 2.0, %v3404
        %v3469 = vsub.f32 2.0, %v3405
        %v3470 = vsub.f32 2.0, %v3406
        %v3471 = vsub.f32 2.0, %v3407
        %v3472 = vsub.f32 2.0, %v3408
        %v3473 = vsub.f32 2.0, %v3409
        %v3474 = vsub.f32 2.0, %v3410
        %v3475 = vsub.f32 2.0, %v3411
        %v3476 = vsub.f32 2.0, %v3412
        %v3477 = vsub.f32 2.0, %v3413
        %v3478 = vsub.f32 2.0, %v3414
        %v3479 = vsub.f32 2.0, %v3415
        %v3480 = vsub.f32 2.0, %v3416
        %v3481 = vsub.f32 2.0, %v3417
        %v3482 = vsub.f32 2.0, %v3418
        %v3483 = vsub.f32 2.0, %v3419
        %v3484 = vsub.f32 2.0, %v3420
        %v3485 = vsub.f32 2.0, %v3421
        %v3486 = vsub.f32 2.0, %v3422
        %v3487 = vsub.f32 2.0, %v3423
        %v3488 = vsub.f32 2.0, %v3424
        %v3489 = vsub.f32 2.0, %v3425
        %v3490 = vsub.f32 2.0, %v3426
        %v3491 = vsub.f32 2.0, %v3427
        %v3492 = vmul.f32 %v3300, %v3428
        %v3493 = vmul.f32 %v3301, %v3429
        %v3494 = vmul.f32 %v3302, %v3430
        %v3495 = vmul.f32 %v3303, %v3431
        %v3496 = vmul.f32 %v3304, %v3432
        %v3497 = vmul.f32 %v3305, %v3433
        %v3498 = vmul.f32 %v3306, %v3434
        %v3499 = vmul.f32 %v3307, %v3435
        %v3500 = vmul.f32 %v3308, %v3436
        %v3501 = vmul.f32 %v3309, %v3437
        %v3502 = vmul.f32 %v3310, %v3438
        %v3503 = vmul.f32 %v3311, %v3439
        %v3504 = vmul.f32 %v3312, %v3440
        %v3505 = vmul.f32 %v3313, %v3441
        %v3506 = vmul.f32 %v3314, %v3442
        %v3507 = vmul.f32 %v3315, %v3443
        %v3508 = vmul.f32 %v3316, %v3444
        %v3509 = vmul.f32 %v3317, %v3445
        %v3510 = vmul.f32 %v3318, %v3446
        %v3511 = vmul.f32 %v3319, %v3447
        %v3512 = vmul.f32 %v3320, %v3448
        %v3513 = vmul.f32 %v3321, %v3449
        %v3514 = vmul.f32 %v3322, %v3450
        %v3515 = vmul.f32 %v3323, %v3451
        %v3516 = vmul.f32 %v3324, %v3452
        %v3517 = vmul.f32 %v3325, %v3453
        %v3518 = vmul.f32 %v3326, %v3454
        %v3519 = vmul.f32 %v3327, %v3455
        %v3520 = vmul.f32 %v3328, %v3456
        %v3521 = vmul.f32 %v3329, %v3457
        %v3522 = vmul.f32 %v3330, %v3458
        %v3523 = vmul.f32 %v3331, %v3459
        %v3524 = vmul.f32 %v3332, %v3460
        %v3525 = vmul.f32 %v3333, %v3461
        %v3526 = vmul.f32 %v3334, %v3462
        %v3527 = vmul.f32 %v3335, %v3463
        %v3528 = vmul.f32 %v3336, %v3464
        %v3529 = vmul.f32 %v3337, %v3465
        %v3530 = vmul.f32 %v3338, %v3466
        %v3531 = vmul.f32 %v3339, %v3467
        %v3532 = vmul.f32 %v3340, %v3468
        %v3533 = vmul.f32 %v3341, %v3469
        %v3534 = vmul.f32 %v3342, %v3470
        %v3535 = vmul.f32 %v3343, %v3471
        %v3536 = vmul.f32 %v3344, %v3472
        %v3537 = vmul.f32 %v3345, %v3473
        %v3538 = vmul.f32 %v3346, %v3474
        %v3539 = vmul.f32 %v3347, %v3475
        %v3540 = vmul.f32 %v3348, %v3476
        %v3541 = vmul.f32 %v3349, %v3477
        %v3542 = vmul.f32 %v3350, %v3478
        %v3543 = vmul.f32 %v3351, %v3479
        %v3544 = vmul.f32 %v3352, %v3480
        %v3545 = vmul.f32 %v3353, %v3481
        %v3546 = vmul.f32 %v3354, %v3482
        %v3547 = vmul.f32 %v3355, %v3483
        %v3548 = vmul.f32 %v3356, %v3484
        %v3549 = vmul.f32 %v3357, %v3485
        %v3550 = vmul.f32 %v3358, %v3486
        %v3551 = vmul.f32 %v3359, %v3487
        %v3552 = vmul.f32 %v3360, %v3488
        %v3553 = vmul.f32 %v3361, %v3489
        %v3554 = vmul.f32 %v3362, %v3490
        %v3555 = vmul.f32 %v3363, %v3491
        %v3556 = vmul.f32 %v3492, 1.0614054
        %v3557 = vmul.f32 %v3493, 1.0614054
        %v3558 = vmul.f32 %v3494, 1.0614054
        %v3559 = vmul.f32 %v3495, 1.0614054
        %v3560 = vmul.f32 %v3496, 1.0614054
        %v3561 = vmul.f32 %v3497, 1.0614054
        %v3562 = vmul.f32 %v3498, 1.0614054
        %v3563 = vmul.f32 %v3499, 1.0614054
        %v3564 = vmul.f32 %v3500, 1.0614054
        %v3565 = vmul.f32 %v3501, 1.0614054
        %v3566 = vmul.f32 %v3502, 1.0614054
        %v3567 = vmul.f32 %v3503, 1.0614054
        %v3568 = vmul.f32 %v3504, 1.0614054
        %v3569 = vmul.f32 %v3505, 1.0614054
        %v3570 = vmul.f32 %v3506, 1.0614054
        %v3571 = vmul.f32 %v3507, 1.0614054
        %v3572 = vmul.f32 %v3508, 1.0614054
        %v3573 = vmul.f32 %v3509, 1.0614054
        %v3574 = vmul.f32 %v3510, 1.0614054
        %v3575 = vmul.f32 %v3511, 1.0614054
        %v3576 = vmul.f32 %v3512, 1.0614054
        %v3577 = vmul.f32 %v3513, 1.0614054
        %v3578 = vmul.f32 %v3514, 1.0614054
        %v3579 = vmul.f32 %v3515, 1.0614054
        %v3580 = vmul.f32 %v3516, 1.0614054
        %v3581 = vmul.f32 %v3517, 1.0614054
        %v3582 = vmul.f32 %v3518, 1.0614054
        %v3583 = vmul.f32 %v3519, 1.0614054
        %v3584 = vmul.f32 %v3520, 1.0614054
        %v3585 = vmul.f32 %v3521, 1.0614054
        %v3586 = vmul.f32 %v3522, 1.0614054
        %v3587 = vmul.f32 %v3523, 1.0614054
        %v3588 = vmul.f32 %v3524, 1.0614054
        %v3589 = vmul.f32 %v3525, 1.0614054
        %v3590 = vmul.f32 %v3526, 1.0614054
        %v3591 = vmul.f32 %v3527, 1.0614054
        %v3592 = vmul.f32 %v3528, 1.0614054
        %v3593 = vmul.f32 %v3529, 1.0614054
        %v3594 = vmul.f32 %v3530, 1.0614054
        %v3595 = vmul.f32 %v3531, 1.0614054
        %v3596 = vmul.f32 %v3532, 1.0614054
        %v3597 = vmul.f32 %v3533, 1.0614054
        %v3598 = vmul.f32 %v3534, 1.0614054
        %v3599 = vmul.f32 %v3535, 1.0614054
        %v3600 = vmul.f32 %v3536, 1.0614054
        %v3601 = vmul.f32 %v3537, 1.0614054
        %v3602 = vmul.f32 %v3538, 1.0614054
        %v3603 = vmul.f32 %v3539, 1.0614054
        %v3604 = vmul.f32 %v3540, 1.0614054
        %v3605 = vmul.f32 %v3541, 1.0614054
        %v3606 = vmul.f32 %v3542, 1.0614054
        %v3607 = vmul.f32 %v3543, 1.0614054
        %v3608 = vmul.f32 %v3544, 1.0614054
        %v3609 = vmul.f32 %v3545, 1.0614054
        %v3610 = vmul.f32 %v3546, 1.0614054
        %v3611 = vmul.f32 %v3547, 1.0614054
        %v3612 = vmul.f32 %v3548, 1.0614054
        %v3613 = vmul.f32 %v3549, 1.0614054
        %v3614 = vmul.f32 %v3550, 1.0614054
        %v3615 = vmul.f32 %v3551, 1.0614054
        %v3616 = vmul.f32 %v3552, 1.0614054
        %v3617 = vmul.f32 %v3553, 1.0614054
        %v3618 = vmul.f32 %v3554, 1.0614054
        %v3619 = vmul.f32 %v3555, 1.0614054
        %v3620 = vadd.f32 %v3556, -1.4531521
        %v3621 = vadd.f32 %v3557, -1.4531521
        %v3622 = vadd.f32 %v3558, -1.4531521
        %v3623 = vadd.f32 %v3559, -1.4531521
        %v3624 = vadd.f32 %v3560, -1.4531521
        %v3625 = vadd.f32 %v3561, -1.4531521
        %v3626 = vadd.f32 %v3562, -1.4531521
        %v3627 = vadd.f32 %v3563, -1.4531521
        %v3628 = vadd.f32 %v3564, -1.4531521
        %v3629 = vadd.f32 %v3565, -1.4531521
        %v3630 = vadd.f32 %v3566, -1.4531521
        %v3631 = vadd.f32 %v3567, -1.4531521
        %v3632 = vadd.f32 %v3568, -1.4531521
        %v3633 = vadd.f32 %v3569, -1.4531521
        %v3634 = vadd.f32 %v3570, -1.4531521
        %v3635 = vadd.f32 %v3571, -1.4531521
        %v3636 = vadd.f32 %v3572, -1.4531521
        %v3637 = vadd.f32 %v3573, -1.4531521
        %v3638 = vadd.f32 %v3574, -1.4531521
        %v3639 = vadd.f32 %v3575, -1.4531521
        %v3640 = vadd.f32 %v3576, -1.4531521
        %v3641 = vadd.f32 %v3577, -1.4531521
        %v3642 = vadd.f32 %v3578, -1.4531521
        %v3643 = vadd.f32 %v3579, -1.4531521
        %v3644 = vadd.f32 %v3580, -1.4531521
        %v3645 = vadd.f32 %v3581, -1.4531521
        %v3646 = vadd.f32 %v3582, -1.4531521
        %v3647 = vadd.f32 %v3583, -1.4531521
        %v3648 = vadd.f32 %v3584, -1.4531521
        %v3649 = vadd.f32 %v3585, -1.4531521
        %v3650 = vadd.f32 %v3586, -1.4531521
        %v3651 = vadd.f32 %v3587, -1.4531521
        %v3652 = vadd.f32 %v3588, -1.4531521
        %v3653 = vadd.f32 %v3589, -1.4531521
        %v3654 = vadd.f32 %v3590, -1.4531521
        %v3655 = vadd.f32 %v3591, -1.4531521
        %v3656 = vadd.f32 %v3592, -1.4531521
        %v3657 = vadd.f32 %v3593, -1.4531521
        %v3658 = vadd.f32 %v3594, -1.4531521
        %v3659 = vadd.f32 %v3595, -1.4531521
        %v3660 = vadd.f32 %v3596, -1.4531521
        %v3661 = vadd.f32 %v3597, -1.4531521
        %v3662 = vadd.f32 %v3598, -1.4531521
        %v3663 = vadd.f32 %v3599, -1.4531521
        %v3664 = vadd.f32 %v3600, -1.4531521
        %v3665 = vadd.f32 %v3601, -1.4531521
        %v3666 = vadd.f32 %v3602, -1.4531521
        %v3667 = vadd.f32 %v3603, -1.4531521
        %v3668 = vadd.f32 %v3604, -1.4531521
        %v3669 = vadd.f32 %v3605, -1.4531521
        %v3670 = vadd.f32 %v3606, -1.4531521
        %v3671 = vadd.f32 %v3607, -1.4531521
        %v3672 = vadd.f32 %v3608, -1.4531521
        %v3673 = vadd.f32 %v3609, -1.4531521
        %v3674 = vadd.f32 %v3610, -1.4531521
        %v3675 = vadd.f32 %v3611, -1.4531521
        %v3676 = vadd.f32 %v3612, -1.4531521
        %v3677 = vadd.f32 %v3613, -1.4531521
        %v3678 = vadd.f32 %v3614, -1.4531521
        %v3679 = vadd.f32 %v3615, -1.4531521
        %v3680 = vadd.f32 %v3616, -1.4531521
        %v3681 = vadd.f32 %v3617, -1.4531521
        %v3682 = vadd.f32 %v3618, -1.4531521
        %v3683 = vadd.f32 %v3619, -1.4531521
        %v3684 = vmul.f32 %v3620, %v3492
        %v3685 = vmul.f32 %v3621, %v3493
        %v3686 = vmul.f32 %v3622, %v3494
        %v3687 = vmul.f32 %v3623, %v3495
        %v3688 = vmul.f32 %v3624, %v3496
        %v3689 = vmul.f32 %v3625, %v3497
        %v3690 = vmul.f32 %v3626, %v3498
        %v3691 = vmul.f32 %v3627, %v3499
        %v3692 = vmul.f32 %v3628, %v3500
        %v3693 = vmul.f32 %v3629, %v3501
        %v3694 = vmul.f32 %v3630, %v3502
        %v3695 = vmul.f32 %v3631, %v3503
        %v3696 = vmul.f32 %v3632, %v3504
        %v3697 = vmul.f32 %v3633, %v3505
        %v3698 = vmul.f32 %v3634, %v3506
        %v3699 = vmul.f32 %v3635, %v3507
        %v3700 = vmul.f32 %v3636, %v3508
        %v3701 = vmul.f32 %v3637, %v3509
        %v3702 = vmul.f32 %v3638, %v3510
        %v3703 = vmul.f32 %v3639, %v3511
        %v3704 = vmul.f32 %v3640, %v3512
        %v3705 = vmul.f32 %v3641, %v3513
        %v3706 = vmul.f32 %v3642, %v3514
        %v3707 = vmul.f32 %v3643, %v3515
        %v3708 = vmul.f32 %v3644, %v3516
        %v3709 = vmul.f32 %v3645, %v3517
        %v3710 = vmul.f32 %v3646, %v3518
        %v3711 = vmul.f32 %v3647, %v3519
        %v3712 = vmul.f32 %v3648, %v3520
        %v3713 = vmul.f32 %v3649, %v3521
        %v3714 = vmul.f32 %v3650, %v3522
        %v3715 = vmul.f32 %v3651, %v3523
        %v3716 = vmul.f32 %v3652, %v3524
        %v3717 = vmul.f32 %v3653, %v3525
        %v3718 = vmul.f32 %v3654, %v3526
        %v3719 = vmul.f32 %v3655, %v3527
        %v3720 = vmul.f32 %v3656, %v3528
        %v3721 = vmul.f32 %v3657, %v3529
        %v3722 = vmul.f32 %v3658, %v3530
        %v3723 = vmul.f32 %v3659, %v3531
        %v3724 = vmul.f32 %v3660, %v3532
        %v3725 = vmul.f32 %v3661, %v3533
        %v3726 = vmul.f32 %v3662, %v3534
        %v3727 = vmul.f32 %v3663, %v3535
        %v3728 = vmul.f32 %v3664, %v3536
        %v3729 = vmul.f32 %v3665, %v3537
        %v3730 = vmul.f32 %v3666, %v3538
        %v3731 = vmul.f32 %v3667, %v3539
        %v3732 = vmul.f32 %v3668, %v3540
        %v3733 = vmul.f32 %v3669, %v3541
        %v3734 = vmul.f32 %v3670, %v3542
        %v3735 = vmul.f32 %v3671, %v3543
        %v3736 = vmul.f32 %v3672, %v3544
        %v3737 = vmul.f32 %v3673, %v3545
        %v3738 = vmul.f32 %v3674, %v3546
        %v3739 = vmul.f32 %v3675, %v3547
        %v3740 = vmul.f32 %v3676, %v3548
        %v3741 = vmul.f32 %v3677, %v3549
        %v3742 = vmul.f32 %v3678, %v3550
        %v3743 = vmul.f32 %v3679, %v3551
        %v3744 = vmul.f32 %v3680, %v3552
        %v3745 = vmul.f32 %v3681, %v3553
        %v3746 = vmul.f32 %v3682, %v3554
        %v3747 = vmul.f32 %v3683, %v3555
        %v3748 = vadd.f32 %v3684, 1.4214138
        %v3749 = vadd.f32 %v3685, 1.4214138
        %v3750 = vadd.f32 %v3686, 1.4214138
        %v3751 = vadd.f32 %v3687, 1.4214138
        %v3752 = vadd.f32 %v3688, 1.4214138
        %v3753 = vadd.f32 %v3689, 1.4214138
        %v3754 = vadd.f32 %v3690, 1.4214138
        %v3755 = vadd.f32 %v3691, 1.4214138
        %v3756 = vadd.f32 %v3692, 1.4214138
        %v3757 = vadd.f32 %v3693, 1.4214138
        %v3758 = vadd.f32 %v3694, 1.4214138
        %v3759 = vadd.f32 %v3695, 1.4214138
        %v3760 = vadd.f32 %v3696, 1.4214138
        %v3761 = vadd.f32 %v3697, 1.4214138
        %v3762 = vadd.f32 %v3698, 1.4214138
        %v3763 = vadd.f32 %v3699, 1.4214138
        %v3764 = vadd.f32 %v3700, 1.4214138
        %v3765 = vadd.f32 %v3701, 1.4214138
        %v3766 = vadd.f32 %v3702, 1.4214138
        %v3767 = vadd.f32 %v3703, 1.4214138
        %v3768 = vadd.f32 %v3704, 1.4214138
        %v3769 = vadd.f32 %v3705, 1.4214138
        %v3770 = vadd.f32 %v3706, 1.4214138
        %v3771 = vadd.f32 %v3707, 1.4214138
        %v3772 = vadd.f32 %v3708, 1.4214138
        %v3773 = vadd.f32 %v3709, 1.4214138
        %v3774 = vadd.f32 %v3710, 1.4214138
        %v3775 = vadd.f32 %v3711, 1.4214138
        %v3776 = vadd.f32 %v3712, 1.4214138
        %v3777 = vadd.f32 %v3713, 1.4214138
        %v3778 = vadd.f32 %v3714, 1.4214138
        %v3779 = vadd.f32 %v3715, 1.4214138
        %v3780 = vadd.f32 %v3716, 1.4214138
        %v3781 = vadd.f32 %v3717, 1.4214138
        %v3782 = vadd.f32 %v3718, 1.4214138
        %v3783 = vadd.f32 %v3719, 1.4214138
        %v3784 = vadd.f32 %v3720, 1.4214138
        %v3785 = vadd.f32 %v3721, 1.4214138
        %v3786 = vadd.f32 %v3722, 1.4214138
        %v3787 = vadd.f32 %v3723, 1.4214138
        %v3788 = vadd.f32 %v3724, 1.4214138
        %v3789 = vadd.f32 %v3725, 1.4214138
        %v3790 = vadd.f32 %v3726, 1.4214138
        %v3791 = vadd.f32 %v3727, 1.4214138
        %v3792 = vadd.f32 %v3728, 1.4214138
        %v3793 = vadd.f32 %v3729, 1.4214138
        %v3794 = vadd.f32 %v3730, 1.4214138
        %v3795 = vadd.f32 %v3731, 1.4214138
        %v3796 = vadd.f32 %v3732, 1.4214138
        %v3797 = vadd.f32 %v3733, 1.4214138
        %v3798 = vadd.f32 %v3734, 1.4214138
        %v3799 = vadd.f32 %v3735, 1.4214138
        %v3800 = vadd.f32 %v3736, 1.4214138
        %v3801 = vadd.f32 %v3737, 1.4214138
        %v3802 = vadd.f32 %v3738, 1.4214138
        %v3803 = vadd.f32 %v3739, 1.4214138
        %v3804 = vadd.f32 %v3740, 1.4214138
        %v3805 = vadd.f32 %v3741, 1.4214138
        %v3806 = vadd.f32 %v3742, 1.4214138
        %v3807 = vadd.f32 %v3743, 1.4214138
        %v3808 = vadd.f32 %v3744, 1.4214138
        %v3809 = vadd.f32 %v3745, 1.4214138
        %v3810 = vadd.f32 %v3746, 1.4214138
        %v3811 = vadd.f32 %v3747, 1.4214138
        %v3812 = vmul.f32 %v3748, %v3492
        %v3813 = vmul.f32 %v3749, %v3493
        %v3814 = vmul.f32 %v3750, %v3494
        %v3815 = vmul.f32 %v3751, %v3495
        %v3816 = vmul.f32 %v3752, %v3496
        %v3817 = vmul.f32 %v3753, %v3497
        %v3818 = vmul.f32 %v3754, %v3498
        %v3819 = vmul.f32 %v3755, %v3499
        %v3820 = vmul.f32 %v3756, %v3500
        %v3821 = vmul.f32 %v3757, %v3501
        %v3822 = vmul.f32 %v3758, %v3502
        %v3823 = vmul.f32 %v3759, %v3503
        %v3824 = vmul.f32 %v3760, %v3504
        %v3825 = vmul.f32 %v3761, %v3505
        %v3826 = vmul.f32 %v3762, %v3506
        %v3827 = vmul.f32 %v3763, %v3507
        %v3828 = vmul.f32 %v3764, %v3508
        %v3829 = vmul.f32 %v3765, %v3509
        %v3830 = vmul.f32 %v3766, %v3510
        %v3831 = vmul.f32 %v3767, %v3511
        %v3832 = vmul.f32 %v3768, %v3512
        %v3833 = vmul.f32 %v3769, %v3513
        %v3834 = vmul.f32 %v3770, %v3514
        %v3835 = vmul.f32 %v3771, %v3515
        %v3836 = vmul.f32 %v3772, %v3516
        %v3837 = vmul.f32 %v3773, %v3517
        %v3838 = vmul.f32 %v3774, %v3518
        %v3839 = vmul.f32 %v3775, %v3519
        %v3840 = vmul.f32 %v3776, %v3520
        %v3841 = vmul.f32 %v3777, %v3521
        %v3842 = vmul.f32 %v3778, %v3522
        %v3843 = vmul.f32 %v3779, %v3523
        %v3844 = vmul.f32 %v3780, %v3524
        %v3845 = vmul.f32 %v3781, %v3525
        %v3846 = vmul.f32 %v3782, %v3526
        %v3847 = vmul.f32 %v3783, %v3527
        %v3848 = vmul.f32 %v3784, %v3528
        %v3849 = vmul.f32 %v3785, %v3529
        %v3850 = vmul.f32 %v3786, %v3530
        %v3851 = vmul.f32 %v3787, %v3531
        %v3852 = vmul.f32 %v3788, %v3532
        %v3853 = vmul.f32 %v3789, %v3533
        %v3854 = vmul.f32 %v3790, %v3534
        %v3855 = vmul.f32 %v3791, %v3535
        %v3856 = vmul.f32 %v3792, %v3536
        %v3857 = vmul.f32 %v3793, %v3537
        %v3858 = vmul.f32 %v3794, %v3538
        %v3859 = vmul.f32 %v3795, %v3539
        %v3860 = vmul.f32 %v3796, %v3540
        %v3861 = vmul.f32 %v3797, %v3541
        %v3862 = vmul.f32 %v3798, %v3542
        %v3863 = vmul.f32 %v3799, %v3543
        %v3864 = vmul.f32 %v3800, %v3544
        %v3865 = vmul.f32 %v3801, %v3545
        %v3866 = vmul.f32 %v3802, %v3546
        %v3867 = vmul.f32 %v3803, %v3547
        %v3868 = vmul.f32 %v3804, %v3548
        %v3869 = vmul.f32 %v3805, %v3549
        %v3870 = vmul.f32 %v3806, %v3550
        %v3871 = vmul.f32 %v3807, %v3551
        %v3872 = vmul.f32 %v3808, %v3552
        %v3873 = vmul.f32 %v3809, %v3553
        %v3874 = vmul.f32 %v3810, %v3554
        %v3875 = vmul.f32 %v3811, %v3555
        %v3876 = vadd.f32 %v3812, -0.28449672
        %v3877 = vadd.f32 %v3813, -0.28449672
        %v3878 = vadd.f32 %v3814, -0.28449672
        %v3879 = vadd.f32 %v3815, -0.28449672
        %v3880 = vadd.f32 %v3816, -0.28449672
        %v3881 = vadd.f32 %v3817, -0.28449672
        %v3882 = vadd.f32 %v3818, -0.28449672
        %v3883 = vadd.f32 %v3819, -0.28449672
        %v3884 = vadd.f32 %v3820, -0.28449672
        %v3885 = vadd.f32 %v3821, -0.28449672
        %v3886 = vadd.f32 %v3822, -0.28449672
        %v3887 = vadd.f32 %v3823, -0.28449672
        %v3888 = vadd.f32 %v3824, -0.28449672
        %v3889 = vadd.f32 %v3825, -0.28449672
        %v3890 = vadd.f32 %v3826, -0.28449672
        %v3891 = vadd.f32 %v3827, -0.28449672
        %v3892 = vadd.f32 %v3828, -0.28449672
        %v3893 = vadd.f32 %v3829, -0.28449672
        %v3894 = vadd.f32 %v3830, -0.28449672
        %v3895 = vadd.f32 %v3831, -0.28449672
        %v3896 = vadd.f32 %v3832, -0.28449672
        %v3897 = vadd.f32 %v3833, -0.28449672
        %v3898 = vadd.f32 %v3834, -0.28449672
        %v3899 = vadd.f32 %v3835, -0.28449672
        %v3900 = vadd.f32 %v3836, -0.28449672
        %v3901 = vadd.f32 %v3837, -0.28449672
        %v3902 = vadd.f32 %v3838, -0.28449672
        %v3903 = vadd.f32 %v3839, -0.28449672
        %v3904 = vadd.f32 %v3840, -0.28449672
        %v3905 = vadd.f32 %v3841, -0.28449672
        %v3906 = vadd.f32 %v3842, -0.28449672
        %v3907 = vadd.f32 %v3843, -0.28449672
        %v3908 = vadd.f32 %v3844, -0.28449672
        %v3909 = vadd.f32 %v3845, -0.28449672
        %v3910 = vadd.f32 %v3846, -0.28449672
        %v3911 = vadd.f32 %v3847, -0.28449672
        %v3912 = vadd.f32 %v3848, -0.28449672
        %v3913 = vadd.f32 %v3849, -0.28449672
        %v3914 = vadd.f32 %v3850, -0.28449672
        %v3915 = vadd.f32 %v3851, -0.28449672
        %v3916 = vadd.f32 %v3852, -0.28449672
        %v3917 = vadd.f32 %v3853, -0.28449672
        %v3918 = vadd.f32 %v3854, -0.28449672
        %v3919 = vadd.f32 %v3855, -0.28449672
        %v3920 = vadd.f32 %v3856, -0.28449672
        %v3921 = vadd.f32 %v3857, -0.28449672
        %v3922 = vadd.f32 %v3858, -0.28449672
        %v3923 = vadd.f32 %v3859, -0.28449672
        %v3924 = vadd.f32 %v3860, -0.28449672
        %v3925 = vadd.f32 %v3861, -0.28449672
        %v3926 = vadd.f32 %v3862, -0.28449672
        %v3927 = vadd.f32 %v3863, -0.28449672
        %v3928 = vadd.f32 %v3864, -0.28449672
        %v3929 = vadd.f32 %v3865, -0.28449672
        %v3930 = vadd.f32 %v3866, -0.28449672
        %v3931 = vadd.f32 %v3867, -0.28449672
        %v3932 = vadd.f32 %v3868, -0.28449672
        %v3933 = vadd.f32 %v3869, -0.28449672
        %v3934 = vadd.f32 %v3870, -0.28449672
        %v3935 = vadd.f32 %v3871, -0.28449672
        %v3936 = vadd.f32 %v3872, -0.28449672
        %v3937 = vadd.f32 %v3873, -0.28449672
        %v3938 = vadd.f32 %v3874, -0.28449672
        %v3939 = vadd.f32 %v3875, -0.28449672
        %v3940 = vmul.f32 %v3876, %v3492
        %v3941 = vmul.f32 %v3877, %v3493
        %v3942 = vmul.f32 %v3878, %v3494
        %v3943 = vmul.f32 %v3879, %v3495
        %v3944 = vmul.f32 %v3880, %v3496
        %v3945 = vmul.f32 %v3881, %v3497
        %v3946 = vmul.f32 %v3882, %v3498
        %v3947 = vmul.f32 %v3883, %v3499
        %v3948 = vmul.f32 %v3884, %v3500
        %v3949 = vmul.f32 %v3885, %v3501
        %v3950 = vmul.f32 %v3886, %v3502
        %v3951 = vmul.f32 %v3887, %v3503
        %v3952 = vmul.f32 %v3888, %v3504
        %v3953 = vmul.f32 %v3889, %v3505
        %v3954 = vmul.f32 %v3890, %v3506
        %v3955 = vmul.f32 %v3891, %v3507
        %v3956 = vmul.f32 %v3892, %v3508
        %v3957 = vmul.f32 %v3893, %v3509
        %v3958 = vmul.f32 %v3894, %v3510
        %v3959 = vmul.f32 %v3895, %v3511
        %v3960 = vmul.f32 %v3896, %v3512
        %v3961 = vmul.f32 %v3897, %v3513
        %v3962 = vmul.f32 %v3898, %v3514
        %v3963 = vmul.f32 %v3899, %v3515
        %v3964 = vmul.f32 %v3900, %v3516
        %v3965 = vmul.f32 %v3901, %v3517
        %v3966 = vmul.f32 %v3902, %v3518
        %v3967 = vmul.f32 %v3903, %v3519
        %v3968 = vmul.f32 %v3904, %v3520
        %v3969 = vmul.f32 %v3905, %v3521
        %v3970 = vmul.f32 %v3906, %v3522
        %v3971 = vmul.f32 %v3907, %v3523
        %v3972 = vmul.f32 %v3908, %v3524
        %v3973 = vmul.f32 %v3909, %v3525
        %v3974 = vmul.f32 %v3910, %v3526
        %v3975 = vmul.f32 %v3911, %v3527
        %v3976 = vmul.f32 %v3912, %v3528
        %v3977 = vmul.f32 %v3913, %v3529
        %v3978 = vmul.f32 %v3914, %v3530
        %v3979 = vmul.f32 %v3915, %v3531
        %v3980 = vmul.f32 %v3916, %v3532
        %v3981 = vmul.f32 %v3917, %v3533
        %v3982 = vmul.f32 %v3918, %v3534
        %v3983 = vmul.f32 %v3919, %v3535
        %v3984 = vmul.f32 %v3920, %v3536
        %v3985 = vmul.f32 %v3921, %v3537
        %v3986 = vmul.f32 %v3922, %v3538
        %v3987 = vmul.f32 %v3923, %v3539
        %v3988 = vmul.f32 %v3924, %v3540
        %v3989 = vmul.f32 %v3925, %v3541
        %v3990 = vmul.f32 %v3926, %v3542
        %v3991 = vmul.f32 %v3927, %v3543
        %v3992 = vmul.f32 %v3928, %v3544
        %v3993 = vmul.f32 %v3929, %v3545
        %v3994 = vmul.f32 %v3930, %v3546
        %v3995 = vmul.f32 %v3931, %v3547
        %v3996 = vmul.f32 %v3932, %v3548
        %v3997 = vmul.f32 %v3933, %v3549
        %v3998 = vmul.f32 %v3934, %v3550
        %v3999 = vmul.f32 %v3935, %v3551
        %v4000 = vmul.f32 %v3936, %v3552
        %v4001 = vmul.f32 %v3937, %v3553
        %v4002 = vmul.f32 %v3938, %v3554
        %v4003 = vmul.f32 %v3939, %v3555
        %v4004 = vadd.f32 %v3940, 0.2548296
        %v4005 = vadd.f32 %v3941, 0.2548296
        %v4006 = vadd.f32 %v3942, 0.2548296
        %v4007 = vadd.f32 %v3943, 0.2548296
        %v4008 = vadd.f32 %v3944, 0.2548296
        %v4009 = vadd.f32 %v3945, 0.2548296
        %v4010 = vadd.f32 %v3946, 0.2548296
        %v4011 = vadd.f32 %v3947, 0.2548296
        %v4012 = vadd.f32 %v3948, 0.2548296
        %v4013 = vadd.f32 %v3949, 0.2548296
        %v4014 = vadd.f32 %v3950, 0.2548296
        %v4015 = vadd.f32 %v3951, 0.2548296
        %v4016 = vadd.f32 %v3952, 0.2548296
        %v4017 = vadd.f32 %v3953, 0.2548296
        %v4018 = vadd.f32 %v3954, 0.2548296
        %v4019 = vadd.f32 %v3955, 0.2548296
        %v4020 = vadd.f32 %v3956, 0.2548296
        %v4021 = vadd.f32 %v3957, 0.2548296
        %v4022 = vadd.f32 %v3958, 0.2548296
        %v4023 = vadd.f32 %v3959, 0.2548296
        %v4024 = vadd.f32 %v3960, 0.2548296
        %v4025 = vadd.f32 %v3961, 0.2548296
        %v4026 = vadd.f32 %v3962, 0.2548296
        %v4027 = vadd.f32 %v3963, 0.2548296
        %v4028 = vadd.f32 %v3964, 0.2548296
        %v4029 = vadd.f32 %v3965, 0.2548296
        %v4030 = vadd.f32 %v3966, 0.2548296
        %v4031 = vadd.f32 %v3967, 0.2548296
        %v4032 = vadd.f32 %v3968, 0.2548296
        %v4033 = vadd.f32 %v3969, 0.2548296
        %v4034 = vadd.f32 %v3970, 0.2548296
        %v4035 = vadd.f32 %v3971, 0.2548296
        %v4036 = vadd.f32 %v3972, 0.2548296
        %v4037 = vadd.f32 %v3973, 0.2548296
        %v4038 = vadd.f32 %v3974, 0.2548296
        %v4039 = vadd.f32 %v3975, 0.2548296
        %v4040 = vadd.f32 %v3976, 0.2548296
        %v4041 = vadd.f32 %v3977, 0.2548296
        %v4042 = vadd.f32 %v3978, 0.2548296
        %v4043 = vadd.f32 %v3979, 0.2548296
        %v4044 = vadd.f32 %v3980, 0.2548296
        %v4045 = vadd.f32 %v3981, 0.2548296
        %v4046 = vadd.f32 %v3982, 0.2548296
        %v4047 = vadd.f32 %v3983, 0.2548296
        %v4048 = vadd.f32 %v3984, 0.2548296
        %v4049 = vadd.f32 %v3985, 0.2548296
        %v4050 = vadd.f32 %v3986, 0.2548296
        %v4051 = vadd.f32 %v3987, 0.2548296
        %v4052 = vadd.f32 %v3988, 0.2548296
        %v4053 = vadd.f32 %v3989, 0.2548296
        %v4054 = vadd.f32 %v3990, 0.2548296
        %v4055 = vadd.f32 %v3991, 0.2548296
        %v4056 = vadd.f32 %v3992, 0.2548296
        %v4057 = vadd.f32 %v3993, 0.2548296
        %v4058 = vadd.f32 %v3994, 0.2548296
        %v4059 = vadd.f32 %v3995, 0.2548296
        %v4060 = vadd.f32 %v3996, 0.2548296
        %v4061 = vadd.f32 %v3997, 0.2548296
        %v4062 = vadd.f32 %v3998, 0.2548296
        %v4063 = vadd.f32 %v3999, 0.2548296
        %v4064 = vadd.f32 %v4000, 0.2548296
        %v4065 = vadd.f32 %v4001, 0.2548296
        %v4066 = vadd.f32 %v4002, 0.2548296
        %v4067 = vadd.f32 %v4003, 0.2548296
        %v4068 = vmul.f32 %v4004, %v3492
        %v4069 = vmul.f32 %v4005, %v3493
        %v4070 = vmul.f32 %v4006, %v3494
        %v4071 = vmul.f32 %v4007, %v3495
        %v4072 = vmul.f32 %v4008, %v3496
        %v4073 = vmul.f32 %v4009, %v3497
        %v4074 = vmul.f32 %v4010, %v3498
        %v4075 = vmul.f32 %v4011, %v3499
        %v4076 = vmul.f32 %v4012, %v3500
        %v4077 = vmul.f32 %v4013, %v3501
        %v4078 = vmul.f32 %v4014, %v3502
        %v4079 = vmul.f32 %v4015, %v3503
        %v4080 = vmul.f32 %v4016, %v3504
        %v4081 = vmul.f32 %v4017, %v3505
        %v4082 = vmul.f32 %v4018, %v3506
        %v4083 = vmul.f32 %v4019, %v3507
        %v4084 = vmul.f32 %v4020, %v3508
        %v4085 = vmul.f32 %v4021, %v3509
        %v4086 = vmul.f32 %v4022, %v3510
        %v4087 = vmul.f32 %v4023, %v3511
        %v4088 = vmul.f32 %v4024, %v3512
        %v4089 = vmul.f32 %v4025, %v3513
        %v4090 = vmul.f32 %v4026, %v3514
        %v4091 = vmul.f32 %v4027, %v3515
        %v4092 = vmul.f32 %v4028, %v3516
        %v4093 = vmul.f32 %v4029, %v3517
        %v4094 = vmul.f32 %v4030, %v3518
        %v4095 = vmul.f32 %v4031, %v3519
        %v4096 = vmul.f32 %v4032, %v3520
        %v4097 = vmul.f32 %v4033, %v3521
        %v4098 = vmul.f32 %v4034, %v3522
        %v4099 = vmul.f32 %v4035, %v3523
        %v4100 = vmul.f32 %v4036, %v3524
        %v4101 = vmul.f32 %v4037, %v3525
        %v4102 = vmul.f32 %v4038, %v3526
        %v4103 = vmul.f32 %v4039, %v3527
        %v4104 = vmul.f32 %v4040, %v3528
        %v4105 = vmul.f32 %v4041, %v3529
        %v4106 = vmul.f32 %v4042, %v3530
        %v4107 = vmul.f32 %v4043, %v3531
        %v4108 = vmul.f32 %v4044, %v3532
        %v4109 = vmul.f32 %v4045, %v3533
        %v4110 = vmul.f32 %v4046, %v3534
        %v4111 = vmul.f32 %v4047, %v3535
        %v4112 = vmul.f32 %v4048, %v3536
        %v4113 = vmul.f32 %v4049, %v3537
        %v4114 = vmul.f32 %v4050, %v3538
        %v4115 = vmul.f32 %v4051, %v3539
        %v4116 = vmul.f32 %v4052, %v3540
        %v4117 = vmul.f32 %v4053, %v3541
        %v4118 = vmul.f32 %v4054, %v3542
        %v4119 = vmul.f32 %v4055, %v3543
        %v4120 = vmul.f32 %v4056, %v3544
        %v4121 = vmul.f32 %v4057, %v3545
        %v4122 = vmul.f32 %v4058, %v3546
        %v4123 = vmul.f32 %v4059, %v3547
        %v4124 = vmul.f32 %v4060, %v3548
        %v4125 = vmul.f32 %v4061, %v3549
        %v4126 = vmul.f32 %v4062, %v3550
        %v4127 = vmul.f32 %v4063, %v3551
        %v4128 = vmul.f32 %v4064, %v3552
        %v4129 = vmul.f32 %v4065, %v3553
        %v4130 = vmul.f32 %v4066, %v3554
        %v4131 = vmul.f32 %v4067, %v3555
        %v4132 = vsub.f32 0.0, %v3108
        %v4133 = vsub.f32 0.0, %v3109
        %v4134 = vsub.f32 0.0, %v3110
        %v4135 = vsub.f32 0.0, %v3111
        %v4136 = vsub.f32 0.0, %v3112
        %v4137 = vsub.f32 0.0, %v3113
        %v4138 = vsub.f32 0.0, %v3114
        %v4139 = vsub.f32 0.0, %v3115
        %v4140 = vsub.f32 0.0, %v3116
        %v4141 = vsub.f32 0.0, %v3117
        %v4142 = vsub.f32 0.0, %v3118
        %v4143 = vsub.f32 0.0, %v3119
        %v4144 = vsub.f32 0.0, %v3120
        %v4145 = vsub.f32 0.0, %v3121
        %v4146 = vsub.f32 0.0, %v3122
        %v4147 = vsub.f32 0.0, %v3123
        %v4148 = vsub.f32 0.0, %v3124
        %v4149 = vsub.f32 0.0, %v3125
        %v4150 = vsub.f32 0.0, %v3126
        %v4151 = vsub.f32 0.0, %v3127
        %v4152 = vsub.f32 0.0, %v3128
        %v4153 = vsub.f32 0.0, %v3129
        %v4154 = vsub.f32 0.0, %v3130
        %v4155 = vsub.f32 0.0, %v3131
        %v4156 = vsub.f32 0.0, %v3132
        %v4157 = vsub.f32 0.0, %v3133
        %v4158 = vsub.f32 0.0, %v3134
        %v4159 = vsub.f32 0.0, %v3135
        %v4160 = vsub.f32 0.0, %v3136
        %v4161 = vsub.f32 0.0, %v3137
        %v4162 = vsub.f32 0.0, %v3138
        %v4163 = vsub.f32 0.0, %v3139
        %v4164 = vsub.f32 0.0, %v3140
        %v4165 = vsub.f32 0.0, %v3141
        %v4166 = vsub.f32 0.0, %v3142
        %v4167 = vsub.f32 0.0, %v3143
        %v4168 = vsub.f32 0.0, %v3144
        %v4169 = vsub.f32 0.0, %v3145
        %v4170 = vsub.f32 0.0, %v3146
        %v4171 = vsub.f32 0.0, %v3147
        %v4172 = vsub.f32 0.0, %v3148
        %v4173 = vsub.f32 0.0, %v3149
        %v4174 = vsub.f32 0.0, %v3150
        %v4175 = vsub.f32 0.0, %v3151
        %v4176 = vsub.f32 0.0, %v3152
        %v4177 = vsub.f32 0.0, %v3153
        %v4178 = vsub.f32 0.0, %v3154
        %v4179 = vsub.f32 0.0, %v3155
        %v4180 = vsub.f32 0.0, %v3156
        %v4181 = vsub.f32 0.0, %v3157
        %v4182 = vsub.f32 0.0, %v3158
        %v4183 = vsub.f32 0.0, %v3159
        %v4184 = vsub.f32 0.0, %v3160
        %v4185 = vsub.f32 0.0, %v3161
        %v4186 = vsub.f32 0.0, %v3162
        %v4187 = vsub.f32 0.0, %v3163
        %v4188 = vsub.f32 0.0, %v3164
        %v4189 = vsub.f32 0.0, %v3165
        %v4190 = vsub.f32 0.0, %v3166
        %v4191 = vsub.f32 0.0, %v3167
        %v4192 = vsub.f32 0.0, %v3168
        %v4193 = vsub.f32 0.0, %v3169
        %v4194 = vsub.f32 0.0, %v3170
        %v4195 = vsub.f32 0.0, %v3171
        %v4196 = vmul.f32 %v4132, %v3108
        %v4197 = vmul.f32 %v4133, %v3109
        %v4198 = vmul.f32 %v4134, %v3110
        %v4199 = vmul.f32 %v4135, %v3111
        %v4200 = vmul.f32 %v4136, %v3112
        %v4201 = vmul.f32 %v4137, %v3113
        %v4202 = vmul.f32 %v4138, %v3114
        %v4203 = vmul.f32 %v4139, %v3115
        %v4204 = vmul.f32 %v4140, %v3116
        %v4205 = vmul.f32 %v4141, %v3117
        %v4206 = vmul.f32 %v4142, %v3118
        %v4207 = vmul.f32 %v4143, %v3119
        %v4208 = vmul.f32 %v4144, %v3120
        %v4209 = vmul.f32 %v4145, %v3121
        %v4210 = vmul.f32 %v4146, %v3122
        %v4211 = vmul.f32 %v4147, %v3123
        %v4212 = vmul.f32 %v4148, %v3124
        %v4213 = vmul.f32 %v4149, %v3125
        %v4214 = vmul.f32 %v4150, %v3126
        %v4215 = vmul.f32 %v4151, %v3127
        %v4216 = vmul.f32 %v4152, %v3128
        %v4217 = vmul.f32 %v4153, %v3129
        %v4218 = vmul.f32 %v4154, %v3130
        %v4219 = vmul.f32 %v4155, %v3131
        %v4220 = vmul.f32 %v4156, %v3132
        %v4221 = vmul.f32 %v4157, %v3133
        %v4222 = vmul.f32 %v4158, %v3134
        %v4223 = vmul.f32 %v4159, %v3135
        %v4224 = vmul.f32 %v4160, %v3136
        %v4225 = vmul.f32 %v4161, %v3137
        %v4226 = vmul.f32 %v4162, %v3138
        %v4227 = vmul.f32 %v4163, %v3139
        %v4228 = vmul.f32 %v4164, %v3140
        %v4229 = vmul.f32 %v4165, %v3141
        %v4230 = vmul.f32 %v4166, %v3142
        %v4231 = vmul.f32 %v4167, %v3143
        %v4232 = vmul.f32 %v4168, %v3144
        %v4233 = vmul.f32 %v4169, %v3145
        %v4234 = vmul.f32 %v4170, %v3146
        %v4235 = vmul.f32 %v4171, %v3147
        %v4236 = vmul.f32 %v4172, %v3148
        %v4237 = vmul.f32 %v4173, %v3149
        %v4238 = vmul.f32 %v4174, %v3150
        %v4239 = vmul.f32 %v4175, %v3151
        %v4240 = vmul.f32 %v4176, %v3152
        %v4241 = vmul.f32 %v4177, %v3153
        %v4242 = vmul.f32 %v4178, %v3154
        %v4243 = vmul.f32 %v4179, %v3155
        %v4244 = vmul.f32 %v4180, %v3156
        %v4245 = vmul.f32 %v4181, %v3157
        %v4246 = vmul.f32 %v4182, %v3158
        %v4247 = vmul.f32 %v4183, %v3159
        %v4248 = vmul.f32 %v4184, %v3160
        %v4249 = vmul.f32 %v4185, %v3161
        %v4250 = vmul.f32 %v4186, %v3162
        %v4251 = vmul.f32 %v4187, %v3163
        %v4252 = vmul.f32 %v4188, %v3164
        %v4253 = vmul.f32 %v4189, %v3165
        %v4254 = vmul.f32 %v4190, %v3166
        %v4255 = vmul.f32 %v4191, %v3167
        %v4256 = vmul.f32 %v4192, %v3168
        %v4257 = vmul.f32 %v4193, %v3169
        %v4258 = vmul.f32 %v4194, %v3170
        %v4259 = vmul.f32 %v4195, %v3171
        %v4260 = vmul.f32 %v4196, 1.442695
        %v4261 = vpow.pop %v4260
        %v4262 = vmul.f32 %v4197, 1.442695
        %v4263 = vpow.pop %v4262
        %v4264 = vmul.f32 %v4198, 1.442695
        %v4265 = vpow.pop %v4264
        %v4266 = vmul.f32 %v4199, 1.442695
        %v4267 = vpow.pop %v4266
        %v4268 = vmul.f32 %v4200, 1.442695
        %v4269 = vpow.pop %v4268
        %v4270 = vmul.f32 %v4201, 1.442695
        %v4271 = vpow.pop %v4270
        %v4272 = vmul.f32 %v4202, 1.442695
        %v4273 = vpow.pop %v4272
        %v4274 = vmul.f32 %v4203, 1.442695
        %v4275 = vpow.pop %v4274
        %v4276 = vmul.f32 %v4204, 1.442695
        %v4277 = vpow.pop %v4276
        %v4278 = vmul.f32 %v4205, 1.442695
        %v4279 = vpow.pop %v4278
        %v4280 = vmul.f32 %v4206, 1.442695
        %v4281 = vpow.pop %v4280
        %v4282 = vmul.f32 %v4207, 1.442695
        %v4283 = vpow.pop %v4282
        %v4284 = vmul.f32 %v4208, 1.442695
        %v4285 = vpow.pop %v4284
        %v4286 = vmul.f32 %v4209, 1.442695
        %v4287 = vpow.pop %v4286
        %v4288 = vmul.f32 %v4210, 1.442695
        %v4289 = vpow.pop %v4288
        %v4290 = vmul.f32 %v4211, 1.442695
        %v4291 = vpow.pop %v4290
        %v4292 = vmul.f32 %v4212, 1.442695
        %v4293 = vpow.pop %v4292
        %v4294 = vmul.f32 %v4213, 1.442695
        %v4295 = vpow.pop %v4294
        %v4296 = vmul.f32 %v4214, 1.442695
        %v4297 = vpow.pop %v4296
        %v4298 = vmul.f32 %v4215, 1.442695
        %v4299 = vpow.pop %v4298
        %v4300 = vmul.f32 %v4216, 1.442695
        %v4301 = vpow.pop %v4300
        %v4302 = vmul.f32 %v4217, 1.442695
        %v4303 = vpow.pop %v4302
        %v4304 = vmul.f32 %v4218, 1.442695
        %v4305 = vpow.pop %v4304
        %v4306 = vmul.f32 %v4219, 1.442695
        %v4307 = vpow.pop %v4306
        %v4308 = vmul.f32 %v4220, 1.442695
        %v4309 = vpow.pop %v4308
        %v4310 = vmul.f32 %v4221, 1.442695
        %v4311 = vpow.pop %v4310
        %v4312 = vmul.f32 %v4222, 1.442695
        %v4313 = vpow.pop %v4312
        %v4314 = vmul.f32 %v4223, 1.442695
        %v4315 = vpow.pop %v4314
        %v4316 = vmul.f32 %v4224, 1.442695
        %v4317 = vpow.pop %v4316
        %v4318 = vmul.f32 %v4225, 1.442695
        %v4319 = vpow.pop %v4318
        %v4320 = vmul.f32 %v4226, 1.442695
        %v4321 = vpow.pop %v4320
        %v4322 = vmul.f32 %v4227, 1.442695
        %v4323 = vpow.pop %v4322
        %v4324 = vmul.f32 %v4228, 1.442695
        %v4325 = vpow.pop %v4324
        %v4326 = vmul.f32 %v4229, 1.442695
        %v4327 = vpow.pop %v4326
        %v4328 = vmul.f32 %v4230, 1.442695
        %v4329 = vpow.pop %v4328
        %v4330 = vmul.f32 %v4231, 1.442695
        %v4331 = vpow.pop %v4330
        %v4332 = vmul.f32 %v4232, 1.442695
        %v4333 = vpow.pop %v4332
        %v4334 = vmul.f32 %v4233, 1.442695
        %v4335 = vpow.pop %v4334
        %v4336 = vmul.f32 %v4234, 1.442695
        %v4337 = vpow.pop %v4336
        %v4338 = vmul.f32 %v4235, 1.442695
        %v4339 = vpow.pop %v4338
        %v4340 = vmul.f32 %v4236, 1.442695
        %v4341 = vpow.pop %v4340
        %v4342 = vmul.f32 %v4237, 1.442695
        %v4343 = vpow.pop %v4342
        %v4344 = vmul.f32 %v4238, 1.442695
        %v4345 = vpow.pop %v4344
        %v4346 = vmul.f32 %v4239, 1.442695
        %v4347 = vpow.pop %v4346
        %v4348 = vmul.f32 %v4240, 1.442695
        %v4349 = vpow.pop %v4348
        %v4350 = vmul.f32 %v4241, 1.442695
        %v4351 = vpow.pop %v4350
        %v4352 = vmul.f32 %v4242, 1.442695
        %v4353 = vpow.pop %v4352
        %v4354 = vmul.f32 %v4243, 1.442695
        %v4355 = vpow.pop %v4354
        %v4356 = vmul.f32 %v4244, 1.442695
        %v4357 = vpow.pop %v4356
        %v4358 = vmul.f32 %v4245, 1.442695
        %v4359 = vpow.pop %v4358
        %v4360 = vmul.f32 %v4246, 1.442695
        %v4361 = vpow.pop %v4360
        %v4362 = vmul.f32 %v4247, 1.442695
        %v4363 = vpow.pop %v4362
        %v4364 = vmul.f32 %v4248, 1.442695
        %v4365 = vpow.pop %v4364
        %v4366 = vmul.f32 %v4249, 1.442695
        %v4367 = vpow.pop %v4366
        %v4368 = vmul.f32 %v4250, 1.442695
        %v4369 = vpow.pop %v4368
        %v4370 = vmul.f32 %v4251, 1.442695
        %v4371 = vpow.pop %v4370
        %v4372 = vmul.f32 %v4252, 1.442695
        %v4373 = vpow.pop %v4372
        %v4374 = vmul.f32 %v4253, 1.442695
        %v4375 = vpow.pop %v4374
        %v4376 = vmul.f32 %v4254, 1.442695
        %v4377 = vpow.pop %v4376
        %v4378 = vmul.f32 %v4255, 1.442695
        %v4379 = vpow.pop %v4378
        %v4380 = vmul.f32 %v4256, 1.442695
        %v4381 = vpow.pop %v4380
        %v4382 = vmul.f32 %v4257, 1.442695
        %v4383 = vpow.pop %v4382
        %v4384 = vmul.f32 %v4258, 1.442695
        %v4385 = vpow.pop %v4384
        %v4386 = vmul.f32 %v4259, 1.442695
        %v4387 = vpow.pop %v4386
        %v4388 = vmul.f32 %v4068, %v4261
        %v4389 = vmul.f32 %v4069, %v4263
        %v4390 = vmul.f32 %v4070, %v4265
        %v4391 = vmul.f32 %v4071, %v4267
        %v4392 = vmul.f32 %v4072, %v4269
        %v4393 = vmul.f32 %v4073, %v4271
        %v4394 = vmul.f32 %v4074, %v4273
        %v4395 = vmul.f32 %v4075, %v4275
        %v4396 = vmul.f32 %v4076, %v4277
        %v4397 = vmul.f32 %v4077, %v4279
        %v4398 = vmul.f32 %v4078, %v4281
        %v4399 = vmul.f32 %v4079, %v4283
        %v4400 = vmul.f32 %v4080, %v4285
        %v4401 = vmul.f32 %v4081, %v4287
        %v4402 = vmul.f32 %v4082, %v4289
        %v4403 = vmul.f32 %v4083, %v4291
        %v4404 = vmul.f32 %v4084, %v4293
        %v4405 = vmul.f32 %v4085, %v4295
        %v4406 = vmul.f32 %v4086, %v4297
        %v4407 = vmul.f32 %v4087, %v4299
        %v4408 = vmul.f32 %v4088, %v4301
        %v4409 = vmul.f32 %v4089, %v4303
        %v4410 = vmul.f32 %v4090, %v4305
        %v4411 = vmul.f32 %v4091, %v4307
        %v4412 = vmul.f32 %v4092, %v4309
        %v4413 = vmul.f32 %v4093, %v4311
        %v4414 = vmul.f32 %v4094, %v4313
        %v4415 = vmul.f32 %v4095, %v4315
        %v4416 = vmul.f32 %v4096, %v4317
        %v4417 = vmul.f32 %v4097, %v4319
        %v4418 = vmul.f32 %v4098, %v4321
        %v4419 = vmul.f32 %v4099, %v4323
        %v4420 = vmul.f32 %v4100, %v4325
        %v4421 = vmul.f32 %v4101, %v4327
        %v4422 = vmul.f32 %v4102, %v4329
        %v4423 = vmul.f32 %v4103, %v4331
        %v4424 = vmul.f32 %v4104, %v4333
        %v4425 = vmul.f32 %v4105, %v4335
        %v4426 = vmul.f32 %v4106, %v4337
        %v4427 = vmul.f32 %v4107, %v4339
        %v4428 = vmul.f32 %v4108, %v4341
        %v4429 = vmul.f32 %v4109, %v4343
        %v4430 = vmul.f32 %v4110, %v4345
        %v4431 = vmul.f32 %v4111, %v4347
        %v4432 = vmul.f32 %v4112, %v4349
        %v4433 = vmul.f32 %v4113, %v4351
        %v4434 = vmul.f32 %v4114, %v4353
        %v4435 = vmul.f32 %v4115, %v4355
        %v4436 = vmul.f32 %v4116, %v4357
        %v4437 = vmul.f32 %v4117, %v4359
        %v4438 = vmul.f32 %v4118, %v4361
        %v4439 = vmul.f32 %v4119, %v4363
        %v4440 = vmul.f32 %v4120, %v4365
        %v4441 = vmul.f32 %v4121, %v4367
        %v4442 = vmul.f32 %v4122, %v4369
        %v4443 = vmul.f32 %v4123, %v4371
        %v4444 = vmul.f32 %v4124, %v4373
        %v4445 = vmul.f32 %v4125, %v4375
        %v4446 = vmul.f32 %v4126, %v4377
        %v4447 = vmul.f32 %v4127, %v4379
        %v4448 = vmul.f32 %v4128, %v4381
        %v4449 = vmul.f32 %v4129, %v4383
        %v4450 = vmul.f32 %v4130, %v4385
        %v4451 = vmul.f32 %v4131, %v4387
        %v4452 = vsub.f32 1.0, %v4388
        %v4453 = vsub.f32 1.0, %v4389
        %v4454 = vsub.f32 1.0, %v4390
        %v4455 = vsub.f32 1.0, %v4391
        %v4456 = vsub.f32 1.0, %v4392
        %v4457 = vsub.f32 1.0, %v4393
        %v4458 = vsub.f32 1.0, %v4394
        %v4459 = vsub.f32 1.0, %v4395
        %v4460 = vsub.f32 1.0, %v4396
        %v4461 = vsub.f32 1.0, %v4397
        %v4462 = vsub.f32 1.0, %v4398
        %v4463 = vsub.f32 1.0, %v4399
        %v4464 = vsub.f32 1.0, %v4400
        %v4465 = vsub.f32 1.0, %v4401
        %v4466 = vsub.f32 1.0, %v4402
        %v4467 = vsub.f32 1.0, %v4403
        %v4468 = vsub.f32 1.0, %v4404
        %v4469 = vsub.f32 1.0, %v4405
        %v4470 = vsub.f32 1.0, %v4406
        %v4471 = vsub.f32 1.0, %v4407
        %v4472 = vsub.f32 1.0, %v4408
        %v4473 = vsub.f32 1.0, %v4409
        %v4474 = vsub.f32 1.0, %v4410
        %v4475 = vsub.f32 1.0, %v4411
        %v4476 = vsub.f32 1.0, %v4412
        %v4477 = vsub.f32 1.0, %v4413
        %v4478 = vsub.f32 1.0, %v4414
        %v4479 = vsub.f32 1.0, %v4415
        %v4480 = vsub.f32 1.0, %v4416
        %v4481 = vsub.f32 1.0, %v4417
        %v4482 = vsub.f32 1.0, %v4418
        %v4483 = vsub.f32 1.0, %v4419
        %v4484 = vsub.f32 1.0, %v4420
        %v4485 = vsub.f32 1.0, %v4421
        %v4486 = vsub.f32 1.0, %v4422
        %v4487 = vsub.f32 1.0, %v4423
        %v4488 = vsub.f32 1.0, %v4424
        %v4489 = vsub.f32 1.0, %v4425
        %v4490 = vsub.f32 1.0, %v4426
        %v4491 = vsub.f32 1.0, %v4427
        %v4492 = vsub.f32 1.0, %v4428
        %v4493 = vsub.f32 1.0, %v4429
        %v4494 = vsub.f32 1.0, %v4430
        %v4495 = vsub.f32 1.0, %v4431
        %v4496 = vsub.f32 1.0, %v4432
        %v4497 = vsub.f32 1.0, %v4433
        %v4498 = vsub.f32 1.0, %v4434
        %v4499 = vsub.f32 1.0, %v4435
        %v4500 = vsub.f32 1.0, %v4436
        %v4501 = vsub.f32 1.0, %v4437
        %v4502 = vsub.f32 1.0, %v4438
        %v4503 = vsub.f32 1.0, %v4439
        %v4504 = vsub.f32 1.0, %v4440
        %v4505 = vsub.f32 1.0, %v4441
        %v4506 = vsub.f32 1.0, %v4442
        %v4507 = vsub.f32 1.0, %v4443
        %v4508 = vsub.f32 1.0, %v4444
        %v4509 = vsub.f32 1.0, %v4445
        %v4510 = vsub.f32 1.0, %v4446
        %v4511 = vsub.f32 1.0, %v4447
        %v4512 = vsub.f32 1.0, %v4448
        %v4513 = vsub.f32 1.0, %v4449
        %v4514 = vsub.f32 1.0, %v4450
        %v4515 = vsub.f32 1.0, %v4451
        %v4516 = vmul.f32 %v3044, %v4452
        %v4517 = vmul.f32 %v3045, %v4453
        %v4518 = vmul.f32 %v3046, %v4454
        %v4519 = vmul.f32 %v3047, %v4455
        %v4520 = vmul.f32 %v3048, %v4456
        %v4521 = vmul.f32 %v3049, %v4457
        %v4522 = vmul.f32 %v3050, %v4458
        %v4523 = vmul.f32 %v3051, %v4459
        %v4524 = vmul.f32 %v3052, %v4460
        %v4525 = vmul.f32 %v3053, %v4461
        %v4526 = vmul.f32 %v3054, %v4462
        %v4527 = vmul.f32 %v3055, %v4463
        %v4528 = vmul.f32 %v3056, %v4464
        %v4529 = vmul.f32 %v3057, %v4465
        %v4530 = vmul.f32 %v3058, %v4466
        %v4531 = vmul.f32 %v3059, %v4467
        %v4532 = vmul.f32 %v3060, %v4468
        %v4533 = vmul.f32 %v3061, %v4469
        %v4534 = vmul.f32 %v3062, %v4470
        %v4535 = vmul.f32 %v3063, %v4471
        %v4536 = vmul.f32 %v3064, %v4472
        %v4537 = vmul.f32 %v3065, %v4473
        %v4538 = vmul.f32 %v3066, %v4474
        %v4539 = vmul.f32 %v3067, %v4475
        %v4540 = vmul.f32 %v3068, %v4476
        %v4541 = vmul.f32 %v3069, %v4477
        %v4542 = vmul.f32 %v3070, %v4478
        %v4543 = vmul.f32 %v3071, %v4479
        %v4544 = vmul.f32 %v3072, %v4480
        %v4545 = vmul.f32 %v3073, %v4481
        %v4546 = vmul.f32 %v3074, %v4482
        %v4547 = vmul.f32 %v3075, %v4483
        %v4548 = vmul.f32 %v3076, %v4484
        %v4549 = vmul.f32 %v3077, %v4485
        %v4550 = vmul.f32 %v3078, %v4486
        %v4551 = vmul.f32 %v3079, %v4487
        %v4552 = vmul.f32 %v3080, %v4488
        %v4553 = vmul.f32 %v3081, %v4489
        %v4554 = vmul.f32 %v3082, %v4490
        %v4555 = vmul.f32 %v3083, %v4491
        %v4556 = vmul.f32 %v3084, %v4492
        %v4557 = vmul.f32 %v3085, %v4493
        %v4558 = vmul.f32 %v3086, %v4494
        %v4559 = vmul.f32 %v3087, %v4495
        %v4560 = vmul.f32 %v3088, %v4496
        %v4561 = vmul.f32 %v3089, %v4497
        %v4562 = vmul.f32 %v3090, %v4498
        %v4563 = vmul.f32 %v3091, %v4499
        %v4564 = vmul.f32 %v3092, %v4500
        %v4565 = vmul.f32 %v3093, %v4501
        %v4566 = vmul.f32 %v3094, %v4502
        %v4567 = vmul.f32 %v3095, %v4503
        %v4568 = vmul.f32 %v3096, %v4504
        %v4569 = vmul.f32 %v3097, %v4505
        %v4570 = vmul.f32 %v3098, %v4506
        %v4571 = vmul.f32 %v3099, %v4507
        %v4572 = vmul.f32 %v3100, %v4508
        %v4573 = vmul.f32 %v3101, %v4509
        %v4574 = vmul.f32 %v3102, %v4510
        %v4575 = vmul.f32 %v3103, %v4511
        %v4576 = vmul.f32 %v3104, %v4512
        %v4577 = vmul.f32 %v3105, %v4513
        %v4578 = vmul.f32 %v3106, %v4514
        %v4579 = vmul.f32 %v3107, %v4515
        %v4580 = vadd.f32 %v4516, 1.0
        %v4581 = vadd.f32 %v4517, 1.0
        %v4582 = vadd.f32 %v4518, 1.0
        %v4583 = vadd.f32 %v4519, 1.0
        %v4584 = vadd.f32 %v4520, 1.0
        %v4585 = vadd.f32 %v4521, 1.0
        %v4586 = vadd.f32 %v4522, 1.0
        %v4587 = vadd.f32 %v4523, 1.0
        %v4588 = vadd.f32 %v4524, 1.0
        %v4589 = vadd.f32 %v4525, 1.0
        %v4590 = vadd.f32 %v4526, 1.0
        %v4591 = vadd.f32 %v4527, 1.0
        %v4592 = vadd.f32 %v4528, 1.0
        %v4593 = vadd.f32 %v4529, 1.0
        %v4594 = vadd.f32 %v4530, 1.0
        %v4595 = vadd.f32 %v4531, 1.0
        %v4596 = vadd.f32 %v4532, 1.0
        %v4597 = vadd.f32 %v4533, 1.0
        %v4598 = vadd.f32 %v4534, 1.0
        %v4599 = vadd.f32 %v4535, 1.0
        %v4600 = vadd.f32 %v4536, 1.0
        %v4601 = vadd.f32 %v4537, 1.0
        %v4602 = vadd.f32 %v4538, 1.0
        %v4603 = vadd.f32 %v4539, 1.0
        %v4604 = vadd.f32 %v4540, 1.0
        %v4605 = vadd.f32 %v4541, 1.0
        %v4606 = vadd.f32 %v4542, 1.0
        %v4607 = vadd.f32 %v4543, 1.0
        %v4608 = vadd.f32 %v4544, 1.0
        %v4609 = vadd.f32 %v4545, 1.0
        %v4610 = vadd.f32 %v4546, 1.0
        %v4611 = vadd.f32 %v4547, 1.0
        %v4612 = vadd.f32 %v4548, 1.0
        %v4613 = vadd.f32 %v4549, 1.0
        %v4614 = vadd.f32 %v4550, 1.0
        %v4615 = vadd.f32 %v4551, 1.0
        %v4616 = vadd.f32 %v4552, 1.0
        %v4617 = vadd.f32 %v4553, 1.0
        %v4618 = vadd.f32 %v4554, 1.0
        %v4619 = vadd.f32 %v4555, 1.0
        %v4620 = vadd.f32 %v4556, 1.0
        %v4621 = vadd.f32 %v4557, 1.0
        %v4622 = vadd.f32 %v4558, 1.0
        %v4623 = vadd.f32 %v4559, 1.0
        %v4624 = vadd.f32 %v4560, 1.0
        %v4625 = vadd.f32 %v4561, 1.0
        %v4626 = vadd.f32 %v4562, 1.0
        %v4627 = vadd.f32 %v4563, 1.0
        %v4628 = vadd.f32 %v4564, 1.0
        %v4629 = vadd.f32 %v4565, 1.0
        %v4630 = vadd.f32 %v4566, 1.0
        %v4631 = vadd.f32 %v4567, 1.0
        %v4632 = vadd.f32 %v4568, 1.0
        %v4633 = vadd.f32 %v4569, 1.0
        %v4634 = vadd.f32 %v4570, 1.0
        %v4635 = vadd.f32 %v4571, 1.0
        %v4636 = vadd.f32 %v4572, 1.0
        %v4637 = vadd.f32 %v4573, 1.0
        %v4638 = vadd.f32 %v4574, 1.0
        %v4639 = vadd.f32 %v4575, 1.0
        %v4640 = vadd.f32 %v4576, 1.0
        %v4641 = vadd.f32 %v4577, 1.0
        %v4642 = vadd.f32 %v4578, 1.0
        %v4643 = vadd.f32 %v4579, 1.0
        %v4644 = vmul.f32 %v2789, %v4580
        %v4645 = vmul.f32 %v2791, %v4581
        %v4646 = vmul.f32 %v2902, %v4582
        %v4647 = vmul.f32 %v2904, %v4583
        %v4648 = vmul.f32 %v2793, %v4584
        %v4649 = vmul.f32 %v2795, %v4585
        %v4650 = vmul.f32 %v2906, %v4586
        %v4651 = vmul.f32 %v2908, %v4587
        %v4652 = vmul.f32 %v2799, %v4588
        %v4653 = vmul.f32 %v2801, %v4589
        %v4654 = vmul.f32 %v2912, %v4590
        %v4655 = vmul.f32 %v2914, %v4591
        %v4656 = vmul.f32 %v2803, %v4592
        %v4657 = vmul.f32 %v2805, %v4593
        %v4658 = vmul.f32 %v2916, %v4594
        %v4659 = vmul.f32 %v2918, %v4595
        %v4660 = vmul.f32 %v2809, %v4596
        %v4661 = vmul.f32 %v2811, %v4597
        %v4662 = vmul.f32 %v2922, %v4598
        %v4663 = vmul.f32 %v2924, %v4599
        %v4664 = vmul.f32 %v2813, %v4600
        %v4665 = vmul.f32 %v2815, %v4601
        %v4666 = vmul.f32 %v2926, %v4602
        %v4667 = vmul.f32 %v2928, %v4603
        %v4668 = vmul.f32 %v2819, %v4604
        %v4669 = vmul.f32 %v2821, %v4605
        %v4670 = vmul.f32 %v2932, %v4606
        %v4671 = vmul.f32 %v2934, %v4607
        %v4672 = vmul.f32 %v2823, %v4608
        %v4673 = vmul.f32 %v2825, %v4609
        %v4674 = vmul.f32 %v2936, %v4610
        %v4675 = vmul.f32 %v2938, %v4611
        %v4676 = vmul.f32 %v2829, %v4612
        %v4677 = vmul.f32 %v2831, %v4613
        %v4678 = vmul.f32 %v2942, %v4614
        %v4679 = vmul.f32 %v2944, %v4615
        %v4680 = vmul.f32 %v2833, %v4616
        %v4681 = vmul.f32 %v2835, %v4617
        %v4682 = vmul.f32 %v2946, %v4618
        %v4683 = vmul.f32 %v2948, %v4619
        %v4684 = vmul.f32 %v2839, %v4620
        %v4685 = vmul.f32 %v2841, %v4621
        %v4686 = vmul.f32 %v2952, %v4622
        %v4687 = vmul.f32 %v2954, %v4623
        %v4688 = vmul.f32 %v2843, %v4624
        %v4689 = vmul.f32 %v2845, %v4625
        %v4690 = vmul.f32 %v2956, %v4626
        %v4691 = vmul.f32 %v2958, %v4627
        %v4692 = vmul.f32 %v2849, %v4628
        %v4693 = vmul.f32 %v2851, %v4629
        %v4694 = vmul.f32 %v2962, %v4630
        %v4695 = vmul.f32 %v2964, %v4631
        %v4696 = vmul.f32 %v2853, %v4632
        %v4697 = vmul.f32 %v2855, %v4633
        %v4698 = vmul.f32 %v2966, %v4634
        %v4699 = vmul.f32 %v2968, %v4635
        %v4700 = vmul.f32 %v2859, %v4636
        %v4701 = vmul.f32 %v2861, %v4637
        %v4702 = vmul.f32 %v2972, %v4638
        %v4703 = vmul.f32 %v2974, %v4639
        %v4704 = vmul.f32 %v2863, %v4640
        %v4705 = vmul.f32 %v2865, %v4641
        %v4706 = vmul.f32 %v2976, %v4642
        %v4707 = vmul.f32 %v2978, %v4643
        %v4708 = vpack.c.bf16 %v4648, %v4644
        %v4709 = vpack.c.bf16 %v4649, %v4645
        %v4710 = vpack.c.bf16 %v4650, %v4646
        %v4711 = vpack.c.bf16 %v4651, %v4647
        %v4712 = vpack.c.bf16 %v4656, %v4652
        %v4713 = vpack.c.bf16 %v4657, %v4653
        %v4714 = vpack.c.bf16 %v4658, %v4654
        %v4715 = vpack.c.bf16 %v4659, %v4655
        %v4716 = vpack.c.bf16 %v4664, %v4660
        %v4717 = vpack.c.bf16 %v4665, %v4661
        %v4718 = vpack.c.bf16 %v4666, %v4662
        %v4719 = vpack.c.bf16 %v4667, %v4663
        %v4720 = vpack.c.bf16 %v4672, %v4668
        %v4721 = vpack.c.bf16 %v4673, %v4669
        %v4722 = vpack.c.bf16 %v4674, %v4670
        %v4723 = vpack.c.bf16 %v4675, %v4671
        %v4724 = vpack.c.bf16 %v4680, %v4676
        %v4725 = vpack.c.bf16 %v4681, %v4677
        %v4726 = vpack.c.bf16 %v4682, %v4678
        %v4727 = vpack.c.bf16 %v4683, %v4679
        %v4728 = vpack.c.bf16 %v4688, %v4684
        %v4729 = vpack.c.bf16 %v4689, %v4685
        %v4730 = vpack.c.bf16 %v4690, %v4686
        %v4731 = vpack.c.bf16 %v4691, %v4687
        %v4732 = vpack.c.bf16 %v4696, %v4692
        %v4733 = vpack.c.bf16 %v4697, %v4693
        %v4734 = vpack.c.bf16 %v4698, %v4694
        %v4735 = vpack.c.bf16 %v4699, %v4695
        %v4736 = vpack.c.bf16 %v4704, %v4700
        %v4737 = vpack.c.bf16 %v4705, %v4701
        %v4738 = vpack.c.bf16 %v4706, %v4702
        %v4739 = vpack.c.bf16 %v4707, %v4703
        %v4740 = vld [vmem:[#allocation16] sm:$0xf]
        %v4741 = vld [vmem:[#allocation16 + $0x4] sm:$0xf]
        %v4742 = vld [vmem:[#allocation16 + $0x8] sm:$0xf]
        %v4743 = vld [vmem:[#allocation16 + $0xc] sm:$0xf]
        %v4744 = vld [vmem:[#allocation16 + $0x10] sm:$0xf]
        %v4745 = vld [vmem:[#allocation16 + $0x14] sm:$0xf]
        %v4746 = vld [vmem:[#allocation16 + $0x18] sm:$0xf]
        %v4747 = vld [vmem:[#allocation16 + $0x1c] sm:$0xf]
        %v4748 = vld [vmem:[#allocation16 + $0x20] sm:$0xf]
        %v4749 = vld [vmem:[#allocation16 + $0x24] sm:$0xf]
        %v4750 = vld [vmem:[#allocation16 + $0x28] sm:$0xf]
        %v4751 = vld [vmem:[#allocation16 + $0x2c] sm:$0xf]
        %v4752 = vld [vmem:[#allocation16 + $0x30] sm:$0xf]
        %v4753 = vld [vmem:[#allocation16 + $0x34] sm:$0xf]
        %v4754 = vld [vmem:[#allocation16 + $0x38] sm:$0xf]
        %v4755 = vld [vmem:[#allocation16 + $0x3c] sm:$0xf]
        %v4756 = vld [vmem:[#allocation16 + $0x40] sm:$0xf]
        %v4757 = vld [vmem:[#allocation16 + $0x44] sm:$0xf]
        %v4758 = vld [vmem:[#allocation16 + $0x48] sm:$0xf]
        %v4759 = vld [vmem:[#allocation16 + $0x4c] sm:$0xf]
        %v4760 = vld [vmem:[#allocation16 + $0x50] sm:$0xf]
        %v4761 = vld [vmem:[#allocation16 + $0x54] sm:$0xf]
        %v4762 = vld [vmem:[#allocation16 + $0x58] sm:$0xf]
        %v4763 = vld [vmem:[#allocation16 + $0x5c] sm:$0xf]
        %v4764 = vld [vmem:[#allocation16 + $0x60] sm:$0xf]
        %v4765 = vld [vmem:[#allocation16 + $0x64] sm:$0xf]
        %v4766 = vld [vmem:[#allocation16 + $0x68] sm:$0xf]
        %v4767 = vld [vmem:[#allocation16 + $0x6c] sm:$0xf]
        %v4768 = vld [vmem:[#allocation16 + $0x70] sm:$0xf]
        %v4769 = vld [vmem:[#allocation16 + $0x74] sm:$0xf]
        %v4770 = vld [vmem:[#allocation16 + $0x78] sm:$0xf]
        %v4771 = vld [vmem:[#allocation16 + $0x7c] sm:$0xf]
        %v4772 = vld [vmem:[#allocation16 + $0x80] sm:$0xf]
        %v4773 = vld [vmem:[#allocation16 + $0x84] sm:$0xf]
        %v4774 = vld [vmem:[#allocation16 + $0x88] sm:$0xf]
        %v4775 = vld [vmem:[#allocation16 + $0x8c] sm:$0xf]
        %v4776 = vld [vmem:[#allocation16 + $0x90] sm:$0xf]
        %v4777 = vld [vmem:[#allocation16 + $0x94] sm:$0xf]
        %v4778 = vld [vmem:[#allocation16 + $0x98] sm:$0xf]
        %v4779 = vld [vmem:[#allocation16 + $0x9c] sm:$0xf]
        %v4780 = vld [vmem:[#allocation16 + $0xa0] sm:$0xf]
        %v4781 = vld [vmem:[#allocation16 + $0xa4] sm:$0xf]
        %v4782 = vld [vmem:[#allocation16 + $0xa8] sm:$0xf]
        %v4783 = vld [vmem:[#allocation16 + $0xac] sm:$0xf]
        %v4784 = vld [vmem:[#allocation16 + $0xb0] sm:$0xf]
        %v4785 = vld [vmem:[#allocation16 + $0xb4] sm:$0xf]
        %v4786 = vld [vmem:[#allocation16 + $0xb8] sm:$0xf]
        %v4787 = vld [vmem:[#allocation16 + $0xbc] sm:$0xf]
        %v4788 = vld [vmem:[#allocation16 + $0xc0] sm:$0xf]
        %v4789 = vld [vmem:[#allocation16 + $0xc4] sm:$0xf]
        %v4790 = vld [vmem:[#allocation16 + $0xc8] sm:$0xf]
        %v4791 = vld [vmem:[#allocation16 + $0xcc] sm:$0xf]
        %v4792 = vld [vmem:[#allocation16 + $0xd0] sm:$0xf]
        %v4793 = vld [vmem:[#allocation16 + $0xd4] sm:$0xf]
        %v4794 = vld [vmem:[#allocation16 + $0xd8] sm:$0xf]
        %v4795 = vld [vmem:[#allocation16 + $0xdc] sm:$0xf]
        %v4796 = vld [vmem:[#allocation16 + $0xe0] sm:$0xf]
        %v4797 = vld [vmem:[#allocation16 + $0xe4] sm:$0xf]
        %v4798 = vld [vmem:[#allocation16 + $0xe8] sm:$0xf]
        %v4799 = vld [vmem:[#allocation16 + $0xec] sm:$0xf]
        %v4800 = vld [vmem:[#allocation16 + $0xf0] sm:$0xf]
        %v4801 = vld [vmem:[#allocation16 + $0xf4] sm:$0xf]
        %v4802 = vld [vmem:[#allocation16 + $0xf8] sm:$0xf]
        %v4803 = vld [vmem:[#allocation16 + $0xfc] sm:$0xf]
        %v4804 = vlaneseq
        %v4805 = vshrl.u32 %v4804, 7
        %v4806 = vsub.s32 0, %v4805
        %v4807 = vrot.slane %v547, %v4806
        %v4872 = vunpack.c.l.b16 %v4740
        %v4873 = vunpack.c.l.b16 %v4741
        %v4874 = vunpack.c.l.b16 %v4742
        %v4875 = vunpack.c.l.b16 %v4743
        %v4876 = vunpack.c.l.b16 %v4744
        %v4877 = vunpack.c.l.b16 %v4745
        %v4878 = vunpack.c.l.b16 %v4746
        %v4879 = vunpack.c.l.b16 %v4747
        %v4880 = vunpack.c.l.b16 %v4748
        %v4881 = vunpack.c.l.b16 %v4749
        %v4882 = vunpack.c.l.b16 %v4750
        %v4883 = vunpack.c.l.b16 %v4751
        %v4884 = vunpack.c.l.b16 %v4752
        %v4885 = vunpack.c.l.b16 %v4753
        %v4886 = vunpack.c.l.b16 %v4754
        %v4887 = vunpack.c.l.b16 %v4755
        %v4888 = vunpack.c.l.b16 %v4756
        %v4889 = vunpack.c.l.b16 %v4757
        %v4890 = vunpack.c.l.b16 %v4758
        %v4891 = vunpack.c.l.b16 %v4759
        %v4892 = vunpack.c.l.b16 %v4760
        %v4893 = vunpack.c.l.b16 %v4761
        %v4894 = vunpack.c.l.b16 %v4762
        %v4895 = vunpack.c.l.b16 %v4763
        %v4896 = vunpack.c.l.b16 %v4764
        %v4897 = vunpack.c.l.b16 %v4765
        %v4898 = vunpack.c.l.b16 %v4766
        %v4899 = vunpack.c.l.b16 %v4767
        %v4900 = vunpack.c.l.b16 %v4768
        %v4901 = vunpack.c.l.b16 %v4769
        %v4902 = vunpack.c.l.b16 %v4770
        %v4903 = vunpack.c.l.b16 %v4771
        %v4904 = vunpack.c.l.b16 %v4772
        %v4905 = vunpack.c.l.b16 %v4773
        %v4906 = vunpack.c.l.b16 %v4774
        %v4907 = vunpack.c.l.b16 %v4775
        %v4908 = vunpack.c.l.b16 %v4776
        %v4909 = vunpack.c.l.b16 %v4777
        %v4910 = vunpack.c.l.b16 %v4778
        %v4911 = vunpack.c.l.b16 %v4779
        %v4912 = vunpack.c.l.b16 %v4780
        %v4913 = vunpack.c.l.b16 %v4781
        %v4914 = vunpack.c.l.b16 %v4782
        %v4915 = vunpack.c.l.b16 %v4783
        %v4916 = vunpack.c.l.b16 %v4784
        %v4917 = vunpack.c.l.b16 %v4785
        %v4918 = vunpack.c.l.b16 %v4786
        %v4919 = vunpack.c.l.b16 %v4787
        %v4920 = vunpack.c.l.b16 %v4788
        %v4921 = vunpack.c.l.b16 %v4789
        %v4922 = vunpack.c.l.b16 %v4790
        %v4923 = vunpack.c.l.b16 %v4791
        %v4924 = vunpack.c.l.b16 %v4792
        %v4925 = vunpack.c.l.b16 %v4793
        %v4926 = vunpack.c.l.b16 %v4794
        %v4927 = vunpack.c.l.b16 %v4795
        %v4928 = vunpack.c.l.b16 %v4796
        %v4929 = vunpack.c.l.b16 %v4797
        %v4930 = vunpack.c.l.b16 %v4798
        %v4931 = vunpack.c.l.b16 %v4799
        %v4932 = vunpack.c.l.b16 %v4800
        %v4933 = vunpack.c.l.b16 %v4801
        %v4934 = vunpack.c.l.b16 %v4802
        %v4935 = vunpack.c.l.b16 %v4803
        %v4936 = vpack.c.b16 %v4873, %v4872
        %v4937 = vpack.c.b16 %v4875, %v4874
        %v4938 = vpack.c.b16 %v4877, %v4876
        %v4939 = vpack.c.b16 %v4879, %v4878
        %v4940 = vpack.c.b16 %v4881, %v4880
        %v4941 = vpack.c.b16 %v4883, %v4882
        %v4942 = vpack.c.b16 %v4885, %v4884
        %v4943 = vpack.c.b16 %v4887, %v4886
        %v4944 = vpack.c.b16 %v4889, %v4888
        %v4945 = vpack.c.b16 %v4891, %v4890
        %v4946 = vpack.c.b16 %v4893, %v4892
        %v4947 = vpack.c.b16 %v4895, %v4894
        %v4948 = vpack.c.b16 %v4897, %v4896
        %v4949 = vpack.c.b16 %v4899, %v4898
        %v4950 = vpack.c.b16 %v4901, %v4900
        %v4951 = vpack.c.b16 %v4903, %v4902
        %v4952 = vpack.c.b16 %v4905, %v4904
        %v4953 = vpack.c.b16 %v4907, %v4906
        %v4954 = vpack.c.b16 %v4909, %v4908
        %v4955 = vpack.c.b16 %v4911, %v4910
        %v4956 = vpack.c.b16 %v4913, %v4912
        %v4957 = vpack.c.b16 %v4915, %v4914
        %v4958 = vpack.c.b16 %v4917, %v4916
        %v4959 = vpack.c.b16 %v4919, %v4918
        %v4960 = vpack.c.b16 %v4921, %v4920
        %v4961 = vpack.c.b16 %v4923, %v4922
        %v4962 = vpack.c.b16 %v4925, %v4924
        %v4963 = vpack.c.b16 %v4927, %v4926
        %v4964 = vpack.c.b16 %v4929, %v4928
        %v4965 = vpack.c.b16 %v4931, %v4930
        %v4966 = vpack.c.b16 %v4933, %v4932
        %v4967 = vpack.c.b16 %v4935, %v4934
        %5000 = vmatprep.subr.bf16.mxu0 0
        %5001 = vmatpush1.bf16.msra.mxu0 %v4936
        %5002 = vmatprep.subr.bf16.mxu0 0
        %5003 = vmatpush1.bf16.msra.mxu0 %v4937
        %5004 = vmatprep.subr.bf16.mxu0 0
        %5005 = vmatpush1.bf16.msra.mxu0 %v4938
        %5006 = vmatprep.subr.bf16.mxu0 0
        %5007 = vmatpush1.bf16.msra.mxu0 %v4939
        %5008 = vmatprep.subr.bf16.mxu0 0
        %5009 = vmatpush1.bf16.msra.mxu0 %v4940
        %5010 = vmatprep.subr.bf16.mxu0 0
        %5011 = vmatpush1.bf16.msra.mxu0 %v4941
        %5012 = vmatprep.subr.bf16.mxu0 0
        %5013 = vmatpush1.bf16.msra.mxu0 %v4942
        %5014 = vmatprep.subr.bf16.mxu0 0
        %5015 = vmatpush1.bf16.msra.mxu0 %v4943
        %5016 = vmatprep.subr.bf16.mxu0 0
        %5017 = vmatpush1.bf16.msra.mxu0 %v4944
        %5018 = vmatprep.subr.bf16.mxu0 0
        %5019 = vmatpush1.bf16.msra.mxu0 %v4945
        %5020 = vmatprep.subr.bf16.mxu0 0
        %5021 = vmatpush1.bf16.msra.mxu0 %v4946
        %5022 = vmatprep.subr.bf16.mxu0 0
        %5023 = vmatpush1.bf16.msra.mxu0 %v4947
        %5024 = vmatprep.subr.bf16.mxu0 0
        %5025 = vmatpush1.bf16.msra.mxu0 %v4948
        %5026 = vmatprep.subr.bf16.mxu0 0
        %5027 = vmatpush1.bf16.msra.mxu0 %v4949
        %5028 = vmatprep.subr.bf16.mxu0 0
        %5029 = vmatpush1.bf16.msra.mxu0 %v4950
        %5030 = vmatprep.subr.bf16.mxu0 0
        %5031 = vmatpush1.bf16.msra.mxu0 %v4951
        %5032 = vmatprep.mubr.bf16.mxu0 %v4709
        %5033 = vmatmul.mubr.bf16.gmra.mrb[0].mxu0 %v4708
        %v5034 = vpop.f32.mrb[0].mxu0
        %v5035 = vadd.f32 %v4807, %v5034
        %v5036 = vpop.f32.mrb[0].mxu0
        %v5037 = vpop.f32.mrb[0].mxu0
        %v5038 = vadd.f32 %v4807, %v5037
        %v5039 = vpop.f32.mrb[0].mxu0
        %5040 = vmatprep.mubr.bf16.mxu0 %v4713
        %5041 = vmatmul.mubr.bf16.gmra.mrb[0].mxu0 %v4712
        %v5042 = vpop.f32.mrb[0].mxu0
        %v5043 = vadd.f32 %v4807, %v5042
        %v5044 = vpop.f32.mrb[0].mxu0
        %v5045 = vpop.f32.mrb[0].mxu0
        %v5046 = vadd.f32 %v4807, %v5045
        %v5047 = vpop.f32.mrb[0].mxu0
        %5048 = vmatprep.mubr.bf16.mxu0 %v4717
        %5049 = vmatmul.mubr.bf16.gmra.mrb[0].mxu0 %v4716
        %v5050 = vpop.f32.mrb[0].mxu0
        %v5051 = vadd.f32 %v4807, %v5050
        %v5052 = vpop.f32.mrb[0].mxu0
        %v5053 = vpop.f32.mrb[0].mxu0
        %v5054 = vadd.f32 %v4807, %v5053
        %v5055 = vpop.f32.mrb[0].mxu0
        %5056 = vmatprep.mubr.bf16.mxu0 %v4721
        %5057 = vmatmul.mubr.bf16.gmra.mrb[0].mxu0 %v4720
        %v5058 = vpop.f32.mrb[0].mxu0
        %v5059 = vadd.f32 %v4807, %v5058
        %v5060 = vpop.f32.mrb[0].mxu0
        %v5061 = vpop.f32.mrb[0].mxu0
        %v5062 = vadd.f32 %v4807, %v5061
        %v5063 = vpop.f32.mrb[0].mxu0
        %5064 = vmatprep.mubr.bf16.mxu0 %v4725
        %5065 = vmatmul.mubr.bf16.gmra.mrb[0].mxu0 %v4724
        %v5066 = vpop.f32.mrb[0].mxu0
        %v5067 = vadd.f32 %v4807, %v5066
        %v5068 = vpop.f32.mrb[0].mxu0
        %v5069 = vpop.f32.mrb[0].mxu0
        %v5070 = vadd.f32 %v4807, %v5069
        %v5071 = vpop.f32.mrb[0].mxu0
        %5072 = vmatprep.mubr.bf16.mxu0 %v4729
        %5073 = vmatmul.mubr.bf16.gmra.mrb[0].mxu0 %v4728
        %v5074 = vpop.f32.mrb[0].mxu0
        %v5075 = vadd.f32 %v4807, %v5074
        %v5076 = vpop.f32.mrb[0].mxu0
        %v5077 = vpop.f32.mrb[0].mxu0
        %v5078 = vadd.f32 %v4807, %v5077
        %v5079 = vpop.f32.mrb[0].mxu0
        %5080 = vmatprep.mubr.bf16.mxu0 %v4733
        %5081 = vmatmul.mubr.bf16.gmra.mrb[0].mxu0 %v4732
        %v5082 = vpop.f32.mrb[0].mxu0
        %v5083 = vadd.f32 %v4807, %v5082
        %v5084 = vpop.f32.mrb[0].mxu0
        %v5085 = vpop.f32.mrb[0].mxu0
        %v5086 = vadd.f32 %v4807, %v5085
        %v5087 = vpop.f32.mrb[0].mxu0
        %5088 = vmatprep.mubr.bf16.mxu0 %v4737
        %5089 = vmatmul.mubr.bf16.gmra.mrb[0].mxu0 %v4736
        %v5090 = vpop.f32.mrb[0].mxu0
        %v5091 = vadd.f32 %v4807, %v5090
        %v5092 = vpop.f32.mrb[0].mxu0
        %v5093 = vpop.f32.mrb[0].mxu0
        %v5094 = vadd.f32 %v4807, %v5093
        %v5095 = vpop.f32.mrb[0].mxu0
        %5096 = vdwg.mxu0
        %5097 = vmatprep.subr.bf16.mxu0 0
        %5098 = vmatpush1.bf16.msra.mxu0 %v4952
        %5099 = vmatprep.subr.bf16.mxu0 0
        %5100 = vmatpush1.bf16.msra.mxu0 %v4953
        %5101 = vmatprep.subr.bf16.mxu0 0
        %5102 = vmatpush1.bf16.msra.mxu0 %v4954
        %5103 = vmatprep.subr.bf16.mxu0 0
        %5104 = vmatpush1.bf16.msra.mxu0 %v4955
        %5105 = vmatprep.subr.bf16.mxu0 0
        %5106 = vmatpush1.bf16.msra.mxu0 %v4956
        %5107 = vmatprep.subr.bf16.mxu0 0
        %5108 = vmatpush1.bf16.msra.mxu0 %v4957
        %5109 = vmatprep.subr.bf16.mxu0 0
        %5110 = vmatpush1.bf16.msra.mxu0 %v4958
        %5111 = vmatprep.subr.bf16.mxu0 0
        %5112 = vmatpush1.bf16.msra.mxu0 %v4959
        %5113 = vmatprep.subr.bf16.mxu0 0
        %5114 = vmatpush1.bf16.msra.mxu0 %v4960
        %5115 = vmatprep.subr.bf16.mxu0 0
        %5116 = vmatpush1.bf16.msra.mxu0 %v4961
        %5117 = vmatprep.subr.bf16.mxu0 0
        %5118 = vmatpush1.bf16.msra.mxu0 %v4962
        %5119 = vmatprep.subr.bf16.mxu0 0
        %5120 = vmatpush1.bf16.msra.mxu0 %v4963
        %5121 = vmatprep.subr.bf16.mxu0 0
        %5122 = vmatpush1.bf16.msra.mxu0 %v4964
        %5123 = vmatprep.subr.bf16.mxu0 0
        %5124 = vmatpush1.bf16.msra.mxu0 %v4965
        %5125 = vmatprep.subr.bf16.mxu0 0
        %5126 = vmatpush1.bf16.msra.mxu0 %v4966
        %5127 = vmatprep.subr.bf16.mxu0 0
        %5128 = vmatpush1.bf16.msra.mxu0 %v4967
        %5129 = vmatprep.mubr.bf16.mxu0 %v4711
        %5130 = vmatmul.mubr.bf16.gmra.mrb[0].mxu0 %v4710
        %v5131 = vpop.f32.mrb[0].mxu0
        %v5132 = vadd.f32 %v5035, %v5131
        %v5133 = vpop.f32.mrb[0].mxu0
        %v5134 = vpop.f32.mrb[0].mxu0
        %v5135 = vadd.f32 %v5038, %v5134
        %v5136 = vpop.f32.mrb[0].mxu0
        %5137 = vmatprep.mubr.bf16.mxu0 %v4715
        %5138 = vmatmul.mubr.bf16.gmra.mrb[0].mxu0 %v4714
        %v5139 = vpop.f32.mrb[0].mxu0
        %v5140 = vadd.f32 %v5043, %v5139
        %v5141 = vpop.f32.mrb[0].mxu0
        %v5142 = vpop.f32.mrb[0].mxu0
        %v5143 = vadd.f32 %v5046, %v5142
        %v5144 = vpop.f32.mrb[0].mxu0
        %5145 = vmatprep.mubr.bf16.mxu0 %v4719
        %5146 = vmatmul.mubr.bf16.gmra.mrb[0].mxu0 %v4718
        %v5147 = vpop.f32.mrb[0].mxu0
        %v5148 = vadd.f32 %v5051, %v5147
        %v5149 = vpop.f32.mrb[0].mxu0
        %v5150 = vpop.f32.mrb[0].mxu0
        %v5151 = vadd.f32 %v5054, %v5150
        %v5152 = vpop.f32.mrb[0].mxu0
        %5153 = vmatprep.mubr.bf16.mxu0 %v4723
        %5154 = vmatmul.mubr.bf16.gmra.mrb[0].mxu0 %v4722
        %v5155 = vpop.f32.mrb[0].mxu0
        %v5156 = vadd.f32 %v5059, %v5155
        %v5157 = vpop.f32.mrb[0].mxu0
        %v5158 = vpop.f32.mrb[0].mxu0
        %v5159 = vadd.f32 %v5062, %v5158
        %v5160 = vpop.f32.mrb[0].mxu0
        %5161 = vmatprep.mubr.bf16.mxu0 %v4727
        %5162 = vmatmul.mubr.bf16.gmra.mrb[0].mxu0 %v4726
        %v5163 = vpop.f32.mrb[0].mxu0
        %v5164 = vadd.f32 %v5067, %v5163
        %v5165 = vpop.f32.mrb[0].mxu0
        %v5166 = vpop.f32.mrb[0].mxu0
        %v5167 = vadd.f32 %v5070, %v5166
        %v5168 = vpop.f32.mrb[0].mxu0
        %5169 = vmatprep.mubr.bf16.mxu0 %v4731
        %5170 = vmatmul.mubr.bf16.gmra.mrb[0].mxu0 %v4730
        %v5171 = vpop.f32.mrb[0].mxu0
        %v5172 = vadd.f32 %v5075, %v5171
        %v5173 = vpop.f32.mrb[0].mxu0
        %v5174 = vpop.f32.mrb[0].mxu0
        %v5175 = vadd.f32 %v5078, %v5174
        %v5176 = vpop.f32.mrb[0].mxu0
        %5177 = vmatprep.mubr.bf16.mxu0 %v4735
        %5178 = vmatmul.mubr.bf16.gmra.mrb[0].mxu0 %v4734
        %v5179 = vpop.f32.mrb[0].mxu0
        %v5180 = vadd.f32 %v5083, %v5179
        %v5181 = vpop.f32.mrb[0].mxu0
        %v5182 = vpop.f32.mrb[0].mxu0
        %v5183 = vadd.f32 %v5086, %v5182
        %v5184 = vpop.f32.mrb[0].mxu0
        %5185 = vmatprep.mubr.bf16.mxu0 %v4739
        %5186 = vmatmul.mubr.bf16.gmra.mrb[0].mxu0 %v4738
        %v5187 = vpop.f32.mrb[0].mxu0
        %v5188 = vadd.f32 %v5091, %v5187
        %v5189 = vpop.f32.mrb[0].mxu0
        %v5190 = vpop.f32.mrb[0].mxu0
        %v5191 = vadd.f32 %v5094, %v5190
        %v5192 = vpop.f32.mrb[0].mxu0
        %5193 = vdwg.mxu0
        %v5194 = vadd.f32 %v495, %v5132
        %v5195 = vadd.f32 %v496, %v5135
        %v5196 = vadd.f32 %v497, %v5140
        %v5197 = vadd.f32 %v498, %v5143
        %v5198 = vadd.f32 %v499, %v5148
        %v5199 = vadd.f32 %v500, %v5151
        %v5200 = vadd.f32 %v501, %v5156
        %v5201 = vadd.f32 %v502, %v5159
        %v5202 = vadd.f32 %v503, %v5164
        %v5203 = vadd.f32 %v504, %v5167
        %v5204 = vadd.f32 %v505, %v5172
        %v5205 = vadd.f32 %v506, %v5175
        %v5206 = vadd.f32 %v507, %v5180
        %v5207 = vadd.f32 %v508, %v5183
        %v5208 = vadd.f32 %v509, %v5188
        %v5209 = vadd.f32 %v510, %v5191
        %5210 = vst [vmem:[%s491] sm:$0xff] %v5194
        %5211 = vst [vmem:[%s491 + $0x8] sm:$0xff] %v5195
        %5212 = vst [vmem:[%s491 + $0x10] sm:$0xff] %v5196
        %5213 = vst [vmem:[%s491 + $0x18] sm:$0xff] %v5197
        %5214 = vst [vmem:[%s491 + $0x20] sm:$0xff] %v5198
        %5215 = vst [vmem:[%s491 + $0x28] sm:$0xff] %v5199
        %5216 = vst [vmem:[%s491 + $0x30] sm:$0xff] %v5200
        %5217 = vst [vmem:[%s491 + $0x38] sm:$0xff] %v5201
        %5218 = vst [vmem:[%s491 + $0x40] sm:$0xff] %v5202
        %5219 = vst [vmem:[%s491 + $0x48] sm:$0xff] %v5203
        %5220 = vst [vmem:[%s491 + $0x50] sm:$0xff] %v5204
        %5221 = vst [vmem:[%s491 + $0x58] sm:$0xff] %v5205
        %5222 = vst [vmem:[%s491 + $0x60] sm:$0xff] %v5206
        %5223 = vst [vmem:[%s491 + $0x68] sm:$0xff] %v5207
        %5224 = vst [vmem:[%s491 + $0x70] sm:$0xff] %v5208
        %5225 = vst [vmem:[%s491 + $0x78] sm:$0xff] %v5209
        %s5226 = sand.u32 %s254, 1
        %s5227 = scalar_lea.sflag [#allocation4], %s5226
        %s5228 = sand.u32 %s254, 1
        %s5229 = smul.addr %s5228, 128
        %s5230 = scalar_lea.vmem [#allocation17], %s5229
        // Predicated region
        $region97: #{tpu_custom_call.1} parent=59 // pred_check
          %p5231 = pneg %p264
        $region98: #{tpu_custom_call.1} parent=59 // pred_check_branch
          %5233 = sbr.rel (%p5231) target = $region100
        $region99: #{tpu_custom_call.1} parent=59 // pred_region
          %s5234 = smul.u32 16, %s31
          %s5236 = ssub.s32 2048, 2048
          %5237 = vsyncadd %s5227, %s5236
          %s5238 = smul.addr %s5234, 128
          %s5239 = scalar_lea.hbm %s10, %s5238
          %s5240 = sshll.u32 %s5230, 4
          %s5241 = int_to_ptr.vmem [resolvable:$true] %s5240
          %5246 = dma.vmem_to_hbm [thread:$0]  %s5241, 2048, %s5239, %s5227, 128, 128, 8
        $region100: #{tpu_custom_call.1} parent=59 // pred_fallthru
          _
      $region60: #{tpu_custom_call.1} parent=5 // pred_fallthru
        _
      %p5247 = scmp.le.s32.totalorder 2, %s26
      // Predicated region
      $region101: #{tpu_custom_call.1} parent=5 // pred_check
        %p5248 = pneg %p5247
      $region102: #{tpu_custom_call.1} parent=5 // pred_check_branch
        %5250 = sbr.rel (%p5248) target = $region104
      $region103: #{tpu_custom_call.1} parent=5 // pred_region
        %s5251 = ssub.s32 %s26, 2
        // Predicated region
        $region105: #{tpu_custom_call.1} parent=103 // pred_check
          %p5252 = pneg %p270
        $region106: #{tpu_custom_call.1} parent=103 // pred_check_branch
          %5254 = sbr.rel (%p5252) target = $region108
        $region107: #{tpu_custom_call.1} parent=103 // pred_region
          %s5255 = sand.u32 %s255, 1
          %s5256 = scalar_lea.sflag [#allocation4], %s5255
          %s5257 = sand.u32 %s255, 1
          %s5258 = smul.addr %s5257, 128
          %s5259 = scalar_lea.vmem [#allocation17], %s5258
          %5260 = dma.done %s5256, 2048
        $region108: #{tpu_custom_call.1} parent=103 // pred_fallthru
          _
      $region104: #{tpu_custom_call.1} parent=5 // pred_fallthru
        _
    $region6: #{tpu_custom_call.1} parent=1 // loop_footer
      %s30 = sadd.s32 1, %s26
    $region7: #{tpu_custom_call.1} parent=1 // loop_footer_branch
      %25 = sbr.rel target = $region3
    $region8: #{tpu_custom_call.1} parent=1 // loop_exit
      _
    %5261 = vsyncpa [#allocation3], 1
    %s5262 = scalar_lea.sflag [#allocation3], 1
    %5263 = vsyncpa %s5262, 1
    %5264 = vsyncpa [#allocation6], 1
    %5265 = vsyncpa [#allocation9], 1
    %5266 = vsyncpa [#allocation12], 1
    %5267 = vsyncpa [#allocation15], 1
    %5268 = vsyncpa [#allocation4], 1
    %s5269 = scalar_lea.sflag [#allocation4], 1
    %5270 = vsyncpa %s5269, 1

</llo_original>
